<compile_context>
chip_gen: v5e
topology: v5e:2x2
jax: 0.10.0
libtpu: 0.0.40
codegen_flags: <defaults>
</compile_context>

<pallas_src>
import math

import jax
import jax.numpy as jnp
from jax.experimental import pallas as pl
from jax.experimental.pallas import tpu as pltpu

# ----------------------------- configuration --------------------------------
N_VOCAB = 50
OUT_CHANNELS = 4
HIDDEN = 32          # hidden_channels
FILTER = 64          # filter_channels
N_HEADS = 2
N_LAYERS = 2
KERNEL_SIZE = 3
WINDOW_SIZE = 4      # attentions.Encoder default relative-attention window
B = 2
T = 16
BT = B * T
DK = HIDDEN // N_HEADS
EPS = 1e-5
NEG = -1e4           # masked_fill constant used by the reference

assert T & (T - 1) == 0, "T must be a power of two (bitwise time index)"


# ------------------------------ Pallas kernel --------------------------------
def _layer_norm(z, gamma, beta):
    # channel-wise LayerNorm (VITS LayerNorm == F.layer_norm over channels)
    mean = jnp.mean(z, axis=-1, keepdims=True)
    var = jnp.mean((z - mean) ** 2, axis=-1, keepdims=True)
    return (z - mean) * jax.lax.rsqrt(var + EPS) * gamma + beta


def _shift_rows(a, offset, tmod):
    """out[p] = a[p + offset] if position p+offset stays inside the same
    (batch, time) block, else 0  ('same' conv padding on the stacked layout)."""
    if offset == 0:
        return a
    rolled = pltpu.roll(a, shift=(-offset) % BT, axis=0)
    valid = (tmod + offset >= 0) & (tmod + offset < T)
    return jnp.where(valid, rolled, 0.0)


def _encoder_kernel(tok_ref, mask_ref, amask_ref, emb_ref,
                    wqkv_ref, bqkv_ref, wo_ref, bo_ref,
                    relkT_ref, relv_ref, ln1g_ref, ln1b_ref,
                    w1_ref, b1_ref, w2_ref, b2_ref, ln2g_ref, ln2b_ref,
                    wp_ref, bp_ref, xo_ref, st_ref):
    f32 = jnp.float32
    mask = mask_ref[...]                        # [BT, 1]  sequence mask
    am = amask_ref[...]                         # [BT, BT] block-diag attn mask

    # ---- embedding gather as one-hot matmul (stays on the MXU, no XLA gather)
    tok = tok_ref[...]                          # [BT, 1] int32
    vocab = jax.lax.broadcasted_iota(jnp.int32, (BT, N_VOCAB), 1)
    onehot = (tok == vocab).astype(f32)
    x = jnp.dot(onehot, emb_ref[...], preferred_element_type=f32)
    x = x * math.sqrt(HIDDEN)
    x = x * mask                                # encoder(x * x_mask, ...)

    # diff[p, p'] = p' - p : within a batch block this is (s - t); cross-batch
    # entries are killed by `am`, so a single banded index works for the stack.
    diff = (jax.lax.broadcasted_iota(jnp.int32, (BT, BT), 1)
            - jax.lax.broadcasted_iota(jnp.int32, (BT, BT), 0))
    # per-position time index (keeps conv 'same' padding from leaking across
    # the batch boundary of the stacked layout); T is a power of two.
    tmod = jnp.bitwise_and(
        jax.lax.broadcasted_iota(jnp.int32, (BT, 1), 0), T - 1)

    pad_l = (KERNEL_SIZE - 1) // 2

    for l in range(N_LAYERS):
        # ------------------ multi-head self-attention ----------------------
        qkv = (jnp.dot(x, wqkv_ref[l], preferred_element_type=f32)
               + bqkv_ref[l])                   # [BT, 3H]; q already scaled
        relkT = relkT_ref[l]                    # [DK, 2W+1]
        relv = relv_ref[l]                      # [2W+1, DK]
        wo = wo_ref[l]                          # [H, H]

        y = jnp.zeros((BT, HIDDEN), f32)
        for h in range(N_HEADS):
            lo = h * DK
            qh = qkv[:, lo:lo + DK]
            kh = qkv[:, HIDDEN + lo:HIDDEN + lo + DK]
            vh = qkv[:, 2 * HIDDEN + lo:2 * HIDDEN + lo + DK]

            # content scores (contract DK, no explicit transpose)
            scores = jax.lax.dot_general(
                qh, kh, (((1,), (1,)), ((), ())), preferred_element_type=f32)

            # windowed relative-key bias: qr[p, r] = q[p] . rel_k[r]
            qr = jnp.dot(qh, relkT, preferred_element_type=f32)   # [BT, 2W+1]
            for r in range(2 * WINDOW_SIZE + 1):
                scores = scores + jnp.where(diff == (r - WINDOW_SIZE),
                                            qr[:, r:r + 1], 0.0)

            scores = jnp.where(am > 0.0, scores, NEG)
            scores = scores - jnp.max(scores, axis=-1, keepdims=True)
            p = jnp.exp(scores)
            p = p * pl.reciprocal(jnp.sum(p, axis=-1, keepdims=True),
                                  approx=True)

            oh = jnp.dot(p, vh, preferred_element_type=f32)        # [BT, DK]
            # windowed relative-value term
            for r in range(2 * WINDOW_SIZE + 1):
                col = jnp.sum(jnp.where(diff == (r - WINDOW_SIZE), p, 0.0),
                              axis=-1, keepdims=True)              # [BT, 1]
                oh = oh + col * relv[r:r + 1, :]
            # fold the head straight through its slice of the output proj
            # (equivalent to concat(heads) @ wo, without a lane concat)
            y = y + jnp.dot(oh, wo[lo:lo + DK, :], preferred_element_type=f32)

        y = y + bo_ref[l]
        x = _layer_norm(x + y, ln1g_ref[l], ln1b_ref[l])

        # -------- FFN: both 'same' convs with taps fused into one matmul ----
        xm = x * mask
        xs = jnp.concatenate(
            [_shift_rows(xm, tau - pad_l, tmod) for tau in range(KERNEL_SIZE)],
            axis=-1)                                               # [BT, K*H]
        h1 = jnp.dot(xs, w1_ref[l], preferred_element_type=f32) + b1_ref[l]
        h1 = jnp.maximum(h1, 0.0) * mask                           # relu, mask
        hs = jnp.concatenate(
            [_shift_rows(h1, tau - pad_l, tmod) for tau in range(KERNEL_SIZE)],
            axis=-1)                                               # [BT, K*F]
        h2 = jnp.dot(hs, w2_ref[l], preferred_element_type=f32) + b2_ref[l]
        x = _layer_norm(x + h2 * mask, ln2g_ref[l], ln2b_ref[l])

    # -------------- final mask + 1x1 conv projection to 2*out ---------------
    xm = x * mask                               # Encoder's trailing x * x_mask
    stats = (jnp.dot(xm, wp_ref[...], preferred_element_type=f32)
             + bp_ref[...]) * mask
    xo_ref[...] = xm
    st_ref[...] = stats


# ------------------------- parameters & packing ------------------------------
def init_params(key):
    keys = iter(jax.random.split(key, 40))

    def nrm(shape, scale):
        return jax.random.normal(next(keys), shape, jnp.float32) * scale

    params = {"emb": nrm((N_VOCAB, HIDDEN), HIDDEN ** -0.5)}
    layers = []
    for _ in range(N_LAYERS):
        layers.append({
            "wq": nrm((HIDDEN, HIDDEN), HIDDEN ** -0.5),
            "bq": nrm((1, HIDDEN), 0.01),
            "wk": nrm((HIDDEN, HIDDEN), HIDDEN ** -0.5),
            "bk": nrm((1, HIDDEN), 0.01),
            "wv": nrm((HIDDEN, HIDDEN), HIDDEN ** -0.5),
            "bv": nrm((1, HIDDEN), 0.01),
            "wo": nrm((HIDDEN, HIDDEN), HIDDEN ** -0.5),
            "bo": nrm((1, HIDDEN), 0.01),
            "rel_k": nrm((2 * WINDOW_SIZE + 1, DK), DK ** -0.5),
            "rel_v": nrm((2 * WINDOW_SIZE + 1, DK), DK ** -0.5),
            "ln1_g": jnp.ones((1, HIDDEN), jnp.float32),
            "ln1_b": jnp.zeros((1, HIDDEN), jnp.float32),
            "w1": nrm((KERNEL_SIZE, HIDDEN, FILTER),
                      (HIDDEN * KERNEL_SIZE) ** -0.5),
            "b1": nrm((1, FILTER), 0.01),
            "w2": nrm((KERNEL_SIZE, FILTER, HIDDEN),
                      (FILTER * KERNEL_SIZE) ** -0.5),
            "b2": nrm((1, HIDDEN), 0.01),
            "ln2_g": jnp.ones((1, HIDDEN), jnp.float32),
            "ln2_b": jnp.zeros((1, HIDDEN), jnp.float32),
        })
    params["layers"] = layers
    params["wp"] = nrm((HIDDEN, 2 * OUT_CHANNELS), HIDDEN ** -0.5)
    params["bp"] = nrm((1, 2 * OUT_CHANNELS), 0.01)
    return params


def pack_params(params):
    """Kernel-ready layout: stacked per-layer weights, QKV fused, 1/sqrt(DK)
    folded into wq/bq, conv taps concatenated along the contraction axis."""
    scale = 1.0 / math.sqrt(DK)
    layers = params["layers"]

    def stack(fn):
        return jnp.stack([fn(lp) for lp in layers], axis=0)

    return {
        "emb": params["emb"],
        "wqkv": stack(lambda lp: jnp.concatenate(
            [lp["wq"] * scale, lp["wk"], lp["wv"]], axis=-1)),   # [L, H, 3H]
        "bqkv": stack(lambda lp: jnp.concatenate(
            [lp["bq"] * scale, lp["bk"], lp["bv"]], axis=-1)),   # [L, 1, 3H]
        "wo": stack(lambda lp: lp["wo"]),                        # [L, H, H]
        "bo": stack(lambda lp: lp["bo"]),                        # [L, 1, H]
        "relkT": stack(lambda lp: lp["rel_k"].T),                # [L, DK, 2W+1]
        "relv": stack(lambda lp: lp["rel_v"]),                   # [L, 2W+1, DK]
        "ln1_g": stack(lambda lp: lp["ln1_g"]),
        "ln1_b": stack(lambda lp: lp["ln1_b"]),
        "w1": stack(lambda lp: lp["w1"].reshape(KERNEL_SIZE * HIDDEN, FILTER)),
        "b1": stack(lambda lp: lp["b1"]),
        "w2": stack(lambda lp: lp["w2"].reshape(KERNEL_SIZE * FILTER, HIDDEN)),
        "b2": stack(lambda lp: lp["b2"]),
        "ln2_g": stack(lambda lp: lp["ln2_g"]),
        "ln2_b": stack(lambda lp: lp["ln2_b"]),
        "wp": params["wp"],
        "bp": params["bp"],
    }


# ------------------------------- forward pass --------------------------------
def text_encoder_forward(tokens, x_lengths, packed):
    # sequence / attention masks (cheap XLA glue)
    seq = (jnp.arange(T)[None, :] < x_lengths[:, None]).astype(jnp.float32)
    mask_flat = seq.reshape(BT, 1)                               # [B*T, 1]
    batch_id = jnp.arange(BT) // T
    same_batch = (batch_id[:, None] == batch_id[None, :]).astype(jnp.float32)
    am_full = mask_flat * mask_flat.T * same_batch               # [B*T, B*T]
    tok_col = tokens.reshape(BT, 1).astype(jnp.int32)

    xo, st = pl.pallas_call(
        _encoder_kernel,
        out_shape=(jax.ShapeDtypeStruct((BT, HIDDEN), jnp.float32),
                   jax.ShapeDtypeStruct((BT, 2 * OUT_CHANNELS), jnp.float32)),
    )(tok_col, mask_flat, am_full, packed["emb"],
      packed["wqkv"], packed["bqkv"], packed["wo"], packed["bo"],
      packed["relkT"], packed["relv"], packed["ln1_g"], packed["ln1_b"],
      packed["w1"], packed["b1"], packed["w2"], packed["b2"],
      packed["ln2_g"], packed["ln2_b"], packed["wp"], packed["bp"])

    # back to PyTorch NCT layout
    x_out = jnp.transpose(xo.reshape(B, T, HIDDEN), (0, 2, 1))   # [B, H, T]
    stats = st.reshape(B, T, 2 * OUT_CHANNELS)
    m = jnp.transpose(stats[..., :OUT_CHANNELS], (0, 2, 1))      # [B, out, T]
    logs = jnp.transpose(stats[..., OUT_CHANNELS:], (0, 2, 1))   # [B, out, T]
    x_mask = seq[:, None, :]                                     # [B, 1, T]
    return x_out, m, logs, x_mask


if __name__ == "__main__":
    key = jax.random.PRNGKey(0)
    pkey, tkey = jax.random.split(key)
    params = init_params(pkey)
    packed = pack_params(params)

    tokens = jax.random.randint(tkey, (B, T), 0, N_VOCAB, dtype=jnp.int32)
    x_lengths = jnp.array([T, T - 5], dtype=jnp.int32)

    fwd = jax.jit(lambda t, l: text_encoder_forward(t, l, packed))
    x, m, logs, x_mask = fwd(tokens, x_lengths)
    jax.block_until_ready((x, m, logs, x_mask))

    assert x.shape == (B, HIDDEN, T)
    assert m.shape == (B, OUT_CHANNELS, T)
    assert logs.shape == (B, OUT_CHANNELS, T)
    assert x_mask.shape == (B, 1, T)
    assert bool(jnp.all(jnp.isfinite(x))) and bool(jnp.all(jnp.isfinite(m)))
    print("KERNEL_OK")
</pallas_src>

<mosaic_0001>
module attributes {stable_mosaic.version = 11 : i64} {
  func.func @_encoder_kernel(%arg0: memref<32x1xi32, #tpu.memory_space<vmem>>, %arg1: memref<32x1xf32, #tpu.memory_space<vmem>>, %arg2: memref<32x32xf32, #tpu.memory_space<vmem>>, %arg3: memref<50x32xf32, #tpu.memory_space<vmem>>, %arg4: memref<2x32x96xf32, #tpu.memory_space<vmem>>, %arg5: memref<2x1x96xf32, #tpu.memory_space<vmem>>, %arg6: memref<2x32x32xf32, #tpu.memory_space<vmem>>, %arg7: memref<2x1x32xf32, #tpu.memory_space<vmem>>, %arg8: memref<2x16x9xf32, #tpu.memory_space<vmem>>, %arg9: memref<2x9x16xf32, #tpu.memory_space<vmem>>, %arg10: memref<2x1x32xf32, #tpu.memory_space<vmem>>, %arg11: memref<2x1x32xf32, #tpu.memory_space<vmem>>, %arg12: memref<2x96x64xf32, #tpu.memory_space<vmem>>, %arg13: memref<2x1x64xf32, #tpu.memory_space<vmem>>, %arg14: memref<2x192x32xf32, #tpu.memory_space<vmem>>, %arg15: memref<2x1x32xf32, #tpu.memory_space<vmem>>, %arg16: memref<2x1x32xf32, #tpu.memory_space<vmem>>, %arg17: memref<2x1x32xf32, #tpu.memory_space<vmem>>, %arg18: memref<32x8xf32, #tpu.memory_space<vmem>>, %arg19: memref<1x8xf32, #tpu.memory_space<vmem>>, %arg20: memref<32x32xf32, #tpu.memory_space<vmem>>, %arg21: memref<32x8xf32, #tpu.memory_space<vmem>>) attributes {dimension_semantics = [], scalar_prefetch = 0 : i64, scratch_operands = 0 : i64, tpu.core_type = #tpu.core_type<tc>} {
    %c0 = arith.constant 0 : index
    %c0_0 = arith.constant 0 : index
    %0 = vector.load %arg1[%c0, %c0_0] : memref<32x1xf32, #tpu.memory_space<vmem>>, vector<32x1xf32>
    %c0_1 = arith.constant 0 : index
    %c0_2 = arith.constant 0 : index
    %1 = vector.load %arg2[%c0_1, %c0_2] : memref<32x32xf32, #tpu.memory_space<vmem>>, vector<32x32xf32>
    %c0_3 = arith.constant 0 : index
    %c0_4 = arith.constant 0 : index
    %2 = vector.load %arg0[%c0_3, %c0_4] : memref<32x1xi32, #tpu.memory_space<vmem>>, vector<32x1xi32>
    %3 = tpu.iota {dimensions = array<i32: 1>} : vector<32x50xi32>
    %4 = vector.broadcast %2 : vector<32x1xi32> to vector<32x50xi32>
    %5 = arith.cmpi eq, %4, %3 : vector<32x50xi32>
    %6 = arith.extui %5 : vector<32x50xi1> to vector<32x50xi32>
    %7 = arith.sitofp %6 : vector<32x50xi32> to vector<32x50xf32>
    %c0_5 = arith.constant 0 : index
    %c0_6 = arith.constant 0 : index
    %8 = vector.load %arg3[%c0_5, %c0_6] : memref<50x32xf32, #tpu.memory_space<vmem>>, vector<50x32xf32>
    %cst = arith.constant dense<0.000000e+00> : vector<32x32xf32>
    %9 = tpu.matmul %7, %8, %cst {dimension_numbers = #tpu.dot_dimension_numbers<[1], [0], [0], [1], [0, 0, 1, 1], [], []>} : vector<32x50xf32>, vector<50x32xf32>, vector<32x32xf32> -> vector<32x32xf32>
    %cst_7 = arith.constant 5.65685415 : f32
    %10 = vector.broadcast %cst_7 : f32 to vector<32x32xf32>
    %11 = arith.mulf %9, %10 : vector<32x32xf32>
    %12 = vector.broadcast %0 : vector<32x1xf32> to vector<32x32xf32>
    %13 = arith.mulf %11, %12 : vector<32x32xf32>
    %14 = tpu.iota {dimensions = array<i32: 1>} : vector<32x32xi32>
    %15 = tpu.iota {dimensions = array<i32: 0>} : vector<32x32xi32>
    %16 = arith.subi %14, %15 : vector<32x32xi32>
    %17 = tpu.iota {dimensions = array<i32: 0>} : vector<32x1xi32>
    %c15_i32 = arith.constant 15 : i32
    %18 = vector.broadcast %c15_i32 : i32 to vector<32x1xi32>
    %19 = arith.andi %17, %18 : vector<32x1xi32>
    %c0_8 = arith.constant 0 : index
    %c0_9 = arith.constant 0 : index
    %c0_10 = arith.constant 0 : index
    %20 = vector.load %arg4[%c0_8, %c0_9, %c0_10] : memref<2x32x96xf32, #tpu.memory_space<vmem>>, vector<1x32x96xf32>
    %21 = vector.shape_cast %20 : vector<1x32x96xf32> to vector<32x96xf32>
    %cst_11 = arith.constant dense<0.000000e+00> : vector<32x96xf32>
    %22 = tpu.matmul %13, %21, %cst_11 {dimension_numbers = #tpu.dot_dimension_numbers<[1], [0], [0], [1], [0, 0, 1, 1], [], []>} : vector<32x32xf32>, vector<32x96xf32>, vector<32x96xf32> -> vector<32x96xf32>
    %c0_12 = arith.constant 0 : index
    %c0_13 = arith.constant 0 : index
    %c0_14 = arith.constant 0 : index
    %23 = vector.load %arg5[%c0_12, %c0_13, %c0_14] : memref<2x1x96xf32, #tpu.memory_space<vmem>>, vector<1x1x96xf32>
    %24 = vector.shape_cast %23 : vector<1x1x96xf32> to vector<1x96xf32>
    %25 = vector.broadcast %24 : vector<1x96xf32> to vector<32x96xf32>
    %26 = arith.addf %22, %25 : vector<32x96xf32>
    %c0_15 = arith.constant 0 : index
    %c0_16 = arith.constant 0 : index
    %c0_17 = arith.constant 0 : index
    %27 = vector.load %arg8[%c0_15, %c0_16, %c0_17] : memref<2x16x9xf32, #tpu.memory_space<vmem>>, vector<1x16x9xf32>
    %28 = vector.shape_cast %27 : vector<1x16x9xf32> to vector<16x9xf32>
    %c0_18 = arith.constant 0 : index
    %c0_19 = arith.constant 0 : index
    %c0_20 = arith.constant 0 : index
    %29 = vector.load %arg9[%c0_18, %c0_19, %c0_20] : memref<2x9x16xf32, #tpu.memory_space<vmem>>, vector<1x9x16xf32>
    %30 = vector.shape_cast %29 : vector<1x9x16xf32> to vector<9x16xf32>
    %c0_21 = arith.constant 0 : index
    %c0_22 = arith.constant 0 : index
    %c0_23 = arith.constant 0 : index
    %31 = vector.load %arg6[%c0_21, %c0_22, %c0_23] : memref<2x32x32xf32, #tpu.memory_space<vmem>>, vector<1x32x32xf32>
    %32 = vector.shape_cast %31 : vector<1x32x32xf32> to vector<32x32xf32>
    %cst_24 = arith.constant 0.000000e+00 : f32
    %33 = vector.broadcast %cst_24 : f32 to vector<32x32xf32>
    %34 = vector.extract_strided_slice %26 {offsets = [0, 0], sizes = [32, 16], strides = [1, 1]} : vector<32x96xf32> to vector<32x16xf32>
    %35 = vector.extract_strided_slice %26 {offsets = [0, 32], sizes = [32, 16], strides = [1, 1]} : vector<32x96xf32> to vector<32x16xf32>
    %36 = vector.extract_strided_slice %26 {offsets = [0, 64], sizes = [32, 16], strides = [1, 1]} : vector<32x96xf32> to vector<32x16xf32>
    %cst_25 = arith.constant dense<0.000000e+00> : vector<32x32xf32>
    %37 = tpu.matmul %34, %35, %cst_25 {dimension_numbers = #tpu.dot_dimension_numbers<[1], [1], [0], [0], [0, 0, 1, 0], [], []>} : vector<32x16xf32>, vector<32x16xf32>, vector<32x32xf32> -> vector<32x32xf32>
    %cst_26 = arith.constant dense<0.000000e+00> : vector<32x9xf32>
    %38 = tpu.matmul %34, %28, %cst_26 {dimension_numbers = #tpu.dot_dimension_numbers<[1], [0], [0], [1], [0, 0, 1, 1], [], []>} : vector<32x16xf32>, vector<16x9xf32>, vector<32x9xf32> -> vector<32x9xf32>
    %c-4_i32 = arith.constant -4 : i32
    %39 = vector.broadcast %c-4_i32 : i32 to vector<32x32xi32>
    %40 = arith.cmpi eq, %16, %39 : vector<32x32xi32>
    %41 = vector.extract_strided_slice %38 {offsets = [0, 0], sizes = [32, 1], strides = [1, 1]} : vector<32x9xf32> to vector<32x1xf32>
    %cst_27 = arith.constant 0.000000e+00 : f32
    %42 = vector.shape_cast %41 : vector<32x1xf32> to vector<32x1xf32>
    %43 = vector.broadcast %42 : vector<32x1xf32> to vector<32x32xf32>
    %44 = vector.broadcast %cst_27 : f32 to vector<32x32xf32>
    %45 = arith.select %40, %43, %44 : vector<32x32xi1>, vector<32x32xf32>
    %46 = arith.addf %37, %45 : vector<32x32xf32>
    %c-3_i32 = arith.constant -3 : i32
    %47 = vector.broadcast %c-3_i32 : i32 to vector<32x32xi32>
    %48 = arith.cmpi eq, %16, %47 : vector<32x32xi32>
    %49 = vector.extract_strided_slice %38 {offsets = [0, 1], sizes = [32, 1], strides = [1, 1]} : vector<32x9xf32> to vector<32x1xf32>
    %cst_28 = arith.constant 0.000000e+00 : f32
    %50 = vector.shape_cast %49 : vector<32x1xf32> to vector<32x1xf32>
    %51 = vector.broadcast %50 : vector<32x1xf32> to vector<32x32xf32>
    %52 = vector.broadcast %cst_28 : f32 to vector<32x32xf32>
    %53 = arith.select %48, %51, %52 : vector<32x32xi1>, vector<32x32xf32>
    %54 = arith.addf %46, %53 : vector<32x32xf32>
    %c-2_i32 = arith.constant -2 : i32
    %55 = vector.broadcast %c-2_i32 : i32 to vector<32x32xi32>
    %56 = arith.cmpi eq, %16, %55 : vector<32x32xi32>
    %57 = vector.extract_strided_slice %38 {offsets = [0, 2], sizes = [32, 1], strides = [1, 1]} : vector<32x9xf32> to vector<32x1xf32>
    %cst_29 = arith.constant 0.000000e+00 : f32
    %58 = vector.shape_cast %57 : vector<32x1xf32> to vector<32x1xf32>
    %59 = vector.broadcast %58 : vector<32x1xf32> to vector<32x32xf32>
    %60 = vector.broadcast %cst_29 : f32 to vector<32x32xf32>
    %61 = arith.select %56, %59, %60 : vector<32x32xi1>, vector<32x32xf32>
    %62 = arith.addf %54, %61 : vector<32x32xf32>
    %c-1_i32 = arith.constant -1 : i32
    %63 = vector.broadcast %c-1_i32 : i32 to vector<32x32xi32>
    %64 = arith.cmpi eq, %16, %63 : vector<32x32xi32>
    %65 = vector.extract_strided_slice %38 {offsets = [0, 3], sizes = [32, 1], strides = [1, 1]} : vector<32x9xf32> to vector<32x1xf32>
    %cst_30 = arith.constant 0.000000e+00 : f32
    %66 = vector.shape_cast %65 : vector<32x1xf32> to vector<32x1xf32>
    %67 = vector.broadcast %66 : vector<32x1xf32> to vector<32x32xf32>
    %68 = vector.broadcast %cst_30 : f32 to vector<32x32xf32>
    %69 = arith.select %64, %67, %68 : vector<32x32xi1>, vector<32x32xf32>
    %70 = arith.addf %62, %69 : vector<32x32xf32>
    %c0_i32 = arith.constant 0 : i32
    %71 = vector.broadcast %c0_i32 : i32 to vector<32x32xi32>
    %72 = arith.cmpi eq, %16, %71 : vector<32x32xi32>
    %73 = vector.extract_strided_slice %38 {offsets = [0, 4], sizes = [32, 1], strides = [1, 1]} : vector<32x9xf32> to vector<32x1xf32>
    %cst_31 = arith.constant 0.000000e+00 : f32
    %74 = vector.shape_cast %73 : vector<32x1xf32> to vector<32x1xf32>
    %75 = vector.broadcast %74 : vector<32x1xf32> to vector<32x32xf32>
    %76 = vector.broadcast %cst_31 : f32 to vector<32x32xf32>
    %77 = arith.select %72, %75, %76 : vector<32x32xi1>, vector<32x32xf32>
    %78 = arith.addf %70, %77 : vector<32x32xf32>
    %c1_i32 = arith.constant 1 : i32
    %79 = vector.broadcast %c1_i32 : i32 to vector<32x32xi32>
    %80 = arith.cmpi eq, %16, %79 : vector<32x32xi32>
    %81 = vector.extract_strided_slice %38 {offsets = [0, 5], sizes = [32, 1], strides = [1, 1]} : vector<32x9xf32> to vector<32x1xf32>
    %cst_32 = arith.constant 0.000000e+00 : f32
    %82 = vector.shape_cast %81 : vector<32x1xf32> to vector<32x1xf32>
    %83 = vector.broadcast %82 : vector<32x1xf32> to vector<32x32xf32>
    %84 = vector.broadcast %cst_32 : f32 to vector<32x32xf32>
    %85 = arith.select %80, %83, %84 : vector<32x32xi1>, vector<32x32xf32>
    %86 = arith.addf %78, %85 : vector<32x32xf32>
    %c2_i32 = arith.constant 2 : i32
    %87 = vector.broadcast %c2_i32 : i32 to vector<32x32xi32>
    %88 = arith.cmpi eq, %16, %87 : vector<32x32xi32>
    %89 = vector.extract_strided_slice %38 {offsets = [0, 6], sizes = [32, 1], strides = [1, 1]} : vector<32x9xf32> to vector<32x1xf32>
    %cst_33 = arith.constant 0.000000e+00 : f32
    %90 = vector.shape_cast %89 : vector<32x1xf32> to vector<32x1xf32>
    %91 = vector.broadcast %90 : vector<32x1xf32> to vector<32x32xf32>
    %92 = vector.broadcast %cst_33 : f32 to vector<32x32xf32>
    %93 = arith.select %88, %91, %92 : vector<32x32xi1>, vector<32x32xf32>
    %94 = arith.addf %86, %93 : vector<32x32xf32>
    %c3_i32 = arith.constant 3 : i32
    %95 = vector.broadcast %c3_i32 : i32 to vector<32x32xi32>
    %96 = arith.cmpi eq, %16, %95 : vector<32x32xi32>
    %97 = vector.extract_strided_slice %38 {offsets = [0, 7], sizes = [32, 1], strides = [1, 1]} : vector<32x9xf32> to vector<32x1xf32>
    %cst_34 = arith.constant 0.000000e+00 : f32
    %98 = vector.shape_cast %97 : vector<32x1xf32> to vector<32x1xf32>
    %99 = vector.broadcast %98 : vector<32x1xf32> to vector<32x32xf32>
    %100 = vector.broadcast %cst_34 : f32 to vector<32x32xf32>
    %101 = arith.select %96, %99, %100 : vector<32x32xi1>, vector<32x32xf32>
    %102 = arith.addf %94, %101 : vector<32x32xf32>
    %c4_i32 = arith.constant 4 : i32
    %103 = vector.broadcast %c4_i32 : i32 to vector<32x32xi32>
    %104 = arith.cmpi eq, %16, %103 : vector<32x32xi32>
    %105 = vector.extract_strided_slice %38 {offsets = [0, 8], sizes = [32, 1], strides = [1, 1]} : vector<32x9xf32> to vector<32x1xf32>
    %cst_35 = arith.constant 0.000000e+00 : f32
    %106 = vector.shape_cast %105 : vector<32x1xf32> to vector<32x1xf32>
    %107 = vector.broadcast %106 : vector<32x1xf32> to vector<32x32xf32>
    %108 = vector.broadcast %cst_35 : f32 to vector<32x32xf32>
    %109 = arith.select %104, %107, %108 : vector<32x32xi1>, vector<32x32xf32>
    %110 = arith.addf %102, %109 : vector<32x32xf32>
    %cst_36 = arith.constant 0.000000e+00 : f32
    %111 = vector.broadcast %cst_36 : f32 to vector<32x32xf32>
    %112 = arith.cmpf ogt, %1, %111 : vector<32x32xf32>
    %cst_37 = arith.constant -1.000000e+04 : f32
    %113 = vector.broadcast %cst_37 : f32 to vector<32x32xf32>
    %114 = arith.select %112, %110, %113 : vector<32x32xi1>, vector<32x32xf32>
    %cst_38 = arith.constant dense<0xFF800000> : vector<32xf32>
    %115 = vector.multi_reduction <maximumf>, %114, %cst_38 [1] : vector<32x32xf32> to vector<32xf32>
    %116 = vector.shape_cast %115 : vector<32xf32> to vector<32x1xf32>
    %117 = vector.broadcast %116 : vector<32x1xf32> to vector<32x32xf32>
    %118 = arith.subf %114, %117 : vector<32x32xf32>
    %119 = math.exp %118 : vector<32x32xf32>
    %cst_39 = arith.constant dense<0.000000e+00> : vector<32xf32>
    %120 = vector.multi_reduction <add>, %119, %cst_39 [1] : vector<32x32xf32> to vector<32xf32>
    %121 = vector.shape_cast %120 : vector<32xf32> to vector<32x1xf32>
    %122 = tpu.reciprocal %121 {approx = true} : vector<32x1xf32> -> vector<32x1xf32>
    %123 = vector.broadcast %122 : vector<32x1xf32> to vector<32x32xf32>
    %124 = arith.mulf %119, %123 : vector<32x32xf32>
    %cst_40 = arith.constant dense<0.000000e+00> : vector<32x16xf32>
    %125 = tpu.matmul %124, %36, %cst_40 {dimension_numbers = #tpu.dot_dimension_numbers<[1], [0], [0], [1], [0, 0, 1, 1], [], []>} : vector<32x32xf32>, vector<32x16xf32>, vector<32x16xf32> -> vector<32x16xf32>
    %c-4_i32_41 = arith.constant -4 : i32
    %126 = vector.broadcast %c-4_i32_41 : i32 to vector<32x32xi32>
    %127 = arith.cmpi eq, %16, %126 : vector<32x32xi32>
    %cst_42 = arith.constant 0.000000e+00 : f32
    %128 = vector.broadcast %cst_42 : f32 to vector<32x32xf32>
    %129 = arith.select %127, %124, %128 : vector<32x32xi1>, vector<32x32xf32>
    %cst_43 = arith.constant dense<0.000000e+00> : vector<32xf32>
    %130 = vector.multi_reduction <add>, %129, %cst_43 [1] : vector<32x32xf32> to vector<32xf32>
    %131 = vector.shape_cast %130 : vector<32xf32> to vector<32x1xf32>
    %132 = vector.extract_strided_slice %30 {offsets = [0, 0], sizes = [1, 16], strides = [1, 1]} : vector<9x16xf32> to vector<1x16xf32>
    %133 = vector.broadcast %131 : vector<32x1xf32> to vector<32x16xf32>
    %134 = vector.broadcast %132 : vector<1x16xf32> to vector<32x16xf32>
    %135 = arith.mulf %133, %134 : vector<32x16xf32>
    %136 = arith.addf %125, %135 : vector<32x16xf32>
    %c-3_i32_44 = arith.constant -3 : i32
    %137 = vector.broadcast %c-3_i32_44 : i32 to vector<32x32xi32>
    %138 = arith.cmpi eq, %16, %137 : vector<32x32xi32>
    %cst_45 = arith.constant 0.000000e+00 : f32
    %139 = vector.broadcast %cst_45 : f32 to vector<32x32xf32>
    %140 = arith.select %138, %124, %139 : vector<32x32xi1>, vector<32x32xf32>
    %cst_46 = arith.constant dense<0.000000e+00> : vector<32xf32>
    %141 = vector.multi_reduction <add>, %140, %cst_46 [1] : vector<32x32xf32> to vector<32xf32>
    %142 = vector.shape_cast %141 : vector<32xf32> to vector<32x1xf32>
    %143 = vector.extract_strided_slice %30 {offsets = [1, 0], sizes = [1, 16], strides = [1, 1]} : vector<9x16xf32> to vector<1x16xf32>
    %144 = vector.broadcast %142 : vector<32x1xf32> to vector<32x16xf32>
    %145 = vector.broadcast %143 : vector<1x16xf32> to vector<32x16xf32>
    %146 = arith.mulf %144, %145 : vector<32x16xf32>
    %147 = arith.addf %136, %146 : vector<32x16xf32>
    %c-2_i32_47 = arith.constant -2 : i32
    %148 = vector.broadcast %c-2_i32_47 : i32 to vector<32x32xi32>
    %149 = arith.cmpi eq, %16, %148 : vector<32x32xi32>
    %cst_48 = arith.constant 0.000000e+00 : f32
    %150 = vector.broadcast %cst_48 : f32 to vector<32x32xf32>
    %151 = arith.select %149, %124, %150 : vector<32x32xi1>, vector<32x32xf32>
    %cst_49 = arith.constant dense<0.000000e+00> : vector<32xf32>
    %152 = vector.multi_reduction <add>, %151, %cst_49 [1] : vector<32x32xf32> to vector<32xf32>
    %153 = vector.shape_cast %152 : vector<32xf32> to vector<32x1xf32>
    %154 = vector.extract_strided_slice %30 {offsets = [2, 0], sizes = [1, 16], strides = [1, 1]} : vector<9x16xf32> to vector<1x16xf32>
    %155 = vector.broadcast %153 : vector<32x1xf32> to vector<32x16xf32>
    %156 = vector.broadcast %154 : vector<1x16xf32> to vector<32x16xf32>
    %157 = arith.mulf %155, %156 : vector<32x16xf32>
    %158 = arith.addf %147, %157 : vector<32x16xf32>
    %c-1_i32_50 = arith.constant -1 : i32
    %159 = vector.broadcast %c-1_i32_50 : i32 to vector<32x32xi32>
    %160 = arith.cmpi eq, %16, %159 : vector<32x32xi32>
    %cst_51 = arith.constant 0.000000e+00 : f32
    %161 = vector.broadcast %cst_51 : f32 to vector<32x32xf32>
    %162 = arith.select %160, %124, %161 : vector<32x32xi1>, vector<32x32xf32>
    %cst_52 = arith.constant dense<0.000000e+00> : vector<32xf32>
    %163 = vector.multi_reduction <add>, %162, %cst_52 [1] : vector<32x32xf32> to vector<32xf32>
    %164 = vector.shape_cast %163 : vector<32xf32> to vector<32x1xf32>
    %165 = vector.extract_strided_slice %30 {offsets = [3, 0], sizes = [1, 16], strides = [1, 1]} : vector<9x16xf32> to vector<1x16xf32>
    %166 = vector.broadcast %164 : vector<32x1xf32> to vector<32x16xf32>
    %167 = vector.broadcast %165 : vector<1x16xf32> to vector<32x16xf32>
    %168 = arith.mulf %166, %167 : vector<32x16xf32>
    %169 = arith.addf %158, %168 : vector<32x16xf32>
    %c0_i32_53 = arith.constant 0 : i32
    %170 = vector.broadcast %c0_i32_53 : i32 to vector<32x32xi32>
    %171 = arith.cmpi eq, %16, %170 : vector<32x32xi32>
    %cst_54 = arith.constant 0.000000e+00 : f32
    %172 = vector.broadcast %cst_54 : f32 to vector<32x32xf32>
    %173 = arith.select %171, %124, %172 : vector<32x32xi1>, vector<32x32xf32>
    %cst_55 = arith.constant dense<0.000000e+00> : vector<32xf32>
    %174 = vector.multi_reduction <add>, %173, %cst_55 [1] : vector<32x32xf32> to vector<32xf32>
    %175 = vector.shape_cast %174 : vector<32xf32> to vector<32x1xf32>
    %176 = vector.extract_strided_slice %30 {offsets = [4, 0], sizes = [1, 16], strides = [1, 1]} : vector<9x16xf32> to vector<1x16xf32>
    %177 = vector.broadcast %175 : vector<32x1xf32> to vector<32x16xf32>
    %178 = vector.broadcast %176 : vector<1x16xf32> to vector<32x16xf32>
    %179 = arith.mulf %177, %178 : vector<32x16xf32>
    %180 = arith.addf %169, %179 : vector<32x16xf32>
    %c1_i32_56 = arith.constant 1 : i32
    %181 = vector.broadcast %c1_i32_56 : i32 to vector<32x32xi32>
    %182 = arith.cmpi eq, %16, %181 : vector<32x32xi32>
    %cst_57 = arith.constant 0.000000e+00 : f32
    %183 = vector.broadcast %cst_57 : f32 to vector<32x32xf32>
    %184 = arith.select %182, %124, %183 : vector<32x32xi1>, vector<32x32xf32>
    %cst_58 = arith.constant dense<0.000000e+00> : vector<32xf32>
    %185 = vector.multi_reduction <add>, %184, %cst_58 [1] : vector<32x32xf32> to vector<32xf32>
    %186 = vector.shape_cast %185 : vector<32xf32> to vector<32x1xf32>
    %187 = vector.extract_strided_slice %30 {offsets = [5, 0], sizes = [1, 16], strides = [1, 1]} : vector<9x16xf32> to vector<1x16xf32>
    %188 = vector.broadcast %186 : vector<32x1xf32> to vector<32x16xf32>
    %189 = vector.broadcast %187 : vector<1x16xf32> to vector<32x16xf32>
    %190 = arith.mulf %188, %189 : vector<32x16xf32>
    %191 = arith.addf %180, %190 : vector<32x16xf32>
    %c2_i32_59 = arith.constant 2 : i32
    %192 = vector.broadcast %c2_i32_59 : i32 to vector<32x32xi32>
    %193 = arith.cmpi eq, %16, %192 : vector<32x32xi32>
    %cst_60 = arith.constant 0.000000e+00 : f32
    %194 = vector.broadcast %cst_60 : f32 to vector<32x32xf32>
    %195 = arith.select %193, %124, %194 : vector<32x32xi1>, vector<32x32xf32>
    %cst_61 = arith.constant dense<0.000000e+00> : vector<32xf32>
    %196 = vector.multi_reduction <add>, %195, %cst_61 [1] : vector<32x32xf32> to vector<32xf32>
    %197 = vector.shape_cast %196 : vector<32xf32> to vector<32x1xf32>
    %198 = vector.extract_strided_slice %30 {offsets = [6, 0], sizes = [1, 16], strides = [1, 1]} : vector<9x16xf32> to vector<1x16xf32>
    %199 = vector.broadcast %197 : vector<32x1xf32> to vector<32x16xf32>
    %200 = vector.broadcast %198 : vector<1x16xf32> to vector<32x16xf32>
    %201 = arith.mulf %199, %200 : vector<32x16xf32>
    %202 = arith.addf %191, %201 : vector<32x16xf32>
    %c3_i32_62 = arith.constant 3 : i32
    %203 = vector.broadcast %c3_i32_62 : i32 to vector<32x32xi32>
    %204 = arith.cmpi eq, %16, %203 : vector<32x32xi32>
    %cst_63 = arith.constant 0.000000e+00 : f32
    %205 = vector.broadcast %cst_63 : f32 to vector<32x32xf32>
    %206 = arith.select %204, %124, %205 : vector<32x32xi1>, vector<32x32xf32>
    %cst_64 = arith.constant dense<0.000000e+00> : vector<32xf32>
    %207 = vector.multi_reduction <add>, %206, %cst_64 [1] : vector<32x32xf32> to vector<32xf32>
    %208 = vector.shape_cast %207 : vector<32xf32> to vector<32x1xf32>
    %209 = vector.extract_strided_slice %30 {offsets = [7, 0], sizes = [1, 16], strides = [1, 1]} : vector<9x16xf32> to vector<1x16xf32>
    %210 = vector.broadcast %208 : vector<32x1xf32> to vector<32x16xf32>
    %211 = vector.broadcast %209 : vector<1x16xf32> to vector<32x16xf32>
    %212 = arith.mulf %210, %211 : vector<32x16xf32>
    %213 = arith.addf %202, %212 : vector<32x16xf32>
    %c4_i32_65 = arith.constant 4 : i32
    %214 = vector.broadcast %c4_i32_65 : i32 to vector<32x32xi32>
    %215 = arith.cmpi eq, %16, %214 : vector<32x32xi32>
    %cst_66 = arith.constant 0.000000e+00 : f32
    %216 = vector.broadcast %cst_66 : f32 to vector<32x32xf32>
    %217 = arith.select %215, %124, %216 : vector<32x32xi1>, vector<32x32xf32>
    %cst_67 = arith.constant dense<0.000000e+00> : vector<32xf32>
    %218 = vector.multi_reduction <add>, %217, %cst_67 [1] : vector<32x32xf32> to vector<32xf32>
    %219 = vector.shape_cast %218 : vector<32xf32> to vector<32x1xf32>
    %220 = vector.extract_strided_slice %30 {offsets = [8, 0], sizes = [1, 16], strides = [1, 1]} : vector<9x16xf32> to vector<1x16xf32>
    %221 = vector.broadcast %219 : vector<32x1xf32> to vector<32x16xf32>
    %222 = vector.broadcast %220 : vector<1x16xf32> to vector<32x16xf32>
    %223 = arith.mulf %221, %222 : vector<32x16xf32>
    %224 = arith.addf %213, %223 : vector<32x16xf32>
    %225 = vector.extract_strided_slice %32 {offsets = [0, 0], sizes = [16, 32], strides = [1, 1]} : vector<32x32xf32> to vector<16x32xf32>
    %cst_68 = arith.constant dense<0.000000e+00> : vector<32x32xf32>
    %226 = tpu.matmul %224, %225, %cst_68 {dimension_numbers = #tpu.dot_dimension_numbers<[1], [0], [0], [1], [0, 0, 1, 1], [], []>} : vector<32x16xf32>, vector<16x32xf32>, vector<32x32xf32> -> vector<32x32xf32>
    %227 = arith.addf %33, %226 : vector<32x32xf32>
    %228 = vector.extract_strided_slice %26 {offsets = [0, 16], sizes = [32, 16], strides = [1, 1]} : vector<32x96xf32> to vector<32x16xf32>
    %229 = vector.extract_strided_slice %26 {offsets = [0, 48], sizes = [32, 16], strides = [1, 1]} : vector<32x96xf32> to vector<32x16xf32>
    %230 = vector.extract_strided_slice %26 {offsets = [0, 80], sizes = [32, 16], strides = [1, 1]} : vector<32x96xf32> to vector<32x16xf32>
    %cst_69 = arith.constant dense<0.000000e+00> : vector<32x32xf32>
    %231 = tpu.matmul %228, %229, %cst_69 {dimension_numbers = #tpu.dot_dimension_numbers<[1], [1], [0], [0], [0, 0, 1, 0], [], []>} : vector<32x16xf32>, vector<32x16xf32>, vector<32x32xf32> -> vector<32x32xf32>
    %cst_70 = arith.constant dense<0.000000e+00> : vector<32x9xf32>
    %232 = tpu.matmul %228, %28, %cst_70 {dimension_numbers = #tpu.dot_dimension_numbers<[1], [0], [0], [1], [0, 0, 1, 1], [], []>} : vector<32x16xf32>, vector<16x9xf32>, vector<32x9xf32> -> vector<32x9xf32>
    %c-4_i32_71 = arith.constant -4 : i32
    %233 = vector.broadcast %c-4_i32_71 : i32 to vector<32x32xi32>
    %234 = arith.cmpi eq, %16, %233 : vector<32x32xi32>
    %235 = vector.extract_strided_slice %232 {offsets = [0, 0], sizes = [32, 1], strides = [1, 1]} : vector<32x9xf32> to vector<32x1xf32>
    %cst_72 = arith.constant 0.000000e+00 : f32
    %236 = vector.shape_cast %235 : vector<32x1xf32> to vector<32x1xf32>
    %237 = vector.broadcast %236 : vector<32x1xf32> to vector<32x32xf32>
    %238 = vector.broadcast %cst_72 : f32 to vector<32x32xf32>
    %239 = arith.select %234, %237, %238 : vector<32x32xi1>, vector<32x32xf32>
    %240 = arith.addf %231, %239 : vector<32x32xf32>
    %c-3_i32_73 = arith.constant -3 : i32
    %241 = vector.broadcast %c-3_i32_73 : i32 to vector<32x32xi32>
    %242 = arith.cmpi eq, %16, %241 : vector<32x32xi32>
    %243 = vector.extract_strided_slice %232 {offsets = [0, 1], sizes = [32, 1], strides = [1, 1]} : vector<32x9xf32> to vector<32x1xf32>
    %cst_74 = arith.constant 0.000000e+00 : f32
    %244 = vector.shape_cast %243 : vector<32x1xf32> to vector<32x1xf32>
    %245 = vector.broadcast %244 : vector<32x1xf32> to vector<32x32xf32>
    %246 = vector.broadcast %cst_74 : f32 to vector<32x32xf32>
    %247 = arith.select %242, %245, %246 : vector<32x32xi1>, vector<32x32xf32>
    %248 = arith.addf %240, %247 : vector<32x32xf32>
    %c-2_i32_75 = arith.constant -2 : i32
    %249 = vector.broadcast %c-2_i32_75 : i32 to vector<32x32xi32>
    %250 = arith.cmpi eq, %16, %249 : vector<32x32xi32>
    %251 = vector.extract_strided_slice %232 {offsets = [0, 2], sizes = [32, 1], strides = [1, 1]} : vector<32x9xf32> to vector<32x1xf32>
    %cst_76 = arith.constant 0.000000e+00 : f32
    %252 = vector.shape_cast %251 : vector<32x1xf32> to vector<32x1xf32>
    %253 = vector.broadcast %252 : vector<32x1xf32> to vector<32x32xf32>
    %254 = vector.broadcast %cst_76 : f32 to vector<32x32xf32>
    %255 = arith.select %250, %253, %254 : vector<32x32xi1>, vector<32x32xf32>
    %256 = arith.addf %248, %255 : vector<32x32xf32>
    %c-1_i32_77 = arith.constant -1 : i32
    %257 = vector.broadcast %c-1_i32_77 : i32 to vector<32x32xi32>
    %258 = arith.cmpi eq, %16, %257 : vector<32x32xi32>
    %259 = vector.extract_strided_slice %232 {offsets = [0, 3], sizes = [32, 1], strides = [1, 1]} : vector<32x9xf32> to vector<32x1xf32>
    %cst_78 = arith.constant 0.000000e+00 : f32
    %260 = vector.shape_cast %259 : vector<32x1xf32> to vector<32x1xf32>
    %261 = vector.broadcast %260 : vector<32x1xf32> to vector<32x32xf32>
    %262 = vector.broadcast %cst_78 : f32 to vector<32x32xf32>
    %263 = arith.select %258, %261, %262 : vector<32x32xi1>, vector<32x32xf32>
    %264 = arith.addf %256, %263 : vector<32x32xf32>
    %c0_i32_79 = arith.constant 0 : i32
    %265 = vector.broadcast %c0_i32_79 : i32 to vector<32x32xi32>
    %266 = arith.cmpi eq, %16, %265 : vector<32x32xi32>
    %267 = vector.extract_strided_slice %232 {offsets = [0, 4], sizes = [32, 1], strides = [1, 1]} : vector<32x9xf32> to vector<32x1xf32>
    %cst_80 = arith.constant 0.000000e+00 : f32
    %268 = vector.shape_cast %267 : vector<32x1xf32> to vector<32x1xf32>
    %269 = vector.broadcast %268 : vector<32x1xf32> to vector<32x32xf32>
    %270 = vector.broadcast %cst_80 : f32 to vector<32x32xf32>
    %271 = arith.select %266, %269, %270 : vector<32x32xi1>, vector<32x32xf32>
    %272 = arith.addf %264, %271 : vector<32x32xf32>
    %c1_i32_81 = arith.constant 1 : i32
    %273 = vector.broadcast %c1_i32_81 : i32 to vector<32x32xi32>
    %274 = arith.cmpi eq, %16, %273 : vector<32x32xi32>
    %275 = vector.extract_strided_slice %232 {offsets = [0, 5], sizes = [32, 1], strides = [1, 1]} : vector<32x9xf32> to vector<32x1xf32>
    %cst_82 = arith.constant 0.000000e+00 : f32
    %276 = vector.shape_cast %275 : vector<32x1xf32> to vector<32x1xf32>
    %277 = vector.broadcast %276 : vector<32x1xf32> to vector<32x32xf32>
    %278 = vector.broadcast %cst_82 : f32 to vector<32x32xf32>
    %279 = arith.select %274, %277, %278 : vector<32x32xi1>, vector<32x32xf32>
    %280 = arith.addf %272, %279 : vector<32x32xf32>
    %c2_i32_83 = arith.constant 2 : i32
    %281 = vector.broadcast %c2_i32_83 : i32 to vector<32x32xi32>
    %282 = arith.cmpi eq, %16, %281 : vector<32x32xi32>
    %283 = vector.extract_strided_slice %232 {offsets = [0, 6], sizes = [32, 1], strides = [1, 1]} : vector<32x9xf32> to vector<32x1xf32>
    %cst_84 = arith.constant 0.000000e+00 : f32
    %284 = vector.shape_cast %283 : vector<32x1xf32> to vector<32x1xf32>
    %285 = vector.broadcast %284 : vector<32x1xf32> to vector<32x32xf32>
    %286 = vector.broadcast %cst_84 : f32 to vector<32x32xf32>
    %287 = arith.select %282, %285, %286 : vector<32x32xi1>, vector<32x32xf32>
    %288 = arith.addf %280, %287 : vector<32x32xf32>
    %c3_i32_85 = arith.constant 3 : i32
    %289 = vector.broadcast %c3_i32_85 : i32 to vector<32x32xi32>
    %290 = arith.cmpi eq, %16, %289 : vector<32x32xi32>
    %291 = vector.extract_strided_slice %232 {offsets = [0, 7], sizes = [32, 1], strides = [1, 1]} : vector<32x9xf32> to vector<32x1xf32>
    %cst_86 = arith.constant 0.000000e+00 : f32
    %292 = vector.shape_cast %291 : vector<32x1xf32> to vector<32x1xf32>
    %293 = vector.broadcast %292 : vector<32x1xf32> to vector<32x32xf32>
    %294 = vector.broadcast %cst_86 : f32 to vector<32x32xf32>
    %295 = arith.select %290, %293, %294 : vector<32x32xi1>, vector<32x32xf32>
    %296 = arith.addf %288, %295 : vector<32x32xf32>
    %c4_i32_87 = arith.constant 4 : i32
    %297 = vector.broadcast %c4_i32_87 : i32 to vector<32x32xi32>
    %298 = arith.cmpi eq, %16, %297 : vector<32x32xi32>
    %299 = vector.extract_strided_slice %232 {offsets = [0, 8], sizes = [32, 1], strides = [1, 1]} : vector<32x9xf32> to vector<32x1xf32>
    %cst_88 = arith.constant 0.000000e+00 : f32
    %300 = vector.shape_cast %299 : vector<32x1xf32> to vector<32x1xf32>
    %301 = vector.broadcast %300 : vector<32x1xf32> to vector<32x32xf32>
    %302 = vector.broadcast %cst_88 : f32 to vector<32x32xf32>
    %303 = arith.select %298, %301, %302 : vector<32x32xi1>, vector<32x32xf32>
    %304 = arith.addf %296, %303 : vector<32x32xf32>
    %cst_89 = arith.constant 0.000000e+00 : f32
    %305 = vector.broadcast %cst_89 : f32 to vector<32x32xf32>
    %306 = arith.cmpf ogt, %1, %305 : vector<32x32xf32>
    %cst_90 = arith.constant -1.000000e+04 : f32
    %307 = vector.broadcast %cst_90 : f32 to vector<32x32xf32>
    %308 = arith.select %306, %304, %307 : vector<32x32xi1>, vector<32x32xf32>
    %cst_91 = arith.constant dense<0xFF800000> : vector<32xf32>
    %309 = vector.multi_reduction <maximumf>, %308, %cst_91 [1] : vector<32x32xf32> to vector<32xf32>
    %310 = vector.shape_cast %309 : vector<32xf32> to vector<32x1xf32>
    %311 = vector.broadcast %310 : vector<32x1xf32> to vector<32x32xf32>
    %312 = arith.subf %308, %311 : vector<32x32xf32>
    %313 = math.exp %312 : vector<32x32xf32>
    %cst_92 = arith.constant dense<0.000000e+00> : vector<32xf32>
    %314 = vector.multi_reduction <add>, %313, %cst_92 [1] : vector<32x32xf32> to vector<32xf32>
    %315 = vector.shape_cast %314 : vector<32xf32> to vector<32x1xf32>
    %316 = tpu.reciprocal %315 {approx = true} : vector<32x1xf32> -> vector<32x1xf32>
    %317 = vector.broadcast %316 : vector<32x1xf32> to vector<32x32xf32>
    %318 = arith.mulf %313, %317 : vector<32x32xf32>
    %cst_93 = arith.constant dense<0.000000e+00> : vector<32x16xf32>
    %319 = tpu.matmul %318, %230, %cst_93 {dimension_numbers = #tpu.dot_dimension_numbers<[1], [0], [0], [1], [0, 0, 1, 1], [], []>} : vector<32x32xf32>, vector<32x16xf32>, vector<32x16xf32> -> vector<32x16xf32>
    %c-4_i32_94 = arith.constant -4 : i32
    %320 = vector.broadcast %c-4_i32_94 : i32 to vector<32x32xi32>
    %321 = arith.cmpi eq, %16, %320 : vector<32x32xi32>
    %cst_95 = arith.constant 0.000000e+00 : f32
    %322 = vector.broadcast %cst_95 : f32 to vector<32x32xf32>
    %323 = arith.select %321, %318, %322 : vector<32x32xi1>, vector<32x32xf32>
    %cst_96 = arith.constant dense<0.000000e+00> : vector<32xf32>
    %324 = vector.multi_reduction <add>, %323, %cst_96 [1] : vector<32x32xf32> to vector<32xf32>
    %325 = vector.shape_cast %324 : vector<32xf32> to vector<32x1xf32>
    %326 = vector.extract_strided_slice %30 {offsets = [0, 0], sizes = [1, 16], strides = [1, 1]} : vector<9x16xf32> to vector<1x16xf32>
    %327 = vector.broadcast %325 : vector<32x1xf32> to vector<32x16xf32>
    %328 = vector.broadcast %326 : vector<1x16xf32> to vector<32x16xf32>
    %329 = arith.mulf %327, %328 : vector<32x16xf32>
    %330 = arith.addf %319, %329 : vector<32x16xf32>
    %c-3_i32_97 = arith.constant -3 : i32
    %331 = vector.broadcast %c-3_i32_97 : i32 to vector<32x32xi32>
    %332 = arith.cmpi eq, %16, %331 : vector<32x32xi32>
    %cst_98 = arith.constant 0.000000e+00 : f32
    %333 = vector.broadcast %cst_98 : f32 to vector<32x32xf32>
    %334 = arith.select %332, %318, %333 : vector<32x32xi1>, vector<32x32xf32>
    %cst_99 = arith.constant dense<0.000000e+00> : vector<32xf32>
    %335 = vector.multi_reduction <add>, %334, %cst_99 [1] : vector<32x32xf32> to vector<32xf32>
    %336 = vector.shape_cast %335 : vector<32xf32> to vector<32x1xf32>
    %337 = vector.extract_strided_slice %30 {offsets = [1, 0], sizes = [1, 16], strides = [1, 1]} : vector<9x16xf32> to vector<1x16xf32>
    %338 = vector.broadcast %336 : vector<32x1xf32> to vector<32x16xf32>
    %339 = vector.broadcast %337 : vector<1x16xf32> to vector<32x16xf32>
    %340 = arith.mulf %338, %339 : vector<32x16xf32>
    %341 = arith.addf %330, %340 : vector<32x16xf32>
    %c-2_i32_100 = arith.constant -2 : i32
    %342 = vector.broadcast %c-2_i32_100 : i32 to vector<32x32xi32>
    %343 = arith.cmpi eq, %16, %342 : vector<32x32xi32>
    %cst_101 = arith.constant 0.000000e+00 : f32
    %344 = vector.broadcast %cst_101 : f32 to vector<32x32xf32>
    %345 = arith.select %343, %318, %344 : vector<32x32xi1>, vector<32x32xf32>
    %cst_102 = arith.constant dense<0.000000e+00> : vector<32xf32>
    %346 = vector.multi_reduction <add>, %345, %cst_102 [1] : vector<32x32xf32> to vector<32xf32>
    %347 = vector.shape_cast %346 : vector<32xf32> to vector<32x1xf32>
    %348 = vector.extract_strided_slice %30 {offsets = [2, 0], sizes = [1, 16], strides = [1, 1]} : vector<9x16xf32> to vector<1x16xf32>
    %349 = vector.broadcast %347 : vector<32x1xf32> to vector<32x16xf32>
    %350 = vector.broadcast %348 : vector<1x16xf32> to vector<32x16xf32>
    %351 = arith.mulf %349, %350 : vector<32x16xf32>
    %352 = arith.addf %341, %351 : vector<32x16xf32>
    %c-1_i32_103 = arith.constant -1 : i32
    %353 = vector.broadcast %c-1_i32_103 : i32 to vector<32x32xi32>
    %354 = arith.cmpi eq, %16, %353 : vector<32x32xi32>
    %cst_104 = arith.constant 0.000000e+00 : f32
    %355 = vector.broadcast %cst_104 : f32 to vector<32x32xf32>
    %356 = arith.select %354, %318, %355 : vector<32x32xi1>, vector<32x32xf32>
    %cst_105 = arith.constant dense<0.000000e+00> : vector<32xf32>
    %357 = vector.multi_reduction <add>, %356, %cst_105 [1] : vector<32x32xf32> to vector<32xf32>
    %358 = vector.shape_cast %357 : vector<32xf32> to vector<32x1xf32>
    %359 = vector.extract_strided_slice %30 {offsets = [3, 0], sizes = [1, 16], strides = [1, 1]} : vector<9x16xf32> to vector<1x16xf32>
    %360 = vector.broadcast %358 : vector<32x1xf32> to vector<32x16xf32>
    %361 = vector.broadcast %359 : vector<1x16xf32> to vector<32x16xf32>
    %362 = arith.mulf %360, %361 : vector<32x16xf32>
    %363 = arith.addf %352, %362 : vector<32x16xf32>
    %c0_i32_106 = arith.constant 0 : i32
    %364 = vector.broadcast %c0_i32_106 : i32 to vector<32x32xi32>
    %365 = arith.cmpi eq, %16, %364 : vector<32x32xi32>
    %cst_107 = arith.constant 0.000000e+00 : f32
    %366 = vector.broadcast %cst_107 : f32 to vector<32x32xf32>
    %367 = arith.select %365, %318, %366 : vector<32x32xi1>, vector<32x32xf32>
    %cst_108 = arith.constant dense<0.000000e+00> : vector<32xf32>
    %368 = vector.multi_reduction <add>, %367, %cst_108 [1] : vector<32x32xf32> to vector<32xf32>
    %369 = vector.shape_cast %368 : vector<32xf32> to vector<32x1xf32>
    %370 = vector.extract_strided_slice %30 {offsets = [4, 0], sizes = [1, 16], strides = [1, 1]} : vector<9x16xf32> to vector<1x16xf32>
    %371 = vector.broadcast %369 : vector<32x1xf32> to vector<32x16xf32>
    %372 = vector.broadcast %370 : vector<1x16xf32> to vector<32x16xf32>
    %373 = arith.mulf %371, %372 : vector<32x16xf32>
    %374 = arith.addf %363, %373 : vector<32x16xf32>
    %c1_i32_109 = arith.constant 1 : i32
    %375 = vector.broadcast %c1_i32_109 : i32 to vector<32x32xi32>
    %376 = arith.cmpi eq, %16, %375 : vector<32x32xi32>
    %cst_110 = arith.constant 0.000000e+00 : f32
    %377 = vector.broadcast %cst_110 : f32 to vector<32x32xf32>
    %378 = arith.select %376, %318, %377 : vector<32x32xi1>, vector<32x32xf32>
    %cst_111 = arith.constant dense<0.000000e+00> : vector<32xf32>
    %379 = vector.multi_reduction <add>, %378, %cst_111 [1] : vector<32x32xf32> to vector<32xf32>
    %380 = vector.shape_cast %379 : vector<32xf32> to vector<32x1xf32>
    %381 = vector.extract_strided_slice %30 {offsets = [5, 0], sizes = [1, 16], strides = [1, 1]} : vector<9x16xf32> to vector<1x16xf32>
    %382 = vector.broadcast %380 : vector<32x1xf32> to vector<32x16xf32>
    %383 = vector.broadcast %381 : vector<1x16xf32> to vector<32x16xf32>
    %384 = arith.mulf %382, %383 : vector<32x16xf32>
    %385 = arith.addf %374, %384 : vector<32x16xf32>
    %c2_i32_112 = arith.constant 2 : i32
    %386 = vector.broadcast %c2_i32_112 : i32 to vector<32x32xi32>
    %387 = arith.cmpi eq, %16, %386 : vector<32x32xi32>
    %cst_113 = arith.constant 0.000000e+00 : f32
    %388 = vector.broadcast %cst_113 : f32 to vector<32x32xf32>
    %389 = arith.select %387, %318, %388 : vector<32x32xi1>, vector<32x32xf32>
    %cst_114 = arith.constant dense<0.000000e+00> : vector<32xf32>
    %390 = vector.multi_reduction <add>, %389, %cst_114 [1] : vector<32x32xf32> to vector<32xf32>
    %391 = vector.shape_cast %390 : vector<32xf32> to vector<32x1xf32>
    %392 = vector.extract_strided_slice %30 {offsets = [6, 0], sizes = [1, 16], strides = [1, 1]} : vector<9x16xf32> to vector<1x16xf32>
    %393 = vector.broadcast %391 : vector<32x1xf32> to vector<32x16xf32>
    %394 = vector.broadcast %392 : vector<1x16xf32> to vector<32x16xf32>
    %395 = arith.mulf %393, %394 : vector<32x16xf32>
    %396 = arith.addf %385, %395 : vector<32x16xf32>
    %c3_i32_115 = arith.constant 3 : i32
    %397 = vector.broadcast %c3_i32_115 : i32 to vector<32x32xi32>
    %398 = arith.cmpi eq, %16, %397 : vector<32x32xi32>
    %cst_116 = arith.constant 0.000000e+00 : f32
    %399 = vector.broadcast %cst_116 : f32 to vector<32x32xf32>
    %400 = arith.select %398, %318, %399 : vector<32x32xi1>, vector<32x32xf32>
    %cst_117 = arith.constant dense<0.000000e+00> : vector<32xf32>
    %401 = vector.multi_reduction <add>, %400, %cst_117 [1] : vector<32x32xf32> to vector<32xf32>
    %402 = vector.shape_cast %401 : vector<32xf32> to vector<32x1xf32>
    %403 = vector.extract_strided_slice %30 {offsets = [7, 0], sizes = [1, 16], strides = [1, 1]} : vector<9x16xf32> to vector<1x16xf32>
    %404 = vector.broadcast %402 : vector<32x1xf32> to vector<32x16xf32>
    %405 = vector.broadcast %403 : vector<1x16xf32> to vector<32x16xf32>
    %406 = arith.mulf %404, %405 : vector<32x16xf32>
    %407 = arith.addf %396, %406 : vector<32x16xf32>
    %c4_i32_118 = arith.constant 4 : i32
    %408 = vector.broadcast %c4_i32_118 : i32 to vector<32x32xi32>
    %409 = arith.cmpi eq, %16, %408 : vector<32x32xi32>
    %cst_119 = arith.constant 0.000000e+00 : f32
    %410 = vector.broadcast %cst_119 : f32 to vector<32x32xf32>
    %411 = arith.select %409, %318, %410 : vector<32x32xi1>, vector<32x32xf32>
    %cst_120 = arith.constant dense<0.000000e+00> : vector<32xf32>
    %412 = vector.multi_reduction <add>, %411, %cst_120 [1] : vector<32x32xf32> to vector<32xf32>
    %413 = vector.shape_cast %412 : vector<32xf32> to vector<32x1xf32>
    %414 = vector.extract_strided_slice %30 {offsets = [8, 0], sizes = [1, 16], strides = [1, 1]} : vector<9x16xf32> to vector<1x16xf32>
    %415 = vector.broadcast %413 : vector<32x1xf32> to vector<32x16xf32>
    %416 = vector.broadcast %414 : vector<1x16xf32> to vector<32x16xf32>
    %417 = arith.mulf %415, %416 : vector<32x16xf32>
    %418 = arith.addf %407, %417 : vector<32x16xf32>
    %419 = vector.extract_strided_slice %32 {offsets = [16, 0], sizes = [16, 32], strides = [1, 1]} : vector<32x32xf32> to vector<16x32xf32>
    %cst_121 = arith.constant dense<0.000000e+00> : vector<32x32xf32>
    %420 = tpu.matmul %418, %419, %cst_121 {dimension_numbers = #tpu.dot_dimension_numbers<[1], [0], [0], [1], [0, 0, 1, 1], [], []>} : vector<32x16xf32>, vector<16x32xf32>, vector<32x32xf32> -> vector<32x32xf32>
    %421 = arith.addf %227, %420 : vector<32x32xf32>
    %c0_122 = arith.constant 0 : index
    %c0_123 = arith.constant 0 : index
    %c0_124 = arith.constant 0 : index
    %422 = vector.load %arg7[%c0_122, %c0_123, %c0_124] : memref<2x1x32xf32, #tpu.memory_space<vmem>>, vector<1x1x32xf32>
    %423 = vector.shape_cast %422 : vector<1x1x32xf32> to vector<1x32xf32>
    %424 = vector.broadcast %423 : vector<1x32xf32> to vector<32x32xf32>
    %425 = arith.addf %421, %424 : vector<32x32xf32>
    %426 = arith.addf %13, %425 : vector<32x32xf32>
    %c0_125 = arith.constant 0 : index
    %c0_126 = arith.constant 0 : index
    %c0_127 = arith.constant 0 : index
    %427 = vector.load %arg10[%c0_125, %c0_126, %c0_127] : memref<2x1x32xf32, #tpu.memory_space<vmem>>, vector<1x1x32xf32>
    %428 = vector.shape_cast %427 : vector<1x1x32xf32> to vector<1x32xf32>
    %c0_128 = arith.constant 0 : index
    %c0_129 = arith.constant 0 : index
    %c0_130 = arith.constant 0 : index
    %429 = vector.load %arg11[%c0_128, %c0_129, %c0_130] : memref<2x1x32xf32, #tpu.memory_space<vmem>>, vector<1x1x32xf32>
    %430 = vector.shape_cast %429 : vector<1x1x32xf32> to vector<1x32xf32>
    %cst_131 = arith.constant dense<0.000000e+00> : vector<32xf32>
    %431 = vector.multi_reduction <add>, %426, %cst_131 [1] : vector<32x32xf32> to vector<32xf32>
    %432 = vector.shape_cast %431 : vector<32xf32> to vector<32x1xf32>
    %cst_132 = arith.constant 3.200000e+01 : f32
    %433 = vector.broadcast %cst_132 : f32 to vector<32x1xf32>
    %434 = arith.divf %432, %433 : vector<32x1xf32>
    %435 = vector.broadcast %434 : vector<32x1xf32> to vector<32x32xf32>
    %436 = arith.subf %426, %435 : vector<32x32xf32>
    %437 = arith.mulf %436, %436 : vector<32x32xf32>
    %cst_133 = arith.constant dense<0.000000e+00> : vector<32xf32>
    %438 = vector.multi_reduction <add>, %437, %cst_133 [1] : vector<32x32xf32> to vector<32xf32>
    %439 = vector.shape_cast %438 : vector<32xf32> to vector<32x1xf32>
    %cst_134 = arith.constant 3.200000e+01 : f32
    %440 = vector.broadcast %cst_134 : f32 to vector<32x1xf32>
    %441 = arith.divf %439, %440 : vector<32x1xf32>
    %442 = vector.broadcast %434 : vector<32x1xf32> to vector<32x32xf32>
    %443 = arith.subf %426, %442 : vector<32x32xf32>
    %cst_135 = arith.constant 9.99999974E-6 : f32
    %444 = vector.broadcast %cst_135 : f32 to vector<32x1xf32>
    %445 = arith.addf %441, %444 : vector<32x1xf32>
    %446 = math.rsqrt %445 : vector<32x1xf32>
    %447 = vector.broadcast %446 : vector<32x1xf32> to vector<32x32xf32>
    %448 = arith.mulf %443, %447 : vector<32x32xf32>
    %449 = vector.broadcast %428 : vector<1x32xf32> to vector<32x32xf32>
    %450 = arith.mulf %448, %449 : vector<32x32xf32>
    %451 = vector.broadcast %430 : vector<1x32xf32> to vector<32x32xf32>
    %452 = arith.addf %450, %451 : vector<32x32xf32>
    %453 = vector.broadcast %0 : vector<32x1xf32> to vector<32x32xf32>
    %454 = arith.mulf %452, %453 : vector<32x32xf32>
    %c1_i32_136 = arith.constant 1 : i32
    %455 = tpu.dynamic_rotate %454 by %c1_i32_136 dim 0 : vector<32x32xf32>, i32 -> vector<32x32xf32>
    %c-1_i32_137 = arith.constant -1 : i32
    %456 = vector.broadcast %c-1_i32_137 : i32 to vector<32x1xi32>
    %457 = arith.addi %19, %456 : vector<32x1xi32>
    %c0_i32_138 = arith.constant 0 : i32
    %458 = vector.broadcast %c0_i32_138 : i32 to vector<32x1xi32>
    %459 = arith.cmpi sge, %457, %458 : vector<32x1xi32>
    %c-1_i32_139 = arith.constant -1 : i32
    %460 = vector.broadcast %c-1_i32_139 : i32 to vector<32x1xi32>
    %461 = arith.addi %19, %460 : vector<32x1xi32>
    %c16_i32 = arith.constant 16 : i32
    %462 = vector.broadcast %c16_i32 : i32 to vector<32x1xi32>
    %463 = arith.cmpi slt, %461, %462 : vector<32x1xi32>
    %464 = arith.andi %459, %463 : vector<32x1xi1>
    %cst_140 = arith.constant 0.000000e+00 : f32
    %465 = vector.shape_cast %464 : vector<32x1xi1> to vector<32x1xi1>
    %466 = vector.broadcast %465 : vector<32x1xi1> to vector<32x32xi1>
    %467 = vector.broadcast %cst_140 : f32 to vector<32x32xf32>
    %468 = arith.select %466, %455, %467 : vector<32x32xi1>, vector<32x32xf32>
    %c31_i32 = arith.constant 31 : i32
    %469 = tpu.dynamic_rotate %454 by %c31_i32 dim 0 : vector<32x32xf32>, i32 -> vector<32x32xf32>
    %c1_i32_141 = arith.constant 1 : i32
    %470 = vector.broadcast %c1_i32_141 : i32 to vector<32x1xi32>
    %471 = arith.addi %19, %470 : vector<32x1xi32>
    %c0_i32_142 = arith.constant 0 : i32
    %472 = vector.broadcast %c0_i32_142 : i32 to vector<32x1xi32>
    %473 = arith.cmpi sge, %471, %472 : vector<32x1xi32>
    %c1_i32_143 = arith.constant 1 : i32
    %474 = vector.broadcast %c1_i32_143 : i32 to vector<32x1xi32>
    %475 = arith.addi %19, %474 : vector<32x1xi32>
    %c16_i32_144 = arith.constant 16 : i32
    %476 = vector.broadcast %c16_i32_144 : i32 to vector<32x1xi32>
    %477 = arith.cmpi slt, %475, %476 : vector<32x1xi32>
    %478 = arith.andi %473, %477 : vector<32x1xi1>
    %cst_145 = arith.constant 0.000000e+00 : f32
    %479 = vector.shape_cast %478 : vector<32x1xi1> to vector<32x1xi1>
    %480 = vector.broadcast %479 : vector<32x1xi1> to vector<32x32xi1>
    %481 = vector.broadcast %cst_145 : f32 to vector<32x32xf32>
    %482 = arith.select %480, %469, %481 : vector<32x32xi1>, vector<32x32xf32>
    %483 = tpu.concatenate %468, %454, %482 in 1 : vector<32x32xf32>, vector<32x32xf32>, vector<32x32xf32> -> vector<32x96xf32>
    %c0_146 = arith.constant 0 : index
    %c0_147 = arith.constant 0 : index
    %c0_148 = arith.constant 0 : index
    %484 = vector.load %arg12[%c0_146, %c0_147, %c0_148] : memref<2x96x64xf32, #tpu.memory_space<vmem>>, vector<1x96x64xf32>
    %485 = vector.shape_cast %484 : vector<1x96x64xf32> to vector<96x64xf32>
    %cst_149 = arith.constant dense<0.000000e+00> : vector<32x64xf32>
    %486 = tpu.matmul %483, %485, %cst_149 {dimension_numbers = #tpu.dot_dimension_numbers<[1], [0], [0], [1], [0, 0, 1, 1], [], []>} : vector<32x96xf32>, vector<96x64xf32>, vector<32x64xf32> -> vector<32x64xf32>
    %c0_150 = arith.constant 0 : index
    %c0_151 = arith.constant 0 : index
    %c0_152 = arith.constant 0 : index
    %487 = vector.load %arg13[%c0_150, %c0_151, %c0_152] : memref<2x1x64xf32, #tpu.memory_space<vmem>>, vector<1x1x64xf32>
    %488 = vector.shape_cast %487 : vector<1x1x64xf32> to vector<1x64xf32>
    %489 = vector.broadcast %488 : vector<1x64xf32> to vector<32x64xf32>
    %490 = arith.addf %486, %489 : vector<32x64xf32>
    %cst_153 = arith.constant 0.000000e+00 : f32
    %491 = vector.broadcast %cst_153 : f32 to vector<32x64xf32>
    %492 = arith.maximumf %490, %491 : vector<32x64xf32>
    %493 = vector.broadcast %0 : vector<32x1xf32> to vector<32x64xf32>
    %494 = arith.mulf %492, %493 : vector<32x64xf32>
    %c1_i32_154 = arith.constant 1 : i32
    %495 = tpu.dynamic_rotate %494 by %c1_i32_154 dim 0 : vector<32x64xf32>, i32 -> vector<32x64xf32>
    %c-1_i32_155 = arith.constant -1 : i32
    %496 = vector.broadcast %c-1_i32_155 : i32 to vector<32x1xi32>
    %497 = arith.addi %19, %496 : vector<32x1xi32>
    %c0_i32_156 = arith.constant 0 : i32
    %498 = vector.broadcast %c0_i32_156 : i32 to vector<32x1xi32>
    %499 = arith.cmpi sge, %497, %498 : vector<32x1xi32>
    %c-1_i32_157 = arith.constant -1 : i32
    %500 = vector.broadcast %c-1_i32_157 : i32 to vector<32x1xi32>
    %501 = arith.addi %19, %500 : vector<32x1xi32>
    %c16_i32_158 = arith.constant 16 : i32
    %502 = vector.broadcast %c16_i32_158 : i32 to vector<32x1xi32>
    %503 = arith.cmpi slt, %501, %502 : vector<32x1xi32>
    %504 = arith.andi %499, %503 : vector<32x1xi1>
    %cst_159 = arith.constant 0.000000e+00 : f32
    %505 = vector.shape_cast %504 : vector<32x1xi1> to vector<32x1xi1>
    %506 = vector.broadcast %505 : vector<32x1xi1> to vector<32x64xi1>
    %507 = vector.broadcast %cst_159 : f32 to vector<32x64xf32>
    %508 = arith.select %506, %495, %507 : vector<32x64xi1>, vector<32x64xf32>
    %c31_i32_160 = arith.constant 31 : i32
    %509 = tpu.dynamic_rotate %494 by %c31_i32_160 dim 0 : vector<32x64xf32>, i32 -> vector<32x64xf32>
    %c1_i32_161 = arith.constant 1 : i32
    %510 = vector.broadcast %c1_i32_161 : i32 to vector<32x1xi32>
    %511 = arith.addi %19, %510 : vector<32x1xi32>
    %c0_i32_162 = arith.constant 0 : i32
    %512 = vector.broadcast %c0_i32_162 : i32 to vector<32x1xi32>
    %513 = arith.cmpi sge, %511, %512 : vector<32x1xi32>
    %c1_i32_163 = arith.constant 1 : i32
    %514 = vector.broadcast %c1_i32_163 : i32 to vector<32x1xi32>
    %515 = arith.addi %19, %514 : vector<32x1xi32>
    %c16_i32_164 = arith.constant 16 : i32
    %516 = vector.broadcast %c16_i32_164 : i32 to vector<32x1xi32>
    %517 = arith.cmpi slt, %515, %516 : vector<32x1xi32>
    %518 = arith.andi %513, %517 : vector<32x1xi1>
    %cst_165 = arith.constant 0.000000e+00 : f32
    %519 = vector.shape_cast %518 : vector<32x1xi1> to vector<32x1xi1>
    %520 = vector.broadcast %519 : vector<32x1xi1> to vector<32x64xi1>
    %521 = vector.broadcast %cst_165 : f32 to vector<32x64xf32>
    %522 = arith.select %520, %509, %521 : vector<32x64xi1>, vector<32x64xf32>
    %523 = tpu.concatenate %508, %494, %522 in 1 : vector<32x64xf32>, vector<32x64xf32>, vector<32x64xf32> -> vector<32x192xf32>
    %c0_166 = arith.constant 0 : index
    %c0_167 = arith.constant 0 : index
    %c0_168 = arith.constant 0 : index
    %524 = vector.load %arg14[%c0_166, %c0_167, %c0_168] : memref<2x192x32xf32, #tpu.memory_space<vmem>>, vector<1x192x32xf32>
    %525 = vector.shape_cast %524 : vector<1x192x32xf32> to vector<192x32xf32>
    %cst_169 = arith.constant dense<0.000000e+00> : vector<32x32xf32>
    %526 = tpu.matmul %523, %525, %cst_169 {dimension_numbers = #tpu.dot_dimension_numbers<[1], [0], [0], [1], [0, 0, 1, 1], [], []>} : vector<32x192xf32>, vector<192x32xf32>, vector<32x32xf32> -> vector<32x32xf32>
    %c0_170 = arith.constant 0 : index
    %c0_171 = arith.constant 0 : index
    %c0_172 = arith.constant 0 : index
    %527 = vector.load %arg15[%c0_170, %c0_171, %c0_172] : memref<2x1x32xf32, #tpu.memory_space<vmem>>, vector<1x1x32xf32>
    %528 = vector.shape_cast %527 : vector<1x1x32xf32> to vector<1x32xf32>
    %529 = vector.broadcast %528 : vector<1x32xf32> to vector<32x32xf32>
    %530 = arith.addf %526, %529 : vector<32x32xf32>
    %531 = vector.broadcast %0 : vector<32x1xf32> to vector<32x32xf32>
    %532 = arith.mulf %530, %531 : vector<32x32xf32>
    %533 = arith.addf %452, %532 : vector<32x32xf32>
    %c0_173 = arith.constant 0 : index
    %c0_174 = arith.constant 0 : index
    %c0_175 = arith.constant 0 : index
    %534 = vector.load %arg16[%c0_173, %c0_174, %c0_175] : memref<2x1x32xf32, #tpu.memory_space<vmem>>, vector<1x1x32xf32>
    %535 = vector.shape_cast %534 : vector<1x1x32xf32> to vector<1x32xf32>
    %c0_176 = arith.constant 0 : index
    %c0_177 = arith.constant 0 : index
    %c0_178 = arith.constant 0 : index
    %536 = vector.load %arg17[%c0_176, %c0_177, %c0_178] : memref<2x1x32xf32, #tpu.memory_space<vmem>>, vector<1x1x32xf32>
    %537 = vector.shape_cast %536 : vector<1x1x32xf32> to vector<1x32xf32>
    %cst_179 = arith.constant dense<0.000000e+00> : vector<32xf32>
    %538 = vector.multi_reduction <add>, %533, %cst_179 [1] : vector<32x32xf32> to vector<32xf32>
    %539 = vector.shape_cast %538 : vector<32xf32> to vector<32x1xf32>
    %cst_180 = arith.constant 3.200000e+01 : f32
    %540 = vector.broadcast %cst_180 : f32 to vector<32x1xf32>
    %541 = arith.divf %539, %540 : vector<32x1xf32>
    %542 = vector.broadcast %541 : vector<32x1xf32> to vector<32x32xf32>
    %543 = arith.subf %533, %542 : vector<32x32xf32>
    %544 = arith.mulf %543, %543 : vector<32x32xf32>
    %cst_181 = arith.constant dense<0.000000e+00> : vector<32xf32>
    %545 = vector.multi_reduction <add>, %544, %cst_181 [1] : vector<32x32xf32> to vector<32xf32>
    %546 = vector.shape_cast %545 : vector<32xf32> to vector<32x1xf32>
    %cst_182 = arith.constant 3.200000e+01 : f32
    %547 = vector.broadcast %cst_182 : f32 to vector<32x1xf32>
    %548 = arith.divf %546, %547 : vector<32x1xf32>
    %549 = vector.broadcast %541 : vector<32x1xf32> to vector<32x32xf32>
    %550 = arith.subf %533, %549 : vector<32x32xf32>
    %cst_183 = arith.constant 9.99999974E-6 : f32
    %551 = vector.broadcast %cst_183 : f32 to vector<32x1xf32>
    %552 = arith.addf %548, %551 : vector<32x1xf32>
    %553 = math.rsqrt %552 : vector<32x1xf32>
    %554 = vector.broadcast %553 : vector<32x1xf32> to vector<32x32xf32>
    %555 = arith.mulf %550, %554 : vector<32x32xf32>
    %556 = vector.broadcast %535 : vector<1x32xf32> to vector<32x32xf32>
    %557 = arith.mulf %555, %556 : vector<32x32xf32>
    %558 = vector.broadcast %537 : vector<1x32xf32> to vector<32x32xf32>
    %559 = arith.addf %557, %558 : vector<32x32xf32>
    %c1 = arith.constant 1 : index
    %c0_184 = arith.constant 0 : index
    %c0_185 = arith.constant 0 : index
    %560 = vector.load %arg4[%c1, %c0_184, %c0_185] : memref<2x32x96xf32, #tpu.memory_space<vmem>>, vector<1x32x96xf32>
    %561 = vector.shape_cast %560 : vector<1x32x96xf32> to vector<32x96xf32>
    %cst_186 = arith.constant dense<0.000000e+00> : vector<32x96xf32>
    %562 = tpu.matmul %559, %561, %cst_186 {dimension_numbers = #tpu.dot_dimension_numbers<[1], [0], [0], [1], [0, 0, 1, 1], [], []>} : vector<32x32xf32>, vector<32x96xf32>, vector<32x96xf32> -> vector<32x96xf32>
    %c1_187 = arith.constant 1 : index
    %c0_188 = arith.constant 0 : index
    %c0_189 = arith.constant 0 : index
    %563 = vector.load %arg5[%c1_187, %c0_188, %c0_189] : memref<2x1x96xf32, #tpu.memory_space<vmem>>, vector<1x1x96xf32>
    %564 = vector.shape_cast %563 : vector<1x1x96xf32> to vector<1x96xf32>
    %565 = vector.broadcast %564 : vector<1x96xf32> to vector<32x96xf32>
    %566 = arith.addf %562, %565 : vector<32x96xf32>
    %c1_190 = arith.constant 1 : index
    %c0_191 = arith.constant 0 : index
    %c0_192 = arith.constant 0 : index
    %567 = vector.load %arg8[%c1_190, %c0_191, %c0_192] : memref<2x16x9xf32, #tpu.memory_space<vmem>>, vector<1x16x9xf32>
    %568 = vector.shape_cast %567 : vector<1x16x9xf32> to vector<16x9xf32>
    %c1_193 = arith.constant 1 : index
    %c0_194 = arith.constant 0 : index
    %c0_195 = arith.constant 0 : index
    %569 = vector.load %arg9[%c1_193, %c0_194, %c0_195] : memref<2x9x16xf32, #tpu.memory_space<vmem>>, vector<1x9x16xf32>
    %570 = vector.shape_cast %569 : vector<1x9x16xf32> to vector<9x16xf32>
    %c1_196 = arith.constant 1 : index
    %c0_197 = arith.constant 0 : index
    %c0_198 = arith.constant 0 : index
    %571 = vector.load %arg6[%c1_196, %c0_197, %c0_198] : memref<2x32x32xf32, #tpu.memory_space<vmem>>, vector<1x32x32xf32>
    %572 = vector.shape_cast %571 : vector<1x32x32xf32> to vector<32x32xf32>
    %cst_199 = arith.constant 0.000000e+00 : f32
    %573 = vector.broadcast %cst_199 : f32 to vector<32x32xf32>
    %574 = vector.extract_strided_slice %566 {offsets = [0, 0], sizes = [32, 16], strides = [1, 1]} : vector<32x96xf32> to vector<32x16xf32>
    %575 = vector.extract_strided_slice %566 {offsets = [0, 32], sizes = [32, 16], strides = [1, 1]} : vector<32x96xf32> to vector<32x16xf32>
    %576 = vector.extract_strided_slice %566 {offsets = [0, 64], sizes = [32, 16], strides = [1, 1]} : vector<32x96xf32> to vector<32x16xf32>
    %cst_200 = arith.constant dense<0.000000e+00> : vector<32x32xf32>
    %577 = tpu.matmul %574, %575, %cst_200 {dimension_numbers = #tpu.dot_dimension_numbers<[1], [1], [0], [0], [0, 0, 1, 0], [], []>} : vector<32x16xf32>, vector<32x16xf32>, vector<32x32xf32> -> vector<32x32xf32>
    %cst_201 = arith.constant dense<0.000000e+00> : vector<32x9xf32>
    %578 = tpu.matmul %574, %568, %cst_201 {dimension_numbers = #tpu.dot_dimension_numbers<[1], [0], [0], [1], [0, 0, 1, 1], [], []>} : vector<32x16xf32>, vector<16x9xf32>, vector<32x9xf32> -> vector<32x9xf32>
    %c-4_i32_202 = arith.constant -4 : i32
    %579 = vector.broadcast %c-4_i32_202 : i32 to vector<32x32xi32>
    %580 = arith.cmpi eq, %16, %579 : vector<32x32xi32>
    %581 = vector.extract_strided_slice %578 {offsets = [0, 0], sizes = [32, 1], strides = [1, 1]} : vector<32x9xf32> to vector<32x1xf32>
    %cst_203 = arith.constant 0.000000e+00 : f32
    %582 = vector.shape_cast %581 : vector<32x1xf32> to vector<32x1xf32>
    %583 = vector.broadcast %582 : vector<32x1xf32> to vector<32x32xf32>
    %584 = vector.broadcast %cst_203 : f32 to vector<32x32xf32>
    %585 = arith.select %580, %583, %584 : vector<32x32xi1>, vector<32x32xf32>
    %586 = arith.addf %577, %585 : vector<32x32xf32>
    %c-3_i32_204 = arith.constant -3 : i32
    %587 = vector.broadcast %c-3_i32_204 : i32 to vector<32x32xi32>
    %588 = arith.cmpi eq, %16, %587 : vector<32x32xi32>
    %589 = vector.extract_strided_slice %578 {offsets = [0, 1], sizes = [32, 1], strides = [1, 1]} : vector<32x9xf32> to vector<32x1xf32>
    %cst_205 = arith.constant 0.000000e+00 : f32
    %590 = vector.shape_cast %589 : vector<32x1xf32> to vector<32x1xf32>
    %591 = vector.broadcast %590 : vector<32x1xf32> to vector<32x32xf32>
    %592 = vector.broadcast %cst_205 : f32 to vector<32x32xf32>
    %593 = arith.select %588, %591, %592 : vector<32x32xi1>, vector<32x32xf32>
    %594 = arith.addf %586, %593 : vector<32x32xf32>
    %c-2_i32_206 = arith.constant -2 : i32
    %595 = vector.broadcast %c-2_i32_206 : i32 to vector<32x32xi32>
    %596 = arith.cmpi eq, %16, %595 : vector<32x32xi32>
    %597 = vector.extract_strided_slice %578 {offsets = [0, 2], sizes = [32, 1], strides = [1, 1]} : vector<32x9xf32> to vector<32x1xf32>
    %cst_207 = arith.constant 0.000000e+00 : f32
    %598 = vector.shape_cast %597 : vector<32x1xf32> to vector<32x1xf32>
    %599 = vector.broadcast %598 : vector<32x1xf32> to vector<32x32xf32>
    %600 = vector.broadcast %cst_207 : f32 to vector<32x32xf32>
    %601 = arith.select %596, %599, %600 : vector<32x32xi1>, vector<32x32xf32>
    %602 = arith.addf %594, %601 : vector<32x32xf32>
    %c-1_i32_208 = arith.constant -1 : i32
    %603 = vector.broadcast %c-1_i32_208 : i32 to vector<32x32xi32>
    %604 = arith.cmpi eq, %16, %603 : vector<32x32xi32>
    %605 = vector.extract_strided_slice %578 {offsets = [0, 3], sizes = [32, 1], strides = [1, 1]} : vector<32x9xf32> to vector<32x1xf32>
    %cst_209 = arith.constant 0.000000e+00 : f32
    %606 = vector.shape_cast %605 : vector<32x1xf32> to vector<32x1xf32>
    %607 = vector.broadcast %606 : vector<32x1xf32> to vector<32x32xf32>
    %608 = vector.broadcast %cst_209 : f32 to vector<32x32xf32>
    %609 = arith.select %604, %607, %608 : vector<32x32xi1>, vector<32x32xf32>
    %610 = arith.addf %602, %609 : vector<32x32xf32>
    %c0_i32_210 = arith.constant 0 : i32
    %611 = vector.broadcast %c0_i32_210 : i32 to vector<32x32xi32>
    %612 = arith.cmpi eq, %16, %611 : vector<32x32xi32>
    %613 = vector.extract_strided_slice %578 {offsets = [0, 4], sizes = [32, 1], strides = [1, 1]} : vector<32x9xf32> to vector<32x1xf32>
    %cst_211 = arith.constant 0.000000e+00 : f32
    %614 = vector.shape_cast %613 : vector<32x1xf32> to vector<32x1xf32>
    %615 = vector.broadcast %614 : vector<32x1xf32> to vector<32x32xf32>
    %616 = vector.broadcast %cst_211 : f32 to vector<32x32xf32>
    %617 = arith.select %612, %615, %616 : vector<32x32xi1>, vector<32x32xf32>
    %618 = arith.addf %610, %617 : vector<32x32xf32>
    %c1_i32_212 = arith.constant 1 : i32
    %619 = vector.broadcast %c1_i32_212 : i32 to vector<32x32xi32>
    %620 = arith.cmpi eq, %16, %619 : vector<32x32xi32>
    %621 = vector.extract_strided_slice %578 {offsets = [0, 5], sizes = [32, 1], strides = [1, 1]} : vector<32x9xf32> to vector<32x1xf32>
    %cst_213 = arith.constant 0.000000e+00 : f32
    %622 = vector.shape_cast %621 : vector<32x1xf32> to vector<32x1xf32>
    %623 = vector.broadcast %622 : vector<32x1xf32> to vector<32x32xf32>
    %624 = vector.broadcast %cst_213 : f32 to vector<32x32xf32>
    %625 = arith.select %620, %623, %624 : vector<32x32xi1>, vector<32x32xf32>
    %626 = arith.addf %618, %625 : vector<32x32xf32>
    %c2_i32_214 = arith.constant 2 : i32
    %627 = vector.broadcast %c2_i32_214 : i32 to vector<32x32xi32>
    %628 = arith.cmpi eq, %16, %627 : vector<32x32xi32>
    %629 = vector.extract_strided_slice %578 {offsets = [0, 6], sizes = [32, 1], strides = [1, 1]} : vector<32x9xf32> to vector<32x1xf32>
    %cst_215 = arith.constant 0.000000e+00 : f32
    %630 = vector.shape_cast %629 : vector<32x1xf32> to vector<32x1xf32>
    %631 = vector.broadcast %630 : vector<32x1xf32> to vector<32x32xf32>
    %632 = vector.broadcast %cst_215 : f32 to vector<32x32xf32>
    %633 = arith.select %628, %631, %632 : vector<32x32xi1>, vector<32x32xf32>
    %634 = arith.addf %626, %633 : vector<32x32xf32>
    %c3_i32_216 = arith.constant 3 : i32
    %635 = vector.broadcast %c3_i32_216 : i32 to vector<32x32xi32>
    %636 = arith.cmpi eq, %16, %635 : vector<32x32xi32>
    %637 = vector.extract_strided_slice %578 {offsets = [0, 7], sizes = [32, 1], strides = [1, 1]} : vector<32x9xf32> to vector<32x1xf32>
    %cst_217 = arith.constant 0.000000e+00 : f32
    %638 = vector.shape_cast %637 : vector<32x1xf32> to vector<32x1xf32>
    %639 = vector.broadcast %638 : vector<32x1xf32> to vector<32x32xf32>
    %640 = vector.broadcast %cst_217 : f32 to vector<32x32xf32>
    %641 = arith.select %636, %639, %640 : vector<32x32xi1>, vector<32x32xf32>
    %642 = arith.addf %634, %641 : vector<32x32xf32>
    %c4_i32_218 = arith.constant 4 : i32
    %643 = vector.broadcast %c4_i32_218 : i32 to vector<32x32xi32>
    %644 = arith.cmpi eq, %16, %643 : vector<32x32xi32>
    %645 = vector.extract_strided_slice %578 {offsets = [0, 8], sizes = [32, 1], strides = [1, 1]} : vector<32x9xf32> to vector<32x1xf32>
    %cst_219 = arith.constant 0.000000e+00 : f32
    %646 = vector.shape_cast %645 : vector<32x1xf32> to vector<32x1xf32>
    %647 = vector.broadcast %646 : vector<32x1xf32> to vector<32x32xf32>
    %648 = vector.broadcast %cst_219 : f32 to vector<32x32xf32>
    %649 = arith.select %644, %647, %648 : vector<32x32xi1>, vector<32x32xf32>
    %650 = arith.addf %642, %649 : vector<32x32xf32>
    %cst_220 = arith.constant 0.000000e+00 : f32
    %651 = vector.broadcast %cst_220 : f32 to vector<32x32xf32>
    %652 = arith.cmpf ogt, %1, %651 : vector<32x32xf32>
    %cst_221 = arith.constant -1.000000e+04 : f32
    %653 = vector.broadcast %cst_221 : f32 to vector<32x32xf32>
    %654 = arith.select %652, %650, %653 : vector<32x32xi1>, vector<32x32xf32>
    %cst_222 = arith.constant dense<0xFF800000> : vector<32xf32>
    %655 = vector.multi_reduction <maximumf>, %654, %cst_222 [1] : vector<32x32xf32> to vector<32xf32>
    %656 = vector.shape_cast %655 : vector<32xf32> to vector<32x1xf32>
    %657 = vector.broadcast %656 : vector<32x1xf32> to vector<32x32xf32>
    %658 = arith.subf %654, %657 : vector<32x32xf32>
    %659 = math.exp %658 : vector<32x32xf32>
    %cst_223 = arith.constant dense<0.000000e+00> : vector<32xf32>
    %660 = vector.multi_reduction <add>, %659, %cst_223 [1] : vector<32x32xf32> to vector<32xf32>
    %661 = vector.shape_cast %660 : vector<32xf32> to vector<32x1xf32>
    %662 = tpu.reciprocal %661 {approx = true} : vector<32x1xf32> -> vector<32x1xf32>
    %663 = vector.broadcast %662 : vector<32x1xf32> to vector<32x32xf32>
    %664 = arith.mulf %659, %663 : vector<32x32xf32>
    %cst_224 = arith.constant dense<0.000000e+00> : vector<32x16xf32>
    %665 = tpu.matmul %664, %576, %cst_224 {dimension_numbers = #tpu.dot_dimension_numbers<[1], [0], [0], [1], [0, 0, 1, 1], [], []>} : vector<32x32xf32>, vector<32x16xf32>, vector<32x16xf32> -> vector<32x16xf32>
    %c-4_i32_225 = arith.constant -4 : i32
    %666 = vector.broadcast %c-4_i32_225 : i32 to vector<32x32xi32>
    %667 = arith.cmpi eq, %16, %666 : vector<32x32xi32>
    %cst_226 = arith.constant 0.000000e+00 : f32
    %668 = vector.broadcast %cst_226 : f32 to vector<32x32xf32>
    %669 = arith.select %667, %664, %668 : vector<32x32xi1>, vector<32x32xf32>
    %cst_227 = arith.constant dense<0.000000e+00> : vector<32xf32>
    %670 = vector.multi_reduction <add>, %669, %cst_227 [1] : vector<32x32xf32> to vector<32xf32>
    %671 = vector.shape_cast %670 : vector<32xf32> to vector<32x1xf32>
    %672 = vector.extract_strided_slice %570 {offsets = [0, 0], sizes = [1, 16], strides = [1, 1]} : vector<9x16xf32> to vector<1x16xf32>
    %673 = vector.broadcast %671 : vector<32x1xf32> to vector<32x16xf32>
    %674 = vector.broadcast %672 : vector<1x16xf32> to vector<32x16xf32>
    %675 = arith.mulf %673, %674 : vector<32x16xf32>
    %676 = arith.addf %665, %675 : vector<32x16xf32>
    %c-3_i32_228 = arith.constant -3 : i32
    %677 = vector.broadcast %c-3_i32_228 : i32 to vector<32x32xi32>
    %678 = arith.cmpi eq, %16, %677 : vector<32x32xi32>
    %cst_229 = arith.constant 0.000000e+00 : f32
    %679 = vector.broadcast %cst_229 : f32 to vector<32x32xf32>
    %680 = arith.select %678, %664, %679 : vector<32x32xi1>, vector<32x32xf32>
    %cst_230 = arith.constant dense<0.000000e+00> : vector<32xf32>
    %681 = vector.multi_reduction <add>, %680, %cst_230 [1] : vector<32x32xf32> to vector<32xf32>
    %682 = vector.shape_cast %681 : vector<32xf32> to vector<32x1xf32>
    %683 = vector.extract_strided_slice %570 {offsets = [1, 0], sizes = [1, 16], strides = [1, 1]} : vector<9x16xf32> to vector<1x16xf32>
    %684 = vector.broadcast %682 : vector<32x1xf32> to vector<32x16xf32>
    %685 = vector.broadcast %683 : vector<1x16xf32> to vector<32x16xf32>
    %686 = arith.mulf %684, %685 : vector<32x16xf32>
    %687 = arith.addf %676, %686 : vector<32x16xf32>
    %c-2_i32_231 = arith.constant -2 : i32
    %688 = vector.broadcast %c-2_i32_231 : i32 to vector<32x32xi32>
    %689 = arith.cmpi eq, %16, %688 : vector<32x32xi32>
    %cst_232 = arith.constant 0.000000e+00 : f32
    %690 = vector.broadcast %cst_232 : f32 to vector<32x32xf32>
    %691 = arith.select %689, %664, %690 : vector<32x32xi1>, vector<32x32xf32>
    %cst_233 = arith.constant dense<0.000000e+00> : vector<32xf32>
    %692 = vector.multi_reduction <add>, %691, %cst_233 [1] : vector<32x32xf32> to vector<32xf32>
    %693 = vector.shape_cast %692 : vector<32xf32> to vector<32x1xf32>
    %694 = vector.extract_strided_slice %570 {offsets = [2, 0], sizes = [1, 16], strides = [1, 1]} : vector<9x16xf32> to vector<1x16xf32>
    %695 = vector.broadcast %693 : vector<32x1xf32> to vector<32x16xf32>
    %696 = vector.broadcast %694 : vector<1x16xf32> to vector<32x16xf32>
    %697 = arith.mulf %695, %696 : vector<32x16xf32>
    %698 = arith.addf %687, %697 : vector<32x16xf32>
    %c-1_i32_234 = arith.constant -1 : i32
    %699 = vector.broadcast %c-1_i32_234 : i32 to vector<32x32xi32>
    %700 = arith.cmpi eq, %16, %699 : vector<32x32xi32>
    %cst_235 = arith.constant 0.000000e+00 : f32
    %701 = vector.broadcast %cst_235 : f32 to vector<32x32xf32>
    %702 = arith.select %700, %664, %701 : vector<32x32xi1>, vector<32x32xf32>
    %cst_236 = arith.constant dense<0.000000e+00> : vector<32xf32>
    %703 = vector.multi_reduction <add>, %702, %cst_236 [1] : vector<32x32xf32> to vector<32xf32>
    %704 = vector.shape_cast %703 : vector<32xf32> to vector<32x1xf32>
    %705 = vector.extract_strided_slice %570 {offsets = [3, 0], sizes = [1, 16], strides = [1, 1]} : vector<9x16xf32> to vector<1x16xf32>
    %706 = vector.broadcast %704 : vector<32x1xf32> to vector<32x16xf32>
    %707 = vector.broadcast %705 : vector<1x16xf32> to vector<32x16xf32>
    %708 = arith.mulf %706, %707 : vector<32x16xf32>
    %709 = arith.addf %698, %708 : vector<32x16xf32>
    %c0_i32_237 = arith.constant 0 : i32
    %710 = vector.broadcast %c0_i32_237 : i32 to vector<32x32xi32>
    %711 = arith.cmpi eq, %16, %710 : vector<32x32xi32>
    %cst_238 = arith.constant 0.000000e+00 : f32
    %712 = vector.broadcast %cst_238 : f32 to vector<32x32xf32>
    %713 = arith.select %711, %664, %712 : vector<32x32xi1>, vector<32x32xf32>
    %cst_239 = arith.constant dense<0.000000e+00> : vector<32xf32>
    %714 = vector.multi_reduction <add>, %713, %cst_239 [1] : vector<32x32xf32> to vector<32xf32>
    %715 = vector.shape_cast %714 : vector<32xf32> to vector<32x1xf32>
    %716 = vector.extract_strided_slice %570 {offsets = [4, 0], sizes = [1, 16], strides = [1, 1]} : vector<9x16xf32> to vector<1x16xf32>
    %717 = vector.broadcast %715 : vector<32x1xf32> to vector<32x16xf32>
    %718 = vector.broadcast %716 : vector<1x16xf32> to vector<32x16xf32>
    %719 = arith.mulf %717, %718 : vector<32x16xf32>
    %720 = arith.addf %709, %719 : vector<32x16xf32>
    %c1_i32_240 = arith.constant 1 : i32
    %721 = vector.broadcast %c1_i32_240 : i32 to vector<32x32xi32>
    %722 = arith.cmpi eq, %16, %721 : vector<32x32xi32>
    %cst_241 = arith.constant 0.000000e+00 : f32
    %723 = vector.broadcast %cst_241 : f32 to vector<32x32xf32>
    %724 = arith.select %722, %664, %723 : vector<32x32xi1>, vector<32x32xf32>
    %cst_242 = arith.constant dense<0.000000e+00> : vector<32xf32>
    %725 = vector.multi_reduction <add>, %724, %cst_242 [1] : vector<32x32xf32> to vector<32xf32>
    %726 = vector.shape_cast %725 : vector<32xf32> to vector<32x1xf32>
    %727 = vector.extract_strided_slice %570 {offsets = [5, 0], sizes = [1, 16], strides = [1, 1]} : vector<9x16xf32> to vector<1x16xf32>
    %728 = vector.broadcast %726 : vector<32x1xf32> to vector<32x16xf32>
    %729 = vector.broadcast %727 : vector<1x16xf32> to vector<32x16xf32>
    %730 = arith.mulf %728, %729 : vector<32x16xf32>
    %731 = arith.addf %720, %730 : vector<32x16xf32>
    %c2_i32_243 = arith.constant 2 : i32
    %732 = vector.broadcast %c2_i32_243 : i32 to vector<32x32xi32>
    %733 = arith.cmpi eq, %16, %732 : vector<32x32xi32>
    %cst_244 = arith.constant 0.000000e+00 : f32
    %734 = vector.broadcast %cst_244 : f32 to vector<32x32xf32>
    %735 = arith.select %733, %664, %734 : vector<32x32xi1>, vector<32x32xf32>
    %cst_245 = arith.constant dense<0.000000e+00> : vector<32xf32>
    %736 = vector.multi_reduction <add>, %735, %cst_245 [1] : vector<32x32xf32> to vector<32xf32>
    %737 = vector.shape_cast %736 : vector<32xf32> to vector<32x1xf32>
    %738 = vector.extract_strided_slice %570 {offsets = [6, 0], sizes = [1, 16], strides = [1, 1]} : vector<9x16xf32> to vector<1x16xf32>
    %739 = vector.broadcast %737 : vector<32x1xf32> to vector<32x16xf32>
    %740 = vector.broadcast %738 : vector<1x16xf32> to vector<32x16xf32>
    %741 = arith.mulf %739, %740 : vector<32x16xf32>
    %742 = arith.addf %731, %741 : vector<32x16xf32>
    %c3_i32_246 = arith.constant 3 : i32
    %743 = vector.broadcast %c3_i32_246 : i32 to vector<32x32xi32>
    %744 = arith.cmpi eq, %16, %743 : vector<32x32xi32>
    %cst_247 = arith.constant 0.000000e+00 : f32
    %745 = vector.broadcast %cst_247 : f32 to vector<32x32xf32>
    %746 = arith.select %744, %664, %745 : vector<32x32xi1>, vector<32x32xf32>
    %cst_248 = arith.constant dense<0.000000e+00> : vector<32xf32>
    %747 = vector.multi_reduction <add>, %746, %cst_248 [1] : vector<32x32xf32> to vector<32xf32>
    %748 = vector.shape_cast %747 : vector<32xf32> to vector<32x1xf32>
    %749 = vector.extract_strided_slice %570 {offsets = [7, 0], sizes = [1, 16], strides = [1, 1]} : vector<9x16xf32> to vector<1x16xf32>
    %750 = vector.broadcast %748 : vector<32x1xf32> to vector<32x16xf32>
    %751 = vector.broadcast %749 : vector<1x16xf32> to vector<32x16xf32>
    %752 = arith.mulf %750, %751 : vector<32x16xf32>
    %753 = arith.addf %742, %752 : vector<32x16xf32>
    %c4_i32_249 = arith.constant 4 : i32
    %754 = vector.broadcast %c4_i32_249 : i32 to vector<32x32xi32>
    %755 = arith.cmpi eq, %16, %754 : vector<32x32xi32>
    %cst_250 = arith.constant 0.000000e+00 : f32
    %756 = vector.broadcast %cst_250 : f32 to vector<32x32xf32>
    %757 = arith.select %755, %664, %756 : vector<32x32xi1>, vector<32x32xf32>
    %cst_251 = arith.constant dense<0.000000e+00> : vector<32xf32>
    %758 = vector.multi_reduction <add>, %757, %cst_251 [1] : vector<32x32xf32> to vector<32xf32>
    %759 = vector.shape_cast %758 : vector<32xf32> to vector<32x1xf32>
    %760 = vector.extract_strided_slice %570 {offsets = [8, 0], sizes = [1, 16], strides = [1, 1]} : vector<9x16xf32> to vector<1x16xf32>
    %761 = vector.broadcast %759 : vector<32x1xf32> to vector<32x16xf32>
    %762 = vector.broadcast %760 : vector<1x16xf32> to vector<32x16xf32>
    %763 = arith.mulf %761, %762 : vector<32x16xf32>
    %764 = arith.addf %753, %763 : vector<32x16xf32>
    %765 = vector.extract_strided_slice %572 {offsets = [0, 0], sizes = [16, 32], strides = [1, 1]} : vector<32x32xf32> to vector<16x32xf32>
    %cst_252 = arith.constant dense<0.000000e+00> : vector<32x32xf32>
    %766 = tpu.matmul %764, %765, %cst_252 {dimension_numbers = #tpu.dot_dimension_numbers<[1], [0], [0], [1], [0, 0, 1, 1], [], []>} : vector<32x16xf32>, vector<16x32xf32>, vector<32x32xf32> -> vector<32x32xf32>
    %767 = arith.addf %573, %766 : vector<32x32xf32>
    %768 = vector.extract_strided_slice %566 {offsets = [0, 16], sizes = [32, 16], strides = [1, 1]} : vector<32x96xf32> to vector<32x16xf32>
    %769 = vector.extract_strided_slice %566 {offsets = [0, 48], sizes = [32, 16], strides = [1, 1]} : vector<32x96xf32> to vector<32x16xf32>
    %770 = vector.extract_strided_slice %566 {offsets = [0, 80], sizes = [32, 16], strides = [1, 1]} : vector<32x96xf32> to vector<32x16xf32>
    %cst_253 = arith.constant dense<0.000000e+00> : vector<32x32xf32>
    %771 = tpu.matmul %768, %769, %cst_253 {dimension_numbers = #tpu.dot_dimension_numbers<[1], [1], [0], [0], [0, 0, 1, 0], [], []>} : vector<32x16xf32>, vector<32x16xf32>, vector<32x32xf32> -> vector<32x32xf32>
    %cst_254 = arith.constant dense<0.000000e+00> : vector<32x9xf32>
    %772 = tpu.matmul %768, %568, %cst_254 {dimension_numbers = #tpu.dot_dimension_numbers<[1], [0], [0], [1], [0, 0, 1, 1], [], []>} : vector<32x16xf32>, vector<16x9xf32>, vector<32x9xf32> -> vector<32x9xf32>
    %c-4_i32_255 = arith.constant -4 : i32
    %773 = vector.broadcast %c-4_i32_255 : i32 to vector<32x32xi32>
    %774 = arith.cmpi eq, %16, %773 : vector<32x32xi32>
    %775 = vector.extract_strided_slice %772 {offsets = [0, 0], sizes = [32, 1], strides = [1, 1]} : vector<32x9xf32> to vector<32x1xf32>
    %cst_256 = arith.constant 0.000000e+00 : f32
    %776 = vector.shape_cast %775 : vector<32x1xf32> to vector<32x1xf32>
    %777 = vector.broadcast %776 : vector<32x1xf32> to vector<32x32xf32>
    %778 = vector.broadcast %cst_256 : f32 to vector<32x32xf32>
    %779 = arith.select %774, %777, %778 : vector<32x32xi1>, vector<32x32xf32>
    %780 = arith.addf %771, %779 : vector<32x32xf32>
    %c-3_i32_257 = arith.constant -3 : i32
    %781 = vector.broadcast %c-3_i32_257 : i32 to vector<32x32xi32>
    %782 = arith.cmpi eq, %16, %781 : vector<32x32xi32>
    %783 = vector.extract_strided_slice %772 {offsets = [0, 1], sizes = [32, 1], strides = [1, 1]} : vector<32x9xf32> to vector<32x1xf32>
    %cst_258 = arith.constant 0.000000e+00 : f32
    %784 = vector.shape_cast %783 : vector<32x1xf32> to vector<32x1xf32>
    %785 = vector.broadcast %784 : vector<32x1xf32> to vector<32x32xf32>
    %786 = vector.broadcast %cst_258 : f32 to vector<32x32xf32>
    %787 = arith.select %782, %785, %786 : vector<32x32xi1>, vector<32x32xf32>
    %788 = arith.addf %780, %787 : vector<32x32xf32>
    %c-2_i32_259 = arith.constant -2 : i32
    %789 = vector.broadcast %c-2_i32_259 : i32 to vector<32x32xi32>
    %790 = arith.cmpi eq, %16, %789 : vector<32x32xi32>
    %791 = vector.extract_strided_slice %772 {offsets = [0, 2], sizes = [32, 1], strides = [1, 1]} : vector<32x9xf32> to vector<32x1xf32>
    %cst_260 = arith.constant 0.000000e+00 : f32
    %792 = vector.shape_cast %791 : vector<32x1xf32> to vector<32x1xf32>
    %793 = vector.broadcast %792 : vector<32x1xf32> to vector<32x32xf32>
    %794 = vector.broadcast %cst_260 : f32 to vector<32x32xf32>
    %795 = arith.select %790, %793, %794 : vector<32x32xi1>, vector<32x32xf32>
    %796 = arith.addf %788, %795 : vector<32x32xf32>
    %c-1_i32_261 = arith.constant -1 : i32
    %797 = vector.broadcast %c-1_i32_261 : i32 to vector<32x32xi32>
    %798 = arith.cmpi eq, %16, %797 : vector<32x32xi32>
    %799 = vector.extract_strided_slice %772 {offsets = [0, 3], sizes = [32, 1], strides = [1, 1]} : vector<32x9xf32> to vector<32x1xf32>
    %cst_262 = arith.constant 0.000000e+00 : f32
    %800 = vector.shape_cast %799 : vector<32x1xf32> to vector<32x1xf32>
    %801 = vector.broadcast %800 : vector<32x1xf32> to vector<32x32xf32>
    %802 = vector.broadcast %cst_262 : f32 to vector<32x32xf32>
    %803 = arith.select %798, %801, %802 : vector<32x32xi1>, vector<32x32xf32>
    %804 = arith.addf %796, %803 : vector<32x32xf32>
    %c0_i32_263 = arith.constant 0 : i32
    %805 = vector.broadcast %c0_i32_263 : i32 to vector<32x32xi32>
    %806 = arith.cmpi eq, %16, %805 : vector<32x32xi32>
    %807 = vector.extract_strided_slice %772 {offsets = [0, 4], sizes = [32, 1], strides = [1, 1]} : vector<32x9xf32> to vector<32x1xf32>
    %cst_264 = arith.constant 0.000000e+00 : f32
    %808 = vector.shape_cast %807 : vector<32x1xf32> to vector<32x1xf32>
    %809 = vector.broadcast %808 : vector<32x1xf32> to vector<32x32xf32>
    %810 = vector.broadcast %cst_264 : f32 to vector<32x32xf32>
    %811 = arith.select %806, %809, %810 : vector<32x32xi1>, vector<32x32xf32>
    %812 = arith.addf %804, %811 : vector<32x32xf32>
    %c1_i32_265 = arith.constant 1 : i32
    %813 = vector.broadcast %c1_i32_265 : i32 to vector<32x32xi32>
    %814 = arith.cmpi eq, %16, %813 : vector<32x32xi32>
    %815 = vector.extract_strided_slice %772 {offsets = [0, 5], sizes = [32, 1], strides = [1, 1]} : vector<32x9xf32> to vector<32x1xf32>
    %cst_266 = arith.constant 0.000000e+00 : f32
    %816 = vector.shape_cast %815 : vector<32x1xf32> to vector<32x1xf32>
    %817 = vector.broadcast %816 : vector<32x1xf32> to vector<32x32xf32>
    %818 = vector.broadcast %cst_266 : f32 to vector<32x32xf32>
    %819 = arith.select %814, %817, %818 : vector<32x32xi1>, vector<32x32xf32>
    %820 = arith.addf %812, %819 : vector<32x32xf32>
    %c2_i32_267 = arith.constant 2 : i32
    %821 = vector.broadcast %c2_i32_267 : i32 to vector<32x32xi32>
    %822 = arith.cmpi eq, %16, %821 : vector<32x32xi32>
    %823 = vector.extract_strided_slice %772 {offsets = [0, 6], sizes = [32, 1], strides = [1, 1]} : vector<32x9xf32> to vector<32x1xf32>
    %cst_268 = arith.constant 0.000000e+00 : f32
    %824 = vector.shape_cast %823 : vector<32x1xf32> to vector<32x1xf32>
    %825 = vector.broadcast %824 : vector<32x1xf32> to vector<32x32xf32>
    %826 = vector.broadcast %cst_268 : f32 to vector<32x32xf32>
    %827 = arith.select %822, %825, %826 : vector<32x32xi1>, vector<32x32xf32>
    %828 = arith.addf %820, %827 : vector<32x32xf32>
    %c3_i32_269 = arith.constant 3 : i32
    %829 = vector.broadcast %c3_i32_269 : i32 to vector<32x32xi32>
    %830 = arith.cmpi eq, %16, %829 : vector<32x32xi32>
    %831 = vector.extract_strided_slice %772 {offsets = [0, 7], sizes = [32, 1], strides = [1, 1]} : vector<32x9xf32> to vector<32x1xf32>
    %cst_270 = arith.constant 0.000000e+00 : f32
    %832 = vector.shape_cast %831 : vector<32x1xf32> to vector<32x1xf32>
    %833 = vector.broadcast %832 : vector<32x1xf32> to vector<32x32xf32>
    %834 = vector.broadcast %cst_270 : f32 to vector<32x32xf32>
    %835 = arith.select %830, %833, %834 : vector<32x32xi1>, vector<32x32xf32>
    %836 = arith.addf %828, %835 : vector<32x32xf32>
    %c4_i32_271 = arith.constant 4 : i32
    %837 = vector.broadcast %c4_i32_271 : i32 to vector<32x32xi32>
    %838 = arith.cmpi eq, %16, %837 : vector<32x32xi32>
    %839 = vector.extract_strided_slice %772 {offsets = [0, 8], sizes = [32, 1], strides = [1, 1]} : vector<32x9xf32> to vector<32x1xf32>
    %cst_272 = arith.constant 0.000000e+00 : f32
    %840 = vector.shape_cast %839 : vector<32x1xf32> to vector<32x1xf32>
    %841 = vector.broadcast %840 : vector<32x1xf32> to vector<32x32xf32>
    %842 = vector.broadcast %cst_272 : f32 to vector<32x32xf32>
    %843 = arith.select %838, %841, %842 : vector<32x32xi1>, vector<32x32xf32>
    %844 = arith.addf %836, %843 : vector<32x32xf32>
    %cst_273 = arith.constant 0.000000e+00 : f32
    %845 = vector.broadcast %cst_273 : f32 to vector<32x32xf32>
    %846 = arith.cmpf ogt, %1, %845 : vector<32x32xf32>
    %cst_274 = arith.constant -1.000000e+04 : f32
    %847 = vector.broadcast %cst_274 : f32 to vector<32x32xf32>
    %848 = arith.select %846, %844, %847 : vector<32x32xi1>, vector<32x32xf32>
    %cst_275 = arith.constant dense<0xFF800000> : vector<32xf32>
    %849 = vector.multi_reduction <maximumf>, %848, %cst_275 [1] : vector<32x32xf32> to vector<32xf32>
    %850 = vector.shape_cast %849 : vector<32xf32> to vector<32x1xf32>
    %851 = vector.broadcast %850 : vector<32x1xf32> to vector<32x32xf32>
    %852 = arith.subf %848, %851 : vector<32x32xf32>
    %853 = math.exp %852 : vector<32x32xf32>
    %cst_276 = arith.constant dense<0.000000e+00> : vector<32xf32>
    %854 = vector.multi_reduction <add>, %853, %cst_276 [1] : vector<32x32xf32> to vector<32xf32>
    %855 = vector.shape_cast %854 : vector<32xf32> to vector<32x1xf32>
    %856 = tpu.reciprocal %855 {approx = true} : vector<32x1xf32> -> vector<32x1xf32>
    %857 = vector.broadcast %856 : vector<32x1xf32> to vector<32x32xf32>
    %858 = arith.mulf %853, %857 : vector<32x32xf32>
    %cst_277 = arith.constant dense<0.000000e+00> : vector<32x16xf32>
    %859 = tpu.matmul %858, %770, %cst_277 {dimension_numbers = #tpu.dot_dimension_numbers<[1], [0], [0], [1], [0, 0, 1, 1], [], []>} : vector<32x32xf32>, vector<32x16xf32>, vector<32x16xf32> -> vector<32x16xf32>
    %c-4_i32_278 = arith.constant -4 : i32
    %860 = vector.broadcast %c-4_i32_278 : i32 to vector<32x32xi32>
    %861 = arith.cmpi eq, %16, %860 : vector<32x32xi32>
    %cst_279 = arith.constant 0.000000e+00 : f32
    %862 = vector.broadcast %cst_279 : f32 to vector<32x32xf32>
    %863 = arith.select %861, %858, %862 : vector<32x32xi1>, vector<32x32xf32>
    %cst_280 = arith.constant dense<0.000000e+00> : vector<32xf32>
    %864 = vector.multi_reduction <add>, %863, %cst_280 [1] : vector<32x32xf32> to vector<32xf32>
    %865 = vector.shape_cast %864 : vector<32xf32> to vector<32x1xf32>
    %866 = vector.extract_strided_slice %570 {offsets = [0, 0], sizes = [1, 16], strides = [1, 1]} : vector<9x16xf32> to vector<1x16xf32>
    %867 = vector.broadcast %865 : vector<32x1xf32> to vector<32x16xf32>
    %868 = vector.broadcast %866 : vector<1x16xf32> to vector<32x16xf32>
    %869 = arith.mulf %867, %868 : vector<32x16xf32>
    %870 = arith.addf %859, %869 : vector<32x16xf32>
    %c-3_i32_281 = arith.constant -3 : i32
    %871 = vector.broadcast %c-3_i32_281 : i32 to vector<32x32xi32>
    %872 = arith.cmpi eq, %16, %871 : vector<32x32xi32>
    %cst_282 = arith.constant 0.000000e+00 : f32
    %873 = vector.broadcast %cst_282 : f32 to vector<32x32xf32>
    %874 = arith.select %872, %858, %873 : vector<32x32xi1>, vector<32x32xf32>
    %cst_283 = arith.constant dense<0.000000e+00> : vector<32xf32>
    %875 = vector.multi_reduction <add>, %874, %cst_283 [1] : vector<32x32xf32> to vector<32xf32>
    %876 = vector.shape_cast %875 : vector<32xf32> to vector<32x1xf32>
    %877 = vector.extract_strided_slice %570 {offsets = [1, 0], sizes = [1, 16], strides = [1, 1]} : vector<9x16xf32> to vector<1x16xf32>
    %878 = vector.broadcast %876 : vector<32x1xf32> to vector<32x16xf32>
    %879 = vector.broadcast %877 : vector<1x16xf32> to vector<32x16xf32>
    %880 = arith.mulf %878, %879 : vector<32x16xf32>
    %881 = arith.addf %870, %880 : vector<32x16xf32>
    %c-2_i32_284 = arith.constant -2 : i32
    %882 = vector.broadcast %c-2_i32_284 : i32 to vector<32x32xi32>
    %883 = arith.cmpi eq, %16, %882 : vector<32x32xi32>
    %cst_285 = arith.constant 0.000000e+00 : f32
    %884 = vector.broadcast %cst_285 : f32 to vector<32x32xf32>
    %885 = arith.select %883, %858, %884 : vector<32x32xi1>, vector<32x32xf32>
    %cst_286 = arith.constant dense<0.000000e+00> : vector<32xf32>
    %886 = vector.multi_reduction <add>, %885, %cst_286 [1] : vector<32x32xf32> to vector<32xf32>
    %887 = vector.shape_cast %886 : vector<32xf32> to vector<32x1xf32>
    %888 = vector.extract_strided_slice %570 {offsets = [2, 0], sizes = [1, 16], strides = [1, 1]} : vector<9x16xf32> to vector<1x16xf32>
    %889 = vector.broadcast %887 : vector<32x1xf32> to vector<32x16xf32>
    %890 = vector.broadcast %888 : vector<1x16xf32> to vector<32x16xf32>
    %891 = arith.mulf %889, %890 : vector<32x16xf32>
    %892 = arith.addf %881, %891 : vector<32x16xf32>
    %c-1_i32_287 = arith.constant -1 : i32
    %893 = vector.broadcast %c-1_i32_287 : i32 to vector<32x32xi32>
    %894 = arith.cmpi eq, %16, %893 : vector<32x32xi32>
    %cst_288 = arith.constant 0.000000e+00 : f32
    %895 = vector.broadcast %cst_288 : f32 to vector<32x32xf32>
    %896 = arith.select %894, %858, %895 : vector<32x32xi1>, vector<32x32xf32>
    %cst_289 = arith.constant dense<0.000000e+00> : vector<32xf32>
    %897 = vector.multi_reduction <add>, %896, %cst_289 [1] : vector<32x32xf32> to vector<32xf32>
    %898 = vector.shape_cast %897 : vector<32xf32> to vector<32x1xf32>
    %899 = vector.extract_strided_slice %570 {offsets = [3, 0], sizes = [1, 16], strides = [1, 1]} : vector<9x16xf32> to vector<1x16xf32>
    %900 = vector.broadcast %898 : vector<32x1xf32> to vector<32x16xf32>
    %901 = vector.broadcast %899 : vector<1x16xf32> to vector<32x16xf32>
    %902 = arith.mulf %900, %901 : vector<32x16xf32>
    %903 = arith.addf %892, %902 : vector<32x16xf32>
    %c0_i32_290 = arith.constant 0 : i32
    %904 = vector.broadcast %c0_i32_290 : i32 to vector<32x32xi32>
    %905 = arith.cmpi eq, %16, %904 : vector<32x32xi32>
    %cst_291 = arith.constant 0.000000e+00 : f32
    %906 = vector.broadcast %cst_291 : f32 to vector<32x32xf32>
    %907 = arith.select %905, %858, %906 : vector<32x32xi1>, vector<32x32xf32>
    %cst_292 = arith.constant dense<0.000000e+00> : vector<32xf32>
    %908 = vector.multi_reduction <add>, %907, %cst_292 [1] : vector<32x32xf32> to vector<32xf32>
    %909 = vector.shape_cast %908 : vector<32xf32> to vector<32x1xf32>
    %910 = vector.extract_strided_slice %570 {offsets = [4, 0], sizes = [1, 16], strides = [1, 1]} : vector<9x16xf32> to vector<1x16xf32>
    %911 = vector.broadcast %909 : vector<32x1xf32> to vector<32x16xf32>
    %912 = vector.broadcast %910 : vector<1x16xf32> to vector<32x16xf32>
    %913 = arith.mulf %911, %912 : vector<32x16xf32>
    %914 = arith.addf %903, %913 : vector<32x16xf32>
    %c1_i32_293 = arith.constant 1 : i32
    %915 = vector.broadcast %c1_i32_293 : i32 to vector<32x32xi32>
    %916 = arith.cmpi eq, %16, %915 : vector<32x32xi32>
    %cst_294 = arith.constant 0.000000e+00 : f32
    %917 = vector.broadcast %cst_294 : f32 to vector<32x32xf32>
    %918 = arith.select %916, %858, %917 : vector<32x32xi1>, vector<32x32xf32>
    %cst_295 = arith.constant dense<0.000000e+00> : vector<32xf32>
    %919 = vector.multi_reduction <add>, %918, %cst_295 [1] : vector<32x32xf32> to vector<32xf32>
    %920 = vector.shape_cast %919 : vector<32xf32> to vector<32x1xf32>
    %921 = vector.extract_strided_slice %570 {offsets = [5, 0], sizes = [1, 16], strides = [1, 1]} : vector<9x16xf32> to vector<1x16xf32>
    %922 = vector.broadcast %920 : vector<32x1xf32> to vector<32x16xf32>
    %923 = vector.broadcast %921 : vector<1x16xf32> to vector<32x16xf32>
    %924 = arith.mulf %922, %923 : vector<32x16xf32>
    %925 = arith.addf %914, %924 : vector<32x16xf32>
    %c2_i32_296 = arith.constant 2 : i32
    %926 = vector.broadcast %c2_i32_296 : i32 to vector<32x32xi32>
    %927 = arith.cmpi eq, %16, %926 : vector<32x32xi32>
    %cst_297 = arith.constant 0.000000e+00 : f32
    %928 = vector.broadcast %cst_297 : f32 to vector<32x32xf32>
    %929 = arith.select %927, %858, %928 : vector<32x32xi1>, vector<32x32xf32>
    %cst_298 = arith.constant dense<0.000000e+00> : vector<32xf32>
    %930 = vector.multi_reduction <add>, %929, %cst_298 [1] : vector<32x32xf32> to vector<32xf32>
    %931 = vector.shape_cast %930 : vector<32xf32> to vector<32x1xf32>
    %932 = vector.extract_strided_slice %570 {offsets = [6, 0], sizes = [1, 16], strides = [1, 1]} : vector<9x16xf32> to vector<1x16xf32>
    %933 = vector.broadcast %931 : vector<32x1xf32> to vector<32x16xf32>
    %934 = vector.broadcast %932 : vector<1x16xf32> to vector<32x16xf32>
    %935 = arith.mulf %933, %934 : vector<32x16xf32>
    %936 = arith.addf %925, %935 : vector<32x16xf32>
    %c3_i32_299 = arith.constant 3 : i32
    %937 = vector.broadcast %c3_i32_299 : i32 to vector<32x32xi32>
    %938 = arith.cmpi eq, %16, %937 : vector<32x32xi32>
    %cst_300 = arith.constant 0.000000e+00 : f32
    %939 = vector.broadcast %cst_300 : f32 to vector<32x32xf32>
    %940 = arith.select %938, %858, %939 : vector<32x32xi1>, vector<32x32xf32>
    %cst_301 = arith.constant dense<0.000000e+00> : vector<32xf32>
    %941 = vector.multi_reduction <add>, %940, %cst_301 [1] : vector<32x32xf32> to vector<32xf32>
    %942 = vector.shape_cast %941 : vector<32xf32> to vector<32x1xf32>
    %943 = vector.extract_strided_slice %570 {offsets = [7, 0], sizes = [1, 16], strides = [1, 1]} : vector<9x16xf32> to vector<1x16xf32>
    %944 = vector.broadcast %942 : vector<32x1xf32> to vector<32x16xf32>
    %945 = vector.broadcast %943 : vector<1x16xf32> to vector<32x16xf32>
    %946 = arith.mulf %944, %945 : vector<32x16xf32>
    %947 = arith.addf %936, %946 : vector<32x16xf32>
    %c4_i32_302 = arith.constant 4 : i32
    %948 = vector.broadcast %c4_i32_302 : i32 to vector<32x32xi32>
    %949 = arith.cmpi eq, %16, %948 : vector<32x32xi32>
    %cst_303 = arith.constant 0.000000e+00 : f32
    %950 = vector.broadcast %cst_303 : f32 to vector<32x32xf32>
    %951 = arith.select %949, %858, %950 : vector<32x32xi1>, vector<32x32xf32>
    %cst_304 = arith.constant dense<0.000000e+00> : vector<32xf32>
    %952 = vector.multi_reduction <add>, %951, %cst_304 [1] : vector<32x32xf32> to vector<32xf32>
    %953 = vector.shape_cast %952 : vector<32xf32> to vector<32x1xf32>
    %954 = vector.extract_strided_slice %570 {offsets = [8, 0], sizes = [1, 16], strides = [1, 1]} : vector<9x16xf32> to vector<1x16xf32>
    %955 = vector.broadcast %953 : vector<32x1xf32> to vector<32x16xf32>
    %956 = vector.broadcast %954 : vector<1x16xf32> to vector<32x16xf32>
    %957 = arith.mulf %955, %956 : vector<32x16xf32>
    %958 = arith.addf %947, %957 : vector<32x16xf32>
    %959 = vector.extract_strided_slice %572 {offsets = [16, 0], sizes = [16, 32], strides = [1, 1]} : vector<32x32xf32> to vector<16x32xf32>
    %cst_305 = arith.constant dense<0.000000e+00> : vector<32x32xf32>
    %960 = tpu.matmul %958, %959, %cst_305 {dimension_numbers = #tpu.dot_dimension_numbers<[1], [0], [0], [1], [0, 0, 1, 1], [], []>} : vector<32x16xf32>, vector<16x32xf32>, vector<32x32xf32> -> vector<32x32xf32>
    %961 = arith.addf %767, %960 : vector<32x32xf32>
    %c1_306 = arith.constant 1 : index
    %c0_307 = arith.constant 0 : index
    %c0_308 = arith.constant 0 : index
    %962 = vector.load %arg7[%c1_306, %c0_307, %c0_308] : memref<2x1x32xf32, #tpu.memory_space<vmem>>, vector<1x1x32xf32>
    %963 = vector.shape_cast %962 : vector<1x1x32xf32> to vector<1x32xf32>
    %964 = vector.broadcast %963 : vector<1x32xf32> to vector<32x32xf32>
    %965 = arith.addf %961, %964 : vector<32x32xf32>
    %966 = arith.addf %559, %965 : vector<32x32xf32>
    %c1_309 = arith.constant 1 : index
    %c0_310 = arith.constant 0 : index
    %c0_311 = arith.constant 0 : index
    %967 = vector.load %arg10[%c1_309, %c0_310, %c0_311] : memref<2x1x32xf32, #tpu.memory_space<vmem>>, vector<1x1x32xf32>
    %968 = vector.shape_cast %967 : vector<1x1x32xf32> to vector<1x32xf32>
    %c1_312 = arith.constant 1 : index
    %c0_313 = arith.constant 0 : index
    %c0_314 = arith.constant 0 : index
    %969 = vector.load %arg11[%c1_312, %c0_313, %c0_314] : memref<2x1x32xf32, #tpu.memory_space<vmem>>, vector<1x1x32xf32>
    %970 = vector.shape_cast %969 : vector<1x1x32xf32> to vector<1x32xf32>
    %cst_315 = arith.constant dense<0.000000e+00> : vector<32xf32>
    %971 = vector.multi_reduction <add>, %966, %cst_315 [1] : vector<32x32xf32> to vector<32xf32>
    %972 = vector.shape_cast %971 : vector<32xf32> to vector<32x1xf32>
    %cst_316 = arith.constant 3.200000e+01 : f32
    %973 = vector.broadcast %cst_316 : f32 to vector<32x1xf32>
    %974 = arith.divf %972, %973 : vector<32x1xf32>
    %975 = vector.broadcast %974 : vector<32x1xf32> to vector<32x32xf32>
    %976 = arith.subf %966, %975 : vector<32x32xf32>
    %977 = arith.mulf %976, %976 : vector<32x32xf32>
    %cst_317 = arith.constant dense<0.000000e+00> : vector<32xf32>
    %978 = vector.multi_reduction <add>, %977, %cst_317 [1] : vector<32x32xf32> to vector<32xf32>
    %979 = vector.shape_cast %978 : vector<32xf32> to vector<32x1xf32>
    %cst_318 = arith.constant 3.200000e+01 : f32
    %980 = vector.broadcast %cst_318 : f32 to vector<32x1xf32>
    %981 = arith.divf %979, %980 : vector<32x1xf32>
    %982 = vector.broadcast %974 : vector<32x1xf32> to vector<32x32xf32>
    %983 = arith.subf %966, %982 : vector<32x32xf32>
    %cst_319 = arith.constant 9.99999974E-6 : f32
    %984 = vector.broadcast %cst_319 : f32 to vector<32x1xf32>
    %985 = arith.addf %981, %984 : vector<32x1xf32>
    %986 = math.rsqrt %985 : vector<32x1xf32>
    %987 = vector.broadcast %986 : vector<32x1xf32> to vector<32x32xf32>
    %988 = arith.mulf %983, %987 : vector<32x32xf32>
    %989 = vector.broadcast %968 : vector<1x32xf32> to vector<32x32xf32>
    %990 = arith.mulf %988, %989 : vector<32x32xf32>
    %991 = vector.broadcast %970 : vector<1x32xf32> to vector<32x32xf32>
    %992 = arith.addf %990, %991 : vector<32x32xf32>
    %993 = vector.broadcast %0 : vector<32x1xf32> to vector<32x32xf32>
    %994 = arith.mulf %992, %993 : vector<32x32xf32>
    %c1_i32_320 = arith.constant 1 : i32
    %995 = tpu.dynamic_rotate %994 by %c1_i32_320 dim 0 : vector<32x32xf32>, i32 -> vector<32x32xf32>
    %c-1_i32_321 = arith.constant -1 : i32
    %996 = vector.broadcast %c-1_i32_321 : i32 to vector<32x1xi32>
    %997 = arith.addi %19, %996 : vector<32x1xi32>
    %c0_i32_322 = arith.constant 0 : i32
    %998 = vector.broadcast %c0_i32_322 : i32 to vector<32x1xi32>
    %999 = arith.cmpi sge, %997, %998 : vector<32x1xi32>
    %c-1_i32_323 = arith.constant -1 : i32
    %1000 = vector.broadcast %c-1_i32_323 : i32 to vector<32x1xi32>
    %1001 = arith.addi %19, %1000 : vector<32x1xi32>
    %c16_i32_324 = arith.constant 16 : i32
    %1002 = vector.broadcast %c16_i32_324 : i32 to vector<32x1xi32>
    %1003 = arith.cmpi slt, %1001, %1002 : vector<32x1xi32>
    %1004 = arith.andi %999, %1003 : vector<32x1xi1>
    %cst_325 = arith.constant 0.000000e+00 : f32
    %1005 = vector.shape_cast %1004 : vector<32x1xi1> to vector<32x1xi1>
    %1006 = vector.broadcast %1005 : vector<32x1xi1> to vector<32x32xi1>
    %1007 = vector.broadcast %cst_325 : f32 to vector<32x32xf32>
    %1008 = arith.select %1006, %995, %1007 : vector<32x32xi1>, vector<32x32xf32>
    %c31_i32_326 = arith.constant 31 : i32
    %1009 = tpu.dynamic_rotate %994 by %c31_i32_326 dim 0 : vector<32x32xf32>, i32 -> vector<32x32xf32>
    %c1_i32_327 = arith.constant 1 : i32
    %1010 = vector.broadcast %c1_i32_327 : i32 to vector<32x1xi32>
    %1011 = arith.addi %19, %1010 : vector<32x1xi32>
    %c0_i32_328 = arith.constant 0 : i32
    %1012 = vector.broadcast %c0_i32_328 : i32 to vector<32x1xi32>
    %1013 = arith.cmpi sge, %1011, %1012 : vector<32x1xi32>
    %c1_i32_329 = arith.constant 1 : i32
    %1014 = vector.broadcast %c1_i32_329 : i32 to vector<32x1xi32>
    %1015 = arith.addi %19, %1014 : vector<32x1xi32>
    %c16_i32_330 = arith.constant 16 : i32
    %1016 = vector.broadcast %c16_i32_330 : i32 to vector<32x1xi32>
    %1017 = arith.cmpi slt, %1015, %1016 : vector<32x1xi32>
    %1018 = arith.andi %1013, %1017 : vector<32x1xi1>
    %cst_331 = arith.constant 0.000000e+00 : f32
    %1019 = vector.shape_cast %1018 : vector<32x1xi1> to vector<32x1xi1>
    %1020 = vector.broadcast %1019 : vector<32x1xi1> to vector<32x32xi1>
    %1021 = vector.broadcast %cst_331 : f32 to vector<32x32xf32>
    %1022 = arith.select %1020, %1009, %1021 : vector<32x32xi1>, vector<32x32xf32>
    %1023 = tpu.concatenate %1008, %994, %1022 in 1 : vector<32x32xf32>, vector<32x32xf32>, vector<32x32xf32> -> vector<32x96xf32>
    %c1_332 = arith.constant 1 : index
    %c0_333 = arith.constant 0 : index
    %c0_334 = arith.constant 0 : index
    %1024 = vector.load %arg12[%c1_332, %c0_333, %c0_334] : memref<2x96x64xf32, #tpu.memory_space<vmem>>, vector<1x96x64xf32>
    %1025 = vector.shape_cast %1024 : vector<1x96x64xf32> to vector<96x64xf32>
    %cst_335 = arith.constant dense<0.000000e+00> : vector<32x64xf32>
    %1026 = tpu.matmul %1023, %1025, %cst_335 {dimension_numbers = #tpu.dot_dimension_numbers<[1], [0], [0], [1], [0, 0, 1, 1], [], []>} : vector<32x96xf32>, vector<96x64xf32>, vector<32x64xf32> -> vector<32x64xf32>
    %c1_336 = arith.constant 1 : index
    %c0_337 = arith.constant 0 : index
    %c0_338 = arith.constant 0 : index
    %1027 = vector.load %arg13[%c1_336, %c0_337, %c0_338] : memref<2x1x64xf32, #tpu.memory_space<vmem>>, vector<1x1x64xf32>
    %1028 = vector.shape_cast %1027 : vector<1x1x64xf32> to vector<1x64xf32>
    %1029 = vector.broadcast %1028 : vector<1x64xf32> to vector<32x64xf32>
    %1030 = arith.addf %1026, %1029 : vector<32x64xf32>
    %cst_339 = arith.constant 0.000000e+00 : f32
    %1031 = vector.broadcast %cst_339 : f32 to vector<32x64xf32>
    %1032 = arith.maximumf %1030, %1031 : vector<32x64xf32>
    %1033 = vector.broadcast %0 : vector<32x1xf32> to vector<32x64xf32>
    %1034 = arith.mulf %1032, %1033 : vector<32x64xf32>
    %c1_i32_340 = arith.constant 1 : i32
    %1035 = tpu.dynamic_rotate %1034 by %c1_i32_340 dim 0 : vector<32x64xf32>, i32 -> vector<32x64xf32>
    %c-1_i32_341 = arith.constant -1 : i32
    %1036 = vector.broadcast %c-1_i32_341 : i32 to vector<32x1xi32>
    %1037 = arith.addi %19, %1036 : vector<32x1xi32>
    %c0_i32_342 = arith.constant 0 : i32
    %1038 = vector.broadcast %c0_i32_342 : i32 to vector<32x1xi32>
    %1039 = arith.cmpi sge, %1037, %1038 : vector<32x1xi32>
    %c-1_i32_343 = arith.constant -1 : i32
    %1040 = vector.broadcast %c-1_i32_343 : i32 to vector<32x1xi32>
    %1041 = arith.addi %19, %1040 : vector<32x1xi32>
    %c16_i32_344 = arith.constant 16 : i32
    %1042 = vector.broadcast %c16_i32_344 : i32 to vector<32x1xi32>
    %1043 = arith.cmpi slt, %1041, %1042 : vector<32x1xi32>
    %1044 = arith.andi %1039, %1043 : vector<32x1xi1>
    %cst_345 = arith.constant 0.000000e+00 : f32
    %1045 = vector.shape_cast %1044 : vector<32x1xi1> to vector<32x1xi1>
    %1046 = vector.broadcast %1045 : vector<32x1xi1> to vector<32x64xi1>
    %1047 = vector.broadcast %cst_345 : f32 to vector<32x64xf32>
    %1048 = arith.select %1046, %1035, %1047 : vector<32x64xi1>, vector<32x64xf32>
    %c31_i32_346 = arith.constant 31 : i32
    %1049 = tpu.dynamic_rotate %1034 by %c31_i32_346 dim 0 : vector<32x64xf32>, i32 -> vector<32x64xf32>
    %c1_i32_347 = arith.constant 1 : i32
    %1050 = vector.broadcast %c1_i32_347 : i32 to vector<32x1xi32>
    %1051 = arith.addi %19, %1050 : vector<32x1xi32>
    %c0_i32_348 = arith.constant 0 : i32
    %1052 = vector.broadcast %c0_i32_348 : i32 to vector<32x1xi32>
    %1053 = arith.cmpi sge, %1051, %1052 : vector<32x1xi32>
    %c1_i32_349 = arith.constant 1 : i32
    %1054 = vector.broadcast %c1_i32_349 : i32 to vector<32x1xi32>
    %1055 = arith.addi %19, %1054 : vector<32x1xi32>
    %c16_i32_350 = arith.constant 16 : i32
    %1056 = vector.broadcast %c16_i32_350 : i32 to vector<32x1xi32>
    %1057 = arith.cmpi slt, %1055, %1056 : vector<32x1xi32>
    %1058 = arith.andi %1053, %1057 : vector<32x1xi1>
    %cst_351 = arith.constant 0.000000e+00 : f32
    %1059 = vector.shape_cast %1058 : vector<32x1xi1> to vector<32x1xi1>
    %1060 = vector.broadcast %1059 : vector<32x1xi1> to vector<32x64xi1>
    %1061 = vector.broadcast %cst_351 : f32 to vector<32x64xf32>
    %1062 = arith.select %1060, %1049, %1061 : vector<32x64xi1>, vector<32x64xf32>
    %1063 = tpu.concatenate %1048, %1034, %1062 in 1 : vector<32x64xf32>, vector<32x64xf32>, vector<32x64xf32> -> vector<32x192xf32>
    %c1_352 = arith.constant 1 : index
    %c0_353 = arith.constant 0 : index
    %c0_354 = arith.constant 0 : index
    %1064 = vector.load %arg14[%c1_352, %c0_353, %c0_354] : memref<2x192x32xf32, #tpu.memory_space<vmem>>, vector<1x192x32xf32>
    %1065 = vector.shape_cast %1064 : vector<1x192x32xf32> to vector<192x32xf32>
    %cst_355 = arith.constant dense<0.000000e+00> : vector<32x32xf32>
    %1066 = tpu.matmul %1063, %1065, %cst_355 {dimension_numbers = #tpu.dot_dimension_numbers<[1], [0], [0], [1], [0, 0, 1, 1], [], []>} : vector<32x192xf32>, vector<192x32xf32>, vector<32x32xf32> -> vector<32x32xf32>
    %c1_356 = arith.constant 1 : index
    %c0_357 = arith.constant 0 : index
    %c0_358 = arith.constant 0 : index
    %1067 = vector.load %arg15[%c1_356, %c0_357, %c0_358] : memref<2x1x32xf32, #tpu.memory_space<vmem>>, vector<1x1x32xf32>
    %1068 = vector.shape_cast %1067 : vector<1x1x32xf32> to vector<1x32xf32>
    %1069 = vector.broadcast %1068 : vector<1x32xf32> to vector<32x32xf32>
    %1070 = arith.addf %1066, %1069 : vector<32x32xf32>
    %1071 = vector.broadcast %0 : vector<32x1xf32> to vector<32x32xf32>
    %1072 = arith.mulf %1070, %1071 : vector<32x32xf32>
    %1073 = arith.addf %992, %1072 : vector<32x32xf32>
    %c1_359 = arith.constant 1 : index
    %c0_360 = arith.constant 0 : index
    %c0_361 = arith.constant 0 : index
    %1074 = vector.load %arg16[%c1_359, %c0_360, %c0_361] : memref<2x1x32xf32, #tpu.memory_space<vmem>>, vector<1x1x32xf32>
    %1075 = vector.shape_cast %1074 : vector<1x1x32xf32> to vector<1x32xf32>
    %c1_362 = arith.constant 1 : index
    %c0_363 = arith.constant 0 : index
    %c0_364 = arith.constant 0 : index
    %1076 = vector.load %arg17[%c1_362, %c0_363, %c0_364] : memref<2x1x32xf32, #tpu.memory_space<vmem>>, vector<1x1x32xf32>
    %1077 = vector.shape_cast %1076 : vector<1x1x32xf32> to vector<1x32xf32>
    %cst_365 = arith.constant dense<0.000000e+00> : vector<32xf32>
    %1078 = vector.multi_reduction <add>, %1073, %cst_365 [1] : vector<32x32xf32> to vector<32xf32>
    %1079 = vector.shape_cast %1078 : vector<32xf32> to vector<32x1xf32>
    %cst_366 = arith.constant 3.200000e+01 : f32
    %1080 = vector.broadcast %cst_366 : f32 to vector<32x1xf32>
    %1081 = arith.divf %1079, %1080 : vector<32x1xf32>
    %1082 = vector.broadcast %1081 : vector<32x1xf32> to vector<32x32xf32>
    %1083 = arith.subf %1073, %1082 : vector<32x32xf32>
    %1084 = arith.mulf %1083, %1083 : vector<32x32xf32>
    %cst_367 = arith.constant dense<0.000000e+00> : vector<32xf32>
    %1085 = vector.multi_reduction <add>, %1084, %cst_367 [1] : vector<32x32xf32> to vector<32xf32>
    %1086 = vector.shape_cast %1085 : vector<32xf32> to vector<32x1xf32>
    %cst_368 = arith.constant 3.200000e+01 : f32
    %1087 = vector.broadcast %cst_368 : f32 to vector<32x1xf32>
    %1088 = arith.divf %1086, %1087 : vector<32x1xf32>
    %1089 = vector.broadcast %1081 : vector<32x1xf32> to vector<32x32xf32>
    %1090 = arith.subf %1073, %1089 : vector<32x32xf32>
    %cst_369 = arith.constant 9.99999974E-6 : f32
    %1091 = vector.broadcast %cst_369 : f32 to vector<32x1xf32>
    %1092 = arith.addf %1088, %1091 : vector<32x1xf32>
    %1093 = math.rsqrt %1092 : vector<32x1xf32>
    %1094 = vector.broadcast %1093 : vector<32x1xf32> to vector<32x32xf32>
    %1095 = arith.mulf %1090, %1094 : vector<32x32xf32>
    %1096 = vector.broadcast %1075 : vector<1x32xf32> to vector<32x32xf32>
    %1097 = arith.mulf %1095, %1096 : vector<32x32xf32>
    %1098 = vector.broadcast %1077 : vector<1x32xf32> to vector<32x32xf32>
    %1099 = arith.addf %1097, %1098 : vector<32x32xf32>
    %1100 = vector.broadcast %0 : vector<32x1xf32> to vector<32x32xf32>
    %1101 = arith.mulf %1099, %1100 : vector<32x32xf32>
    %c0_370 = arith.constant 0 : index
    %c0_371 = arith.constant 0 : index
    %1102 = vector.load %arg18[%c0_370, %c0_371] : memref<32x8xf32, #tpu.memory_space<vmem>>, vector<32x8xf32>
    %cst_372 = arith.constant dense<0.000000e+00> : vector<32x8xf32>
    %1103 = tpu.matmul %1101, %1102, %cst_372 {dimension_numbers = #tpu.dot_dimension_numbers<[1], [0], [0], [1], [0, 0, 1, 1], [], []>} : vector<32x32xf32>, vector<32x8xf32>, vector<32x8xf32> -> vector<32x8xf32>
    %c0_373 = arith.constant 0 : index
    %c0_374 = arith.constant 0 : index
    %1104 = vector.load %arg19[%c0_373, %c0_374] : memref<1x8xf32, #tpu.memory_space<vmem>>, vector<1x8xf32>
    %1105 = vector.broadcast %1104 : vector<1x8xf32> to vector<32x8xf32>
    %1106 = arith.addf %1103, %1105 : vector<32x8xf32>
    %1107 = vector.broadcast %0 : vector<32x1xf32> to vector<32x8xf32>
    %1108 = arith.mulf %1106, %1107 : vector<32x8xf32>
    %c0_375 = arith.constant 0 : index
    %c0_376 = arith.constant 0 : index
    %1109 = vector.load %arg20[%c0_375, %c0_376] : memref<32x32xf32, #tpu.memory_space<vmem>>, vector<32x32xf32>
    tpu.vector_store %arg20[%c0_375, %c0_376], %1101 {strides = array<i32>} : memref<32x32xf32, #tpu.memory_space<vmem>>, vector<32x32xf32>,
    %c0_377 = arith.constant 0 : index
    %c0_378 = arith.constant 0 : index
    %1110 = vector.load %arg21[%c0_377, %c0_378] : memref<32x8xf32, #tpu.memory_space<vmem>>, vector<32x8xf32>
    tpu.vector_store %arg21[%c0_377, %c0_378], %1108 {strides = array<i32>} : memref<32x8xf32, #tpu.memory_space<vmem>>, vector<32x8xf32>,
    return
  }
}

</mosaic_0001>

<llo_original>
// kernel: _lambda_.1
$region0: #{_lambda_.1}
  #allocation0 [shape = 'u32[]', space=smem, size = 0x4, offset = 0x4, fixed_abs, tag = 'smem constant byte address 0x4 - core index']
  #allocation1 [shape = 'u32[72,128]{1,0:T(1,128)}', space=vmem, size = 0x9000, scoped, tag = 'internal scratch']
  %s0 = inlined_call_operand.vmem [shape: s32[32,1], index: 0, kind: input, shape index: {}]
  %s1 = inlined_call_operand.vmem [shape: f32[32,1], index: 1, kind: input, shape index: {}]
  %s2 = inlined_call_operand.vmem [shape: f32[32,32], index: 2, kind: input, shape index: {}]
  %s3 = inlined_call_operand.vmem [shape: f32[50,32], index: 3, kind: input, shape index: {}]
  %s4 = inlined_call_operand.vmem [shape: f32[2,32,96], index: 4, kind: input, shape index: {}]
  %s5 = inlined_call_operand.vmem [shape: f32[2,1,96], index: 5, kind: input, shape index: {}]
  %s6 = inlined_call_operand.hbm [shape: f32[2,32,32], index: 6, kind: input, shape index: {}]
  %s7 = inlined_call_operand.vmem [shape: f32[2,1,32], index: 7, kind: input, shape index: {}]
  %s8 = inlined_call_operand.hbm [shape: f32[2,16,9], index: 8, kind: input, shape index: {}]
  %s9 = inlined_call_operand.hbm [shape: f32[2,9,16], index: 9, kind: input, shape index: {}]
  %s10 = inlined_call_operand.vmem [shape: f32[2,1,32], index: 10, kind: input, shape index: {}, may-alias: {10,16}]
  %s11 = inlined_call_operand.vmem [shape: f32[2,1,32], index: 11, kind: input, shape index: {}, may-alias: {11,17}]
  %s12 = inlined_call_operand.hbm [shape: f32[2,96,64], index: 12, kind: input, shape index: {}]
  %s13 = inlined_call_operand.hbm [shape: f32[2,1,64], index: 13, kind: input, shape index: {}]
  %s14 = inlined_call_operand.hbm [shape: f32[2,192,32], index: 14, kind: input, shape index: {}]
  %s15 = inlined_call_operand.hbm [shape: f32[2,1,32], index: 15, kind: input, shape index: {}]
  %s16 = inlined_call_operand.vmem [shape: f32[2,1,32], index: 16, kind: input, shape index: {}, may-alias: {10,16}]
  %s17 = inlined_call_operand.vmem [shape: f32[2,1,32], index: 17, kind: input, shape index: {}, may-alias: {11,17}]
  %s18 = inlined_call_operand.hbm [shape: f32[32,8], index: 18, kind: input, shape index: {}]
  %s19 = inlined_call_operand.vmem [shape: f32[1,8], index: 19, kind: input, shape index: {}]
  %s20 = inlined_call_operand.hbm [shape: f32[32,32], index: 20, kind: output, shape index: {0}]
  %s21 = inlined_call_operand.vmem [shape: f32[32,8], index: 21, kind: output, shape index: {1}]
  %22 = xla_tuple %s20, %s21
  %s23 = sld [smem:[#allocation0]]
  $region130: #{_lambda_.1} parent=0
    _
  %s25 = ssub.s32 1, %s23
  %s26 = scalar_select 0, %s25, %s23
  $region1: #{_lambda_.1} parent=0
    #allocation2 [shape = 'u8[32768]{0}', space=vmem, size = 0x8000, scoped, tag = 'input window, operand 6, single buffered']
    #allocation3 [shape = 's32[1]{0}', space=sflag, size = 0x4, scoped, tag = 'scoped memory for _lambda_.1']
    #allocation4 [shape = 's32[1]{0}', space=sflag, size = 0x4, scoped, tag = 'scoped memory for _lambda_.1']
    #allocation5 [shape = 'u8[16384]{0}', space=vmem, size = 0x4000, scoped, tag = 'input window, operand 8, single buffered']
    #allocation6 [shape = 's32[1]{0}', space=sflag, size = 0x4, scoped, tag = 'scoped memory for _lambda_.1']
    #allocation7 [shape = 'u8[16384]{0}', space=vmem, size = 0x4000, scoped, tag = 'input window, operand 9, single buffered']
    #allocation8 [shape = 'u8[98304]{0}', space=vmem, size = 0x18000, scoped, tag = 'input window, operand 12, single buffered']
    #allocation9 [shape = 's32[1]{0}', space=sflag, size = 0x4, scoped, tag = 'scoped memory for _lambda_.1']
    #allocation10 [shape = 'u8[1024]{0}', space=vmem, size = 0x400, scoped, tag = 'input window, operand 13, single buffered']
    #allocation11 [shape = 'u8[196608]{0}', space=vmem, size = 0x30000, scoped, tag = 'input window, operand 14, single buffered']
    #allocation12 [shape = 's32[1]{0}', space=sflag, size = 0x4, scoped, tag = 'scoped memory for _lambda_.1']
    #allocation13 [shape = 'u8[1024]{0}', space=vmem, size = 0x400, scoped, tag = 'input window, operand 15, single buffered']
    #allocation14 [shape = 'u8[16384]{0}', space=vmem, size = 0x4000, scoped, tag = 'input window, operand 18, single buffered']
    #allocation15 [shape = 's32[1]{0}', space=sflag, size = 0x4, scoped, tag = 'scoped memory for _lambda_.1']
    #allocation16 [shape = 'u8[16384]{0}', space=vmem, size = 0x4000, scoped, tag = 'output window, operand 0, single buffered']
    %27 = vsyncpa [#allocation3], 0
    %28 = vsyncpa [#allocation6], 0
    %29 = vsyncpa [#allocation9], 0
    %30 = vsyncpa [#allocation12], 0
    %31 = vsyncpa [#allocation15], 0
    %32 = vsyncpa [#allocation4], 0
    // Predicated region
    $region2: #{_lambda_.1} parent=1 // pred_check
      _
    $region3: #{_lambda_.1} parent=1 // pred_check_branch
      %34 = sbr.rel (0) target = $region5
    $region4: #{_lambda_.1} parent=1 // pred_region
      _
    $region5: #{_lambda_.1} parent=1 // pred_fallthru
      _
    // Predicated region
    $region6: #{_lambda_.1} parent=1 // pred_check
      _
    $region7: #{_lambda_.1} parent=1 // pred_check_branch
      %36 = sbr.rel (0) target = $region9
    $region8: #{_lambda_.1} parent=1 // pred_region
      _
    $region9: #{_lambda_.1} parent=1 // pred_fallthru
      _
    // Predicated region
    $region10: #{_lambda_.1} parent=1 // pred_check
      _
    $region11: #{_lambda_.1} parent=1 // pred_check_branch
      %38 = sbr.rel (0) target = $region13
    $region12: #{_lambda_.1} parent=1 // pred_region
      _
    $region13: #{_lambda_.1} parent=1 // pred_fallthru
      _
    // Predicated region
    $region14: #{_lambda_.1} parent=1 // pred_check
      _
    $region15: #{_lambda_.1} parent=1 // pred_check_branch
      %40 = sbr.rel (0) target = $region17
    $region16: #{_lambda_.1} parent=1 // pred_region
      _
    $region17: #{_lambda_.1} parent=1 // pred_fallthru
      _
    // Predicated region
    $region18: #{_lambda_.1} parent=1 // pred_check
      _
    $region19: #{_lambda_.1} parent=1 // pred_check_branch
      %42 = sbr.rel (0) target = $region21
    $region20: #{_lambda_.1} parent=1 // pred_region
      _
    $region21: #{_lambda_.1} parent=1 // pred_fallthru
      _
    // Predicated region
    $region22: #{_lambda_.1} parent=1 // pred_check
      _
    $region23: #{_lambda_.1} parent=1 // pred_check_branch
      %44 = sbr.rel (0) target = $region25
    $region24: #{_lambda_.1} parent=1 // pred_region
      _
    $region25: #{_lambda_.1} parent=1 // pred_fallthru
      _
    // Predicated region
    $region26: #{_lambda_.1} parent=1 // pred_check
      _
    $region27: #{_lambda_.1} parent=1 // pred_check_branch
      %46 = sbr.rel (0) target = $region29
    $region28: #{_lambda_.1} parent=1 // pred_region
      %48 = vsyncadd [#allocation3], 0
      %s49 = sshll.u32 %s6, 4
      %s50 = int_to_ptr.hbm [resolvable:$true] %s49
      %s51 = sshll.u32 [#allocation2], 4
      %s52 = int_to_ptr.vmem [resolvable:$true] %s51
      %57 = dma.hbm_to_vmem [thread:$0]  %s50, 1024, %s52, [#allocation3], 128, 128, 8
    $region29: #{_lambda_.1} parent=1 // pred_fallthru
      _
    // Predicated region
    $region30: #{_lambda_.1} parent=1 // pred_check
      _
    $region31: #{_lambda_.1} parent=1 // pred_check_branch
      %59 = sbr.rel (0) target = $region33
    $region32: #{_lambda_.1} parent=1 // pred_region
      _
    $region33: #{_lambda_.1} parent=1 // pred_fallthru
      _
    // Predicated region
    $region34: #{_lambda_.1} parent=1 // pred_check
      _
    $region35: #{_lambda_.1} parent=1 // pred_check_branch
      %61 = sbr.rel (0) target = $region37
    $region36: #{_lambda_.1} parent=1 // pred_region
      %63 = vsyncadd [#allocation6], 0
      %s64 = sshll.u32 %s8, 4
      %s65 = int_to_ptr.hbm [resolvable:$true] %s64
      %s66 = sshll.u32 [#allocation5], 4
      %s67 = int_to_ptr.vmem [resolvable:$true] %s66
      %72 = dma.hbm_to_vmem [thread:$0]  %s65, 512, %s67, [#allocation6], 128, 128, 8
    $region37: #{_lambda_.1} parent=1 // pred_fallthru
      _
    // Predicated region
    $region38: #{_lambda_.1} parent=1 // pred_check
      _
    $region39: #{_lambda_.1} parent=1 // pred_check_branch
      %74 = sbr.rel (0) target = $region41
    $region40: #{_lambda_.1} parent=1 // pred_region
      %76 = vsyncadd [#allocation6], 0
      %s77 = sshll.u32 %s9, 4
      %s78 = int_to_ptr.hbm [resolvable:$true] %s77
      %s79 = sshll.u32 [#allocation7], 4
      %s80 = int_to_ptr.vmem [resolvable:$true] %s79
      %85 = dma.hbm_to_vmem [thread:$0]  %s78, 512, %s80, [#allocation6], 128, 128, 8
    $region41: #{_lambda_.1} parent=1 // pred_fallthru
      _
    // Predicated region
    $region42: #{_lambda_.1} parent=1 // pred_check
      _
    $region43: #{_lambda_.1} parent=1 // pred_check_branch
      %87 = sbr.rel (0) target = $region45
    $region44: #{_lambda_.1} parent=1 // pred_region
      _
    $region45: #{_lambda_.1} parent=1 // pred_fallthru
      _
    // Predicated region
    $region46: #{_lambda_.1} parent=1 // pred_check
      _
    $region47: #{_lambda_.1} parent=1 // pred_check_branch
      %89 = sbr.rel (0) target = $region49
    $region48: #{_lambda_.1} parent=1 // pred_region
      _
    $region49: #{_lambda_.1} parent=1 // pred_fallthru
      _
    // Predicated region
    $region50: #{_lambda_.1} parent=1 // pred_check
      _
    $region51: #{_lambda_.1} parent=1 // pred_check_branch
      %91 = sbr.rel (0) target = $region53
    $region52: #{_lambda_.1} parent=1 // pred_region
      %93 = vsyncadd [#allocation9], 0
      %s94 = sshll.u32 %s12, 4
      %s95 = int_to_ptr.hbm [resolvable:$true] %s94
      %s96 = sshll.u32 [#allocation8], 4
      %s97 = int_to_ptr.vmem [resolvable:$true] %s96
      %102 = dma.hbm_to_vmem [thread:$0]  %s95, 3072, %s97, [#allocation9], 128, 128, 8
    $region53: #{_lambda_.1} parent=1 // pred_fallthru
      _
    // Predicated region
    $region54: #{_lambda_.1} parent=1 // pred_check
      _
    $region55: #{_lambda_.1} parent=1 // pred_check_branch
      %104 = sbr.rel (0) target = $region57
    $region56: #{_lambda_.1} parent=1 // pred_region
      %106 = vsyncadd [#allocation9], 0
      %s107 = sshll.u32 %s13, 4
      %s108 = int_to_ptr.hbm [resolvable:$true] %s107
      %s109 = sshll.u32 [#allocation10], 4
      %s110 = int_to_ptr.vmem [resolvable:$true] %s109
      %115 = dma.hbm_to_vmem [thread:$0]  %s108, 32, %s110, [#allocation9], 16, 16, 1
    $region57: #{_lambda_.1} parent=1 // pred_fallthru
      _
    // Predicated region
    $region58: #{_lambda_.1} parent=1 // pred_check
      _
    $region59: #{_lambda_.1} parent=1 // pred_check_branch
      %117 = sbr.rel (0) target = $region61
    $region60: #{_lambda_.1} parent=1 // pred_region
      %119 = vsyncadd [#allocation12], 0
      %s120 = sshll.u32 %s14, 4
      %s121 = int_to_ptr.hbm [resolvable:$true] %s120
      %s122 = sshll.u32 [#allocation11], 4
      %s123 = int_to_ptr.vmem [resolvable:$true] %s122
      %128 = dma.hbm_to_vmem [thread:$0]  %s121, 6144, %s123, [#allocation12], 128, 128, 8
    $region61: #{_lambda_.1} parent=1 // pred_fallthru
      _
    // Predicated region
    $region62: #{_lambda_.1} parent=1 // pred_check
      _
    $region63: #{_lambda_.1} parent=1 // pred_check_branch
      %130 = sbr.rel (0) target = $region65
    $region64: #{_lambda_.1} parent=1 // pred_region
      %132 = vsyncadd [#allocation12], 0
      %s133 = sshll.u32 %s15, 4
      %s134 = int_to_ptr.hbm [resolvable:$true] %s133
      %s135 = sshll.u32 [#allocation13], 4
      %s136 = int_to_ptr.vmem [resolvable:$true] %s135
      %141 = dma.hbm_to_vmem [thread:$0]  %s134, 32, %s136, [#allocation12], 16, 16, 1
    $region65: #{_lambda_.1} parent=1 // pred_fallthru
      _
    // Predicated region
    $region66: #{_lambda_.1} parent=1 // pred_check
      _
    $region67: #{_lambda_.1} parent=1 // pred_check_branch
      %143 = sbr.rel (0) target = $region69
    $region68: #{_lambda_.1} parent=1 // pred_region
      _
    $region69: #{_lambda_.1} parent=1 // pred_fallthru
      _
    // Predicated region
    $region70: #{_lambda_.1} parent=1 // pred_check
      _
    $region71: #{_lambda_.1} parent=1 // pred_check_branch
      %145 = sbr.rel (0) target = $region73
    $region72: #{_lambda_.1} parent=1 // pred_region
      _
    $region73: #{_lambda_.1} parent=1 // pred_fallthru
      _
    // Predicated region
    $region74: #{_lambda_.1} parent=1 // pred_check
      _
    $region75: #{_lambda_.1} parent=1 // pred_check_branch
      %147 = sbr.rel (0) target = $region77
    $region76: #{_lambda_.1} parent=1 // pred_region
      %149 = vsyncadd [#allocation15], 0
      %s150 = sshll.u32 %s18, 4
      %s151 = int_to_ptr.hbm [resolvable:$true] %s150
      %s152 = sshll.u32 [#allocation14], 4
      %s153 = int_to_ptr.vmem [resolvable:$true] %s152
      %158 = dma.hbm_to_vmem [thread:$0]  %s151, 512, %s153, [#allocation15], 128, 128, 8
    $region77: #{_lambda_.1} parent=1 // pred_fallthru
      _
    // Predicated region
    $region78: #{_lambda_.1} parent=1 // pred_check
      _
    $region79: #{_lambda_.1} parent=1 // pred_check_branch
      %160 = sbr.rel (0) target = $region81
    $region80: #{_lambda_.1} parent=1 // pred_region
      _
    $region81: #{_lambda_.1} parent=1 // pred_fallthru
      _
    // Predicated region
    $region82: #{_lambda_.1} parent=1 // pred_check
      _
    $region83: #{_lambda_.1} parent=1 // pred_check_branch
      %162 = sbr.rel (0) target = $region85
    $region84: #{_lambda_.1} parent=1 // pred_region
      %164 = dma.done [#allocation3], 1024
    $region85: #{_lambda_.1} parent=1 // pred_fallthru
      _
    // Predicated region
    $region86: #{_lambda_.1} parent=1 // pred_check
      _
    $region87: #{_lambda_.1} parent=1 // pred_check_branch
      %166 = sbr.rel (0) target = $region89
    $region88: #{_lambda_.1} parent=1 // pred_region
      %168 = dma.done [#allocation6], 512
    $region89: #{_lambda_.1} parent=1 // pred_fallthru
      _
    // Predicated region
    $region90: #{_lambda_.1} parent=1 // pred_check
      _
    $region91: #{_lambda_.1} parent=1 // pred_check_branch
      %170 = sbr.rel (0) target = $region93
    $region92: #{_lambda_.1} parent=1 // pred_region
      %172 = dma.done [#allocation6], 512
    $region93: #{_lambda_.1} parent=1 // pred_fallthru
      _
    // Predicated region
    $region94: #{_lambda_.1} parent=1 // pred_check
      _
    $region95: #{_lambda_.1} parent=1 // pred_check_branch
      %174 = sbr.rel (0) target = $region97
    $region96: #{_lambda_.1} parent=1 // pred_region
      %176 = dma.done [#allocation9], 3072
    $region97: #{_lambda_.1} parent=1 // pred_fallthru
      _
    // Predicated region
    $region98: #{_lambda_.1} parent=1 // pred_check
      _
    $region99: #{_lambda_.1} parent=1 // pred_check_branch
      %178 = sbr.rel (0) target = $region101
    $region100: #{_lambda_.1} parent=1 // pred_region
      %180 = dma.done [#allocation9], 32
    $region101: #{_lambda_.1} parent=1 // pred_fallthru
      _
    // Predicated region
    $region102: #{_lambda_.1} parent=1 // pred_check
      _
    $region103: #{_lambda_.1} parent=1 // pred_check_branch
      %182 = sbr.rel (0) target = $region105
    $region104: #{_lambda_.1} parent=1 // pred_region
      %184 = dma.done [#allocation12], 6144
    $region105: #{_lambda_.1} parent=1 // pred_fallthru
      _
    // Predicated region
    $region106: #{_lambda_.1} parent=1 // pred_check
      _
    $region107: #{_lambda_.1} parent=1 // pred_check_branch
      %186 = sbr.rel (0) target = $region109
    $region108: #{_lambda_.1} parent=1 // pred_region
      %188 = dma.done [#allocation12], 32
    $region109: #{_lambda_.1} parent=1 // pred_fallthru
      _
    // Predicated region
    $region110: #{_lambda_.1} parent=1 // pred_check
      _
    $region111: #{_lambda_.1} parent=1 // pred_check_branch
      %190 = sbr.rel (0) target = $region113
    $region112: #{_lambda_.1} parent=1 // pred_region
      %192 = dma.done [#allocation15], 512
    $region113: #{_lambda_.1} parent=1 // pred_fallthru
      _
    %v193 = vld [vmem:[%s1] sm:$0xff]
    %v194 = vld [vmem:[%s1 + $0x8] sm:$0xff]
    %v195 = vld [vmem:[%s1 + $0x10] sm:$0xff]
    %v196 = vld [vmem:[%s1 + $0x18] sm:$0xff]
    %v197 = vld [vmem:[%s2] sm:$0xff]
    %v198 = vld [vmem:[%s2 + $0x8] sm:$0xff]
    %v199 = vld [vmem:[%s2 + $0x10] sm:$0xff]
    %v200 = vld [vmem:[%s2 + $0x18] sm:$0xff]
    %v201 = vld [vmem:[%s0] sm:$0xff]
    %v202 = vld [vmem:[%s0 + $0x8] sm:$0xff]
    %v203 = vld [vmem:[%s0 + $0x10] sm:$0xff]
    %v204 = vld [vmem:[%s0 + $0x18] sm:$0xff]
    %v205 = vlaneseq
    %v206 = vand.u32 %v205, 127
    %207 = vset.pattern.permute.xlu0 0
    %208 = vperm.xlu0 %207, %v201
    %v209 = vpop.permute.xlu0 %208
    %210 = vset.pattern.permute.xlu0 0
    %211 = vperm.xlu0 %210, %v202
    %v212 = vpop.permute.xlu0 %211
    %213 = vset.pattern.permute.xlu0 0
    %214 = vperm.xlu0 %213, %v203
    %v215 = vpop.permute.xlu0 %214
    %216 = vset.pattern.permute.xlu0 0
    %217 = vperm.xlu0 %216, %v204
    %v218 = vpop.permute.xlu0 %217
    %vm219 = vcmp.eq.s32.totalorder %v209, %v206
    %vm220 = vcmp.eq.s32.totalorder %v212, %v206
    %vm221 = vcmp.eq.s32.totalorder %v215, %v206
    %vm222 = vcmp.eq.s32.totalorder %v218, %v206
    %v223 = vsel %vm219, 1, 0
    %v224 = vsel %vm220, 1, 0
    %v225 = vsel %vm221, 1, 0
    %v226 = vsel %vm222, 1, 0
    %v227 = vcvt.s32.f32 %v223
    %v228 = vcvt.s32.f32 %v224
    %v229 = vcvt.s32.f32 %v225
    %v230 = vcvt.s32.f32 %v226
    %v231 = vld [vmem:[%s3] sm:$0xff]
    %v232 = vld [vmem:[%s3 + $0x8] sm:$0xff]
    %v233 = vld [vmem:[%s3 + $0x10] sm:$0xff]
    %v234 = vld [vmem:[%s3 + $0x18] sm:$0xff]
    %v235 = vld [vmem:[%s3 + $0x20] sm:$0xff]
    %v236 = vld [vmem:[%s3 + $0x28] sm:$0xff]
    %v237 = vld [vmem:[%s3 + $0x30] sm:$0x3]
    %vm238 = vcmask 408576
    %v240 = vsel %vm238, %v227, 0
    %v243 = vsel %vm238, %v228, 0
    %v246 = vsel %vm238, %v229, 0
    %v249 = vsel %vm238, %v230, 0
    %vm251 = vcmask 1041408
    %v253 = vsel %vm251, %v237, 0
    %255 = vmatpush.msra.mxu0 0.0
    %256 = vmatpush.msra.mxu0 0.0
    %257 = vmatpush.msra.mxu0 0.0
    %258 = vmatpush.msra.mxu0 0.0
    %259 = vmatpush.msra.mxu0 0.0
    %260 = vmatpush.msra.mxu0 0.0
    %261 = vmatpush.msra.mxu0 0.0
    %262 = vmatpush.msra.mxu0 0.0
    %263 = vmatpush.msra.mxu0 0.0
    %264 = vmatpush.msra.mxu0 %v253
    %265 = vmatpush.msra.mxu0 %v236
    %266 = vmatpush.msra.mxu0 %v235
    %267 = vmatpush.msra.mxu0 %v234
    %268 = vmatpush.msra.mxu0 %v233
    %269 = vmatpush.msra.mxu0 %v232
    %270 = vmatpush.msra.mxu0 %v231
    %271 = vmatmul.f32.gmra.mxu0 %v240
    %v272 = vpop.f32.mrf.mxu0
    %v273 = vadd.f32 0.0, %v272
    %274 = vmatmul.f32.gmra.mxu0 %v243
    %v275 = vpop.f32.mrf.mxu0
    %v276 = vadd.f32 0.0, %v275
    %277 = vmatmul.f32.gmra.mxu0 %v246
    %v278 = vpop.f32.mrf.mxu0
    %v279 = vadd.f32 0.0, %v278
    %280 = vmatmul.f32.gmra.mxu0 %v249
    %v281 = vpop.f32.mrf.mxu0
    %v282 = vadd.f32 0.0, %v281
    %283 = vdwg.mxu0
    %v284 = vmul.f32 %v273, 5.656854
    %v285 = vmul.f32 %v276, 5.656854
    %v286 = vmul.f32 %v279, 5.656854
    %v287 = vmul.f32 %v282, 5.656854
    %289 = vset.pattern.permute.xlu0 0
    %290 = vperm.xlu0 %289, %v193
    %v291 = vpop.permute.xlu0 %290
    %294 = vset.pattern.permute.xlu0 0
    %295 = vperm.xlu0 %294, %v194
    %v296 = vpop.permute.xlu0 %295
    %299 = vset.pattern.permute.xlu0 0
    %300 = vperm.xlu0 %299, %v195
    %v301 = vpop.permute.xlu0 %300
    %304 = vset.pattern.permute.xlu0 0
    %305 = vperm.xlu0 %304, %v196
    %v306 = vpop.permute.xlu0 %305
    %v308 = vmul.f32 %v284, %v291
    %v309 = vmul.f32 %v285, %v296
    %v310 = vmul.f32 %v286, %v301
    %v311 = vmul.f32 %v287, %v306
    %v312 = vlaneseq
    %v313 = vshrl.u32 %v312, 7
    %v314 = vadd.s32 %v313, 8
    %v315 = vadd.s32 %v313, 16
    %v316 = vadd.s32 %v313, 24
    %v317 = vsub.s32 %v206, %v313
    %v318 = vsub.s32 %v206, %v314
    %v319 = vsub.s32 %v206, %v315
    %v320 = vsub.s32 %v206, %v316
    %v321 = vand.u32 %v313, 15
    %v322 = vand.u32 %v314, 15
    %v323 = vand.u32 %v315, 15
    %v324 = vand.u32 %v316, 15
    %v325 = vld [vmem:[%s4] sm:$0xff]
    %v326 = vld [vmem:[%s4 + $0x8] sm:$0xff]
    %v327 = vld [vmem:[%s4 + $0x10] sm:$0xff]
    %v328 = vld [vmem:[%s4 + $0x18] sm:$0xff]
    %v329 = vld [vmem:[%s5] sm:$0x1]
    %v331 = vperm.slane %v329, 0
    %vm333 = vcmask 261120
    %v335 = vsel %vm333, %v308, 0
    %v338 = vsel %vm333, %v309, 0
    %v341 = vsel %vm333, %v310, 0
    %v344 = vsel %vm333, %v311, 0
    %346 = vmatpush.msra.mxu0 0.0
    %347 = vmatpush.msra.mxu0 0.0
    %348 = vmatpush.msra.mxu0 0.0
    %349 = vmatpush.msra.mxu0 0.0
    %350 = vmatpush.msra.mxu0 0.0
    %351 = vmatpush.msra.mxu0 0.0
    %352 = vmatpush.msra.mxu0 0.0
    %353 = vmatpush.msra.mxu0 0.0
    %354 = vmatpush.msra.mxu0 0.0
    %355 = vmatpush.msra.mxu0 0.0
    %356 = vmatpush.msra.mxu0 0.0
    %357 = vmatpush.msra.mxu0 0.0
    %358 = vmatpush.msra.mxu0 %v328
    %359 = vmatpush.msra.mxu0 %v327
    %360 = vmatpush.msra.mxu0 %v326
    %361 = vmatpush.msra.mxu0 %v325
    %362 = vmatmul.f32.gmra.mxu0 %v335
    %v363 = vpop.f32.mrf.mxu0
    %v364 = vadd.f32 %v331, %v363
    %365 = vmatmul.f32.gmra.mxu0 %v338
    %v366 = vpop.f32.mrf.mxu0
    %v367 = vadd.f32 %v331, %v366
    %368 = vmatmul.f32.gmra.mxu0 %v341
    %v369 = vpop.f32.mrf.mxu0
    %v370 = vadd.f32 %v331, %v369
    %371 = vmatmul.f32.gmra.mxu0 %v344
    %v372 = vpop.f32.mrf.mxu0
    %v373 = vadd.f32 %v331, %v372
    %374 = vdwg.mxu0
    %v375 = vld [vmem:[#allocation5] sm:$0xff]
    %v376 = vld [vmem:[#allocation5 + $0x8] sm:$0xff]
    %v377 = vld [vmem:[#allocation7] sm:$0xff]
    %v378 = vld [vmem:[#allocation7 + $0x8] sm:$0x1]
    %v379 = vld [vmem:[#allocation2] sm:$0xff]
    %v380 = vld [vmem:[#allocation2 + $0x8] sm:$0xff]
    %v381 = vld [vmem:[#allocation2 + $0x10] sm:$0xff]
    %v382 = vld [vmem:[#allocation2 + $0x18] sm:$0xff]
    %vm383 = vcmask 130048
    %v385 = vsel %vm383, %v364, 0
    %v388 = vsel %vm383, %v367, 0
    %v391 = vsel %vm383, %v370, 0
    %v394 = vsel %vm383, %v373, 0
    %396 = vmatpush.msra.mxu0 0.0
    %397 = vmatpush.msra.mxu0 0.0
    %398 = vmatpush.msra.mxu0 0.0
    %399 = vmatpush.msra.mxu0 0.0
    %400 = vmatpush.msra.mxu0 0.0
    %401 = vmatpush.msra.mxu0 0.0
    %402 = vmatpush.msra.mxu0 0.0
    %403 = vmatpush.msra.mxu0 0.0
    %404 = vmatpush.msra.mxu0 0.0
    %405 = vmatpush.msra.mxu0 0.0
    %406 = vmatpush.msra.mxu0 0.0
    %407 = vmatpush.msra.mxu0 0.0
    %408 = vmatpush.msra.mxu0 0.0
    %409 = vmatpush.msra.mxu0 0.0
    %410 = vmatpush.msra.mxu0 %v376
    %411 = vmatpush.msra.mxu0 %v375
    %412 = vmatmul.f32.gmra.mxu0 %v385
    %v413 = vpop.f32.mrf.mxu0
    %v414 = vadd.f32 0.0, %v413
    %415 = vmatmul.f32.gmra.mxu0 %v388
    %v416 = vpop.f32.mrf.mxu0
    %v417 = vadd.f32 0.0, %v416
    %418 = vmatmul.f32.gmra.mxu0 %v391
    %v419 = vpop.f32.mrf.mxu0
    %v420 = vadd.f32 0.0, %v419
    %421 = vmatmul.f32.gmra.mxu0 %v394
    %v422 = vpop.f32.mrf.mxu0
    %v423 = vadd.f32 0.0, %v422
    %424 = vdwg.mxu0
    %vm425 = vcmp.eq.s32.totalorder %v317, 4294967292
    %vm426 = vcmp.eq.s32.totalorder %v318, 4294967292
    %vm427 = vcmp.eq.s32.totalorder %v319, 4294967292
    %vm428 = vcmp.eq.s32.totalorder %v320, 4294967292
    %430 = vset.pattern.permute.xlu0 0
    %431 = vperm.xlu0 %430, %v414
    %v432 = vpop.permute.xlu0 %431
    %435 = vset.pattern.permute.xlu0 0
    %436 = vperm.xlu0 %435, %v417
    %v437 = vpop.permute.xlu0 %436
    %440 = vset.pattern.permute.xlu0 0
    %441 = vperm.xlu0 %440, %v420
    %v442 = vpop.permute.xlu0 %441
    %445 = vset.pattern.permute.xlu0 0
    %446 = vperm.xlu0 %445, %v423
    %v447 = vpop.permute.xlu0 %446
    %v449 = vsel %vm425, %v432, 0.0
    %v450 = vsel %vm426, %v437, 0.0
    %v451 = vsel %vm427, %v442, 0.0
    %v452 = vsel %vm428, %v447, 0.0
    %453 = vrot.lane.b32.xlu0 %v364, 96
    %v454 = vpop.permute.xlu0 %453
    %455 = vrot.lane.b32.xlu0 %v367, 96
    %v456 = vpop.permute.xlu0 %455
    %457 = vrot.lane.b32.xlu0 %v370, 96
    %v458 = vpop.permute.xlu0 %457
    %459 = vrot.lane.b32.xlu0 %v373, 96
    %v460 = vpop.permute.xlu0 %459
    %v461 = vsel %vm383, %v454, 0
    %v463 = vsel %vm383, %v456, 0
    %v465 = vsel %vm383, %v458, 0
    %v467 = vsel %vm383, %v460, 0
    %469 = vmatpush.xpose.msra.mxu0 0.0
    %470 = vmatpush.xpose.msra.mxu0 0.0
    %471 = vmatpush.xpose.msra.mxu0 0.0
    %472 = vmatpush.xpose.msra.mxu0 0.0
    %473 = vmatpush.xpose.msra.mxu0 0.0
    %474 = vmatpush.xpose.msra.mxu0 0.0
    %475 = vmatpush.xpose.msra.mxu0 0.0
    %476 = vmatpush.xpose.msra.mxu0 0.0
    %477 = vmatpush.xpose.msra.mxu0 0.0
    %478 = vmatpush.xpose.msra.mxu0 0.0
    %479 = vmatpush.xpose.msra.mxu0 0.0
    %480 = vmatpush.xpose.msra.mxu0 0.0
    %481 = vmatpush.xpose.msra.mxu0 %v467
    %482 = vmatpush.xpose.msra.mxu0 %v465
    %483 = vmatpush.xpose.msra.mxu0 %v463
    %484 = vmatpush.xpose.msra.mxu0 %v461
    %485 = vmatmul.f32.gmra.mxu0 %v385
    %v486 = vpop.f32.mrf.mxu0
    %v487 = vadd.f32 %v449, %v486
    %488 = vmatmul.f32.gmra.mxu0 %v388
    %v489 = vpop.f32.mrf.mxu0
    %v490 = vadd.f32 %v450, %v489
    %491 = vmatmul.f32.gmra.mxu0 %v391
    %v492 = vpop.f32.mrf.mxu0
    %v493 = vadd.f32 %v451, %v492
    %494 = vmatmul.f32.gmra.mxu0 %v394
    %v495 = vpop.f32.mrf.mxu0
    %v496 = vadd.f32 %v452, %v495
    %497 = vdwg.mxu0
    %vm498 = vcmp.eq.s32.totalorder %v317, 4294967293
    %vm499 = vcmp.eq.s32.totalorder %v318, 4294967293
    %vm500 = vcmp.eq.s32.totalorder %v319, 4294967293
    %vm501 = vcmp.eq.s32.totalorder %v320, 4294967293
    %502 = vset.pattern.permute.xlu0 1
    %503 = vperm.xlu0 %502, %v414
    %v504 = vpop.permute.xlu0 %503
    %506 = vset.pattern.permute.xlu0 1
    %507 = vperm.xlu0 %506, %v417
    %v508 = vpop.permute.xlu0 %507
    %510 = vset.pattern.permute.xlu0 1
    %511 = vperm.xlu0 %510, %v420
    %v512 = vpop.permute.xlu0 %511
    %514 = vset.pattern.permute.xlu0 1
    %515 = vperm.xlu0 %514, %v423
    %v516 = vpop.permute.xlu0 %515
    %v518 = vsel %vm498, %v504, 0.0
    %v519 = vsel %vm499, %v508, 0.0
    %v520 = vsel %vm500, %v512, 0.0
    %v521 = vsel %vm501, %v516, 0.0
    %v522 = vadd.f32 %v487, %v518
    %v523 = vadd.f32 %v490, %v519
    %v524 = vadd.f32 %v493, %v520
    %v525 = vadd.f32 %v496, %v521
    %vm526 = vcmp.eq.s32.totalorder %v317, 4294967294
    %vm527 = vcmp.eq.s32.totalorder %v318, 4294967294
    %vm528 = vcmp.eq.s32.totalorder %v319, 4294967294
    %vm529 = vcmp.eq.s32.totalorder %v320, 4294967294
    %530 = vset.pattern.permute.xlu0 2
    %531 = vperm.xlu0 %530, %v414
    %v532 = vpop.permute.xlu0 %531
    %534 = vset.pattern.permute.xlu0 2
    %535 = vperm.xlu0 %534, %v417
    %v536 = vpop.permute.xlu0 %535
    %538 = vset.pattern.permute.xlu0 2
    %539 = vperm.xlu0 %538, %v420
    %v540 = vpop.permute.xlu0 %539
    %542 = vset.pattern.permute.xlu0 2
    %543 = vperm.xlu0 %542, %v423
    %v544 = vpop.permute.xlu0 %543
    %v546 = vsel %vm526, %v532, 0.0
    %v547 = vsel %vm527, %v536, 0.0
    %v548 = vsel %vm528, %v540, 0.0
    %v549 = vsel %vm529, %v544, 0.0
    %v550 = vadd.f32 %v522, %v546
    %v551 = vadd.f32 %v523, %v547
    %v552 = vadd.f32 %v524, %v548
    %v553 = vadd.f32 %v525, %v549
    %vm554 = vcmp.eq.s32.totalorder %v317, 4294967295
    %vm555 = vcmp.eq.s32.totalorder %v318, 4294967295
    %vm556 = vcmp.eq.s32.totalorder %v319, 4294967295
    %vm557 = vcmp.eq.s32.totalorder %v320, 4294967295
    %558 = vset.pattern.permute.xlu0 3
    %559 = vperm.xlu0 %558, %v414
    %v560 = vpop.permute.xlu0 %559
    %562 = vset.pattern.permute.xlu0 3
    %563 = vperm.xlu0 %562, %v417
    %v564 = vpop.permute.xlu0 %563
    %566 = vset.pattern.permute.xlu0 3
    %567 = vperm.xlu0 %566, %v420
    %v568 = vpop.permute.xlu0 %567
    %570 = vset.pattern.permute.xlu0 3
    %571 = vperm.xlu0 %570, %v423
    %v572 = vpop.permute.xlu0 %571
    %v574 = vsel %vm554, %v560, 0.0
    %v575 = vsel %vm555, %v564, 0.0
    %v576 = vsel %vm556, %v568, 0.0
    %v577 = vsel %vm557, %v572, 0.0
    %v578 = vadd.f32 %v550, %v574
    %v579 = vadd.f32 %v551, %v575
    %v580 = vadd.f32 %v552, %v576
    %v581 = vadd.f32 %v553, %v577
    %vm582 = vcmp.eq.s32.totalorder %v317, 0
    %vm583 = vcmp.eq.s32.totalorder %v318, 0
    %vm584 = vcmp.eq.s32.totalorder %v319, 0
    %vm585 = vcmp.eq.s32.totalorder %v320, 0
    %586 = vset.pattern.permute.xlu0 4
    %587 = vperm.xlu0 %586, %v414
    %v588 = vpop.permute.xlu0 %587
    %590 = vset.pattern.permute.xlu0 4
    %591 = vperm.xlu0 %590, %v417
    %v592 = vpop.permute.xlu0 %591
    %594 = vset.pattern.permute.xlu0 4
    %595 = vperm.xlu0 %594, %v420
    %v596 = vpop.permute.xlu0 %595
    %598 = vset.pattern.permute.xlu0 4
    %599 = vperm.xlu0 %598, %v423
    %v600 = vpop.permute.xlu0 %599
    %v602 = vsel %vm582, %v588, 0.0
    %v603 = vsel %vm583, %v592, 0.0
    %v604 = vsel %vm584, %v596, 0.0
    %v605 = vsel %vm585, %v600, 0.0
    %v606 = vadd.f32 %v578, %v602
    %v607 = vadd.f32 %v579, %v603
    %v608 = vadd.f32 %v580, %v604
    %v609 = vadd.f32 %v581, %v605
    %vm610 = vcmp.eq.s32.totalorder %v317, 1
    %vm611 = vcmp.eq.s32.totalorder %v318, 1
    %vm612 = vcmp.eq.s32.totalorder %v319, 1
    %vm613 = vcmp.eq.s32.totalorder %v320, 1
    %614 = vset.pattern.permute.xlu0 5
    %615 = vperm.xlu0 %614, %v414
    %v616 = vpop.permute.xlu0 %615
    %618 = vset.pattern.permute.xlu0 5
    %619 = vperm.xlu0 %618, %v417
    %v620 = vpop.permute.xlu0 %619
    %622 = vset.pattern.permute.xlu0 5
    %623 = vperm.xlu0 %622, %v420
    %v624 = vpop.permute.xlu0 %623
    %626 = vset.pattern.permute.xlu0 5
    %627 = vperm.xlu0 %626, %v423
    %v628 = vpop.permute.xlu0 %627
    %v630 = vsel %vm610, %v616, 0.0
    %v631 = vsel %vm611, %v620, 0.0
    %v632 = vsel %vm612, %v624, 0.0
    %v633 = vsel %vm613, %v628, 0.0
    %v634 = vadd.f32 %v606, %v630
    %v635 = vadd.f32 %v607, %v631
    %v636 = vadd.f32 %v608, %v632
    %v637 = vadd.f32 %v609, %v633
    %vm638 = vcmp.eq.s32.totalorder %v317, 2
    %vm639 = vcmp.eq.s32.totalorder %v318, 2
    %vm640 = vcmp.eq.s32.totalorder %v319, 2
    %vm641 = vcmp.eq.s32.totalorder %v320, 2
    %642 = vset.pattern.permute.xlu0 6
    %643 = vperm.xlu0 %642, %v414
    %v644 = vpop.permute.xlu0 %643
    %646 = vset.pattern.permute.xlu0 6
    %647 = vperm.xlu0 %646, %v417
    %v648 = vpop.permute.xlu0 %647
    %650 = vset.pattern.permute.xlu0 6
    %651 = vperm.xlu0 %650, %v420
    %v652 = vpop.permute.xlu0 %651
    %654 = vset.pattern.permute.xlu0 6
    %655 = vperm.xlu0 %654, %v423
    %v656 = vpop.permute.xlu0 %655
    %v658 = vsel %vm638, %v644, 0.0
    %v659 = vsel %vm639, %v648, 0.0
    %v660 = vsel %vm640, %v652, 0.0
    %v661 = vsel %vm641, %v656, 0.0
    %v662 = vadd.f32 %v634, %v658
    %v663 = vadd.f32 %v635, %v659
    %v664 = vadd.f32 %v636, %v660
    %v665 = vadd.f32 %v637, %v661
    %vm666 = vcmp.eq.s32.totalorder %v317, 3
    %vm667 = vcmp.eq.s32.totalorder %v318, 3
    %vm668 = vcmp.eq.s32.totalorder %v319, 3
    %vm669 = vcmp.eq.s32.totalorder %v320, 3
    %670 = vset.pattern.permute.xlu0 7
    %671 = vperm.xlu0 %670, %v414
    %v672 = vpop.permute.xlu0 %671
    %674 = vset.pattern.permute.xlu0 7
    %675 = vperm.xlu0 %674, %v417
    %v676 = vpop.permute.xlu0 %675
    %678 = vset.pattern.permute.xlu0 7
    %679 = vperm.xlu0 %678, %v420
    %v680 = vpop.permute.xlu0 %679
    %682 = vset.pattern.permute.xlu0 7
    %683 = vperm.xlu0 %682, %v423
    %v684 = vpop.permute.xlu0 %683
    %v686 = vsel %vm666, %v672, 0.0
    %v687 = vsel %vm667, %v676, 0.0
    %v688 = vsel %vm668, %v680, 0.0
    %v689 = vsel %vm669, %v684, 0.0
    %v690 = vadd.f32 %v662, %v686
    %v691 = vadd.f32 %v663, %v687
    %v692 = vadd.f32 %v664, %v688
    %v693 = vadd.f32 %v665, %v689
    %vm694 = vcmp.eq.s32.totalorder %v317, 4
    %vm695 = vcmp.eq.s32.totalorder %v318, 4
    %vm696 = vcmp.eq.s32.totalorder %v319, 4
    %vm697 = vcmp.eq.s32.totalorder %v320, 4
    %698 = vset.pattern.permute.xlu0 8
    %699 = vperm.xlu0 %698, %v414
    %v700 = vpop.permute.xlu0 %699
    %702 = vset.pattern.permute.xlu0 8
    %703 = vperm.xlu0 %702, %v417
    %v704 = vpop.permute.xlu0 %703
    %706 = vset.pattern.permute.xlu0 8
    %707 = vperm.xlu0 %706, %v420
    %v708 = vpop.permute.xlu0 %707
    %710 = vset.pattern.permute.xlu0 8
    %711 = vperm.xlu0 %710, %v423
    %v712 = vpop.permute.xlu0 %711
    %v714 = vsel %vm694, %v700, 0.0
    %v715 = vsel %vm695, %v704, 0.0
    %v716 = vsel %vm696, %v708, 0.0
    %v717 = vsel %vm697, %v712, 0.0
    %v718 = vadd.f32 %v690, %v714
    %v719 = vadd.f32 %v691, %v715
    %v720 = vadd.f32 %v692, %v716
    %v721 = vadd.f32 %v693, %v717
    %vm722 = vcmp.gt.f32.partialorder %v197, 0.0
    %vm723 = vcmp.gt.f32.partialorder %v198, 0.0
    %vm724 = vcmp.gt.f32.partialorder %v199, 0.0
    %vm725 = vcmp.gt.f32.partialorder %v200, 0.0
    %v726 = vsel %vm722, %v718, -10000.0
    %v727 = vsel %vm723, %v719, -10000.0
    %v728 = vsel %vm724, %v720, -10000.0
    %v729 = vsel %vm725, %v721, -10000.0
    %v730 = vsel %vm333, %v726, -inf
    %731 = vmax.xlane.f32.xlu0 %v730
    %v732 = vpop.xlane.xlu0 %731
    %v733 = vsel %vm333, %v727, -inf
    %734 = vmax.xlane.f32.xlu0 %v733
    %v735 = vpop.xlane.xlu0 %734
    %v736 = vsel %vm333, %v728, -inf
    %737 = vmax.xlane.f32.xlu0 %v736
    %v738 = vpop.xlane.xlu0 %737
    %v739 = vsel %vm333, %v729, -inf
    %740 = vmax.xlane.f32.xlu0 %v739
    %v741 = vpop.xlane.xlu0 %740
    %v742 = vsub.f32 %v726, %v732
    %v743 = vsub.f32 %v727, %v735
    %v744 = vsub.f32 %v728, %v738
    %v745 = vsub.f32 %v729, %v741
    %v746 = vmul.f32 %v742, 1.442695
    %v747 = vpow.pop %v746
    %v748 = vmul.f32 %v743, 1.442695
    %v749 = vpow.pop %v748
    %v750 = vmul.f32 %v744, 1.442695
    %v751 = vpow.pop %v750
    %v752 = vmul.f32 %v745, 1.442695
    %v753 = vpow.pop %v752
    %v754 = vsel %vm333, %v747, 0.0
    %755 = vadd.xlane.f32.xlu0 %v754
    %v756 = vpop.xlane.xlu0 %755
    %v757 = vsel %vm333, %v749, 0.0
    %758 = vadd.xlane.f32.xlu0 %v757
    %v759 = vpop.xlane.xlu0 %758
    %v760 = vsel %vm333, %v751, 0.0
    %761 = vadd.xlane.f32.xlu0 %v760
    %v762 = vpop.xlane.xlu0 %761
    %v763 = vsel %vm333, %v753, 0.0
    %764 = vadd.xlane.f32.xlu0 %v763
    %v765 = vpop.xlane.xlu0 %764
    %v766 = vrcp.pop %v756
    %v767 = vrcp.pop %v759
    %v768 = vrcp.pop %v762
    %v769 = vrcp.pop %v765
    %v770 = vmul.f32 %v747, %v766
    %v771 = vmul.f32 %v749, %v767
    %v772 = vmul.f32 %v751, %v768
    %v773 = vmul.f32 %v753, %v769
    %v774 = vsel %vm425, %v770, 0.0
    %v775 = vsel %vm426, %v771, 0.0
    %v776 = vsel %vm427, %v772, 0.0
    %v777 = vsel %vm428, %v773, 0.0
    %v778 = vsel %vm333, %v774, 0.0
    %779 = vadd.xlane.f32.xlu0 %v778
    %v780 = vpop.xlane.xlu0 %779
    %v781 = vsel %vm333, %v775, 0.0
    %782 = vadd.xlane.f32.xlu0 %v781
    %v783 = vpop.xlane.xlu0 %782
    %v784 = vsel %vm333, %v776, 0.0
    %785 = vadd.xlane.f32.xlu0 %v784
    %v786 = vpop.xlane.xlu0 %785
    %v787 = vsel %vm333, %v777, 0.0
    %788 = vadd.xlane.f32.xlu0 %v787
    %v789 = vpop.xlane.xlu0 %788
    %v790 = vperm.slane %v377, 0
    %v791 = vmul.f32 %v780, %v790
    %v792 = vmul.f32 %v783, %v790
    %v793 = vmul.f32 %v786, %v790
    %v794 = vmul.f32 %v789, %v790
    %795 = vrot.lane.b32.xlu0 %v364, 64
    %v796 = vpop.permute.xlu0 %795
    %797 = vrot.lane.b32.xlu0 %v367, 64
    %v798 = vpop.permute.xlu0 %797
    %799 = vrot.lane.b32.xlu0 %v370, 64
    %v800 = vpop.permute.xlu0 %799
    %801 = vrot.lane.b32.xlu0 %v373, 64
    %v802 = vpop.permute.xlu0 %801
    %v808 = vsel %vm333, %v770, 0
    %v811 = vsel %vm333, %v771, 0
    %v814 = vsel %vm333, %v772, 0
    %v817 = vsel %vm333, %v773, 0
    %819 = vmatpush.msra.mxu0 0.0
    %820 = vmatpush.msra.mxu0 0.0
    %821 = vmatpush.msra.mxu0 0.0
    %822 = vmatpush.msra.mxu0 0.0
    %823 = vmatpush.msra.mxu0 0.0
    %824 = vmatpush.msra.mxu0 0.0
    %825 = vmatpush.msra.mxu0 0.0
    %826 = vmatpush.msra.mxu0 0.0
    %827 = vmatpush.msra.mxu0 0.0
    %828 = vmatpush.msra.mxu0 0.0
    %829 = vmatpush.msra.mxu0 0.0
    %830 = vmatpush.msra.mxu0 0.0
    %831 = vmatpush.msra.mxu0 %v802
    %832 = vmatpush.msra.mxu0 %v800
    %833 = vmatpush.msra.mxu0 %v798
    %834 = vmatpush.msra.mxu0 %v796
    %835 = vmatmul.f32.gmra.mxu0 %v808
    %v836 = vpop.f32.mrf.mxu0
    %v837 = vadd.f32 %v791, %v836
    %838 = vmatmul.f32.gmra.mxu0 %v811
    %v839 = vpop.f32.mrf.mxu0
    %v840 = vadd.f32 %v792, %v839
    %841 = vmatmul.f32.gmra.mxu0 %v814
    %v842 = vpop.f32.mrf.mxu0
    %v843 = vadd.f32 %v793, %v842
    %844 = vmatmul.f32.gmra.mxu0 %v817
    %v845 = vpop.f32.mrf.mxu0
    %v846 = vadd.f32 %v794, %v845
    %847 = vdwg.mxu0
    %v848 = vsel %vm498, %v770, 0.0
    %v849 = vsel %vm499, %v771, 0.0
    %v850 = vsel %vm500, %v772, 0.0
    %v851 = vsel %vm501, %v773, 0.0
    %v852 = vsel %vm333, %v848, 0.0
    %853 = vadd.xlane.f32.xlu0 %v852
    %v854 = vpop.xlane.xlu0 %853
    %v855 = vsel %vm333, %v849, 0.0
    %856 = vadd.xlane.f32.xlu0 %v855
    %v857 = vpop.xlane.xlu0 %856
    %v858 = vsel %vm333, %v850, 0.0
    %859 = vadd.xlane.f32.xlu0 %v858
    %v860 = vpop.xlane.xlu0 %859
    %v861 = vsel %vm333, %v851, 0.0
    %862 = vadd.xlane.f32.xlu0 %v861
    %v863 = vpop.xlane.xlu0 %862
    %v864 = vperm.slane %v377, 1
    %v865 = vmul.f32 %v854, %v864
    %v866 = vmul.f32 %v857, %v864
    %v867 = vmul.f32 %v860, %v864
    %v868 = vmul.f32 %v863, %v864
    %v869 = vadd.f32 %v837, %v865
    %v870 = vadd.f32 %v840, %v866
    %v871 = vadd.f32 %v843, %v867
    %v872 = vadd.f32 %v846, %v868
    %v873 = vsel %vm526, %v770, 0.0
    %v874 = vsel %vm527, %v771, 0.0
    %v875 = vsel %vm528, %v772, 0.0
    %v876 = vsel %vm529, %v773, 0.0
    %v877 = vsel %vm333, %v873, 0.0
    %878 = vadd.xlane.f32.xlu0 %v877
    %v879 = vpop.xlane.xlu0 %878
    %v880 = vsel %vm333, %v874, 0.0
    %881 = vadd.xlane.f32.xlu0 %v880
    %v882 = vpop.xlane.xlu0 %881
    %v883 = vsel %vm333, %v875, 0.0
    %884 = vadd.xlane.f32.xlu0 %v883
    %v885 = vpop.xlane.xlu0 %884
    %v886 = vsel %vm333, %v876, 0.0
    %887 = vadd.xlane.f32.xlu0 %v886
    %v888 = vpop.xlane.xlu0 %887
    %v889 = vperm.slane %v377, 2
    %v890 = vmul.f32 %v879, %v889
    %v891 = vmul.f32 %v882, %v889
    %v892 = vmul.f32 %v885, %v889
    %v893 = vmul.f32 %v888, %v889
    %v894 = vadd.f32 %v869, %v890
    %v895 = vadd.f32 %v870, %v891
    %v896 = vadd.f32 %v871, %v892
    %v897 = vadd.f32 %v872, %v893
    %v898 = vsel %vm554, %v770, 0.0
    %v899 = vsel %vm555, %v771, 0.0
    %v900 = vsel %vm556, %v772, 0.0
    %v901 = vsel %vm557, %v773, 0.0
    %v902 = vsel %vm333, %v898, 0.0
    %903 = vadd.xlane.f32.xlu0 %v902
    %v904 = vpop.xlane.xlu0 %903
    %v905 = vsel %vm333, %v899, 0.0
    %906 = vadd.xlane.f32.xlu0 %v905
    %v907 = vpop.xlane.xlu0 %906
    %v908 = vsel %vm333, %v900, 0.0
    %909 = vadd.xlane.f32.xlu0 %v908
    %v910 = vpop.xlane.xlu0 %909
    %v911 = vsel %vm333, %v901, 0.0
    %912 = vadd.xlane.f32.xlu0 %v911
    %v913 = vpop.xlane.xlu0 %912
    %v914 = vperm.slane %v377, 3
    %v915 = vmul.f32 %v904, %v914
    %v916 = vmul.f32 %v907, %v914
    %v917 = vmul.f32 %v910, %v914
    %v918 = vmul.f32 %v913, %v914
    %v919 = vadd.f32 %v894, %v915
    %v920 = vadd.f32 %v895, %v916
    %v921 = vadd.f32 %v896, %v917
    %v922 = vadd.f32 %v897, %v918
    %v923 = vsel %vm582, %v770, 0.0
    %v924 = vsel %vm583, %v771, 0.0
    %v925 = vsel %vm584, %v772, 0.0
    %v926 = vsel %vm585, %v773, 0.0
    %v927 = vsel %vm333, %v923, 0.0
    %928 = vadd.xlane.f32.xlu0 %v927
    %v929 = vpop.xlane.xlu0 %928
    %v930 = vsel %vm333, %v924, 0.0
    %931 = vadd.xlane.f32.xlu0 %v930
    %v932 = vpop.xlane.xlu0 %931
    %v933 = vsel %vm333, %v925, 0.0
    %934 = vadd.xlane.f32.xlu0 %v933
    %v935 = vpop.xlane.xlu0 %934
    %v936 = vsel %vm333, %v926, 0.0
    %937 = vadd.xlane.f32.xlu0 %v936
    %v938 = vpop.xlane.xlu0 %937
    %v939 = vperm.slane %v377, 4
    %v940 = vmul.f32 %v929, %v939
    %v941 = vmul.f32 %v932, %v939
    %v942 = vmul.f32 %v935, %v939
    %v943 = vmul.f32 %v938, %v939
    %v944 = vadd.f32 %v919, %v940
    %v945 = vadd.f32 %v920, %v941
    %v946 = vadd.f32 %v921, %v942
    %v947 = vadd.f32 %v922, %v943
    %v948 = vsel %vm610, %v770, 0.0
    %v949 = vsel %vm611, %v771, 0.0
    %v950 = vsel %vm612, %v772, 0.0
    %v951 = vsel %vm613, %v773, 0.0
    %v952 = vsel %vm333, %v948, 0.0
    %953 = vadd.xlane.f32.xlu0 %v952
    %v954 = vpop.xlane.xlu0 %953
    %v955 = vsel %vm333, %v949, 0.0
    %956 = vadd.xlane.f32.xlu0 %v955
    %v957 = vpop.xlane.xlu0 %956
    %v958 = vsel %vm333, %v950, 0.0
    %959 = vadd.xlane.f32.xlu0 %v958
    %v960 = vpop.xlane.xlu0 %959
    %v961 = vsel %vm333, %v951, 0.0
    %962 = vadd.xlane.f32.xlu0 %v961
    %v963 = vpop.xlane.xlu0 %962
    %v964 = vperm.slane %v377, 5
    %v965 = vmul.f32 %v954, %v964
    %v966 = vmul.f32 %v957, %v964
    %v967 = vmul.f32 %v960, %v964
    %v968 = vmul.f32 %v963, %v964
    %v969 = vadd.f32 %v944, %v965
    %v970 = vadd.f32 %v945, %v966
    %v971 = vadd.f32 %v946, %v967
    %v972 = vadd.f32 %v947, %v968
    %v973 = vsel %vm638, %v770, 0.0
    %v974 = vsel %vm639, %v771, 0.0
    %v975 = vsel %vm640, %v772, 0.0
    %v976 = vsel %vm641, %v773, 0.0
    %v977 = vsel %vm333, %v973, 0.0
    %978 = vadd.xlane.f32.xlu0 %v977
    %v979 = vpop.xlane.xlu0 %978
    %v980 = vsel %vm333, %v974, 0.0
    %981 = vadd.xlane.f32.xlu0 %v980
    %v982 = vpop.xlane.xlu0 %981
    %v983 = vsel %vm333, %v975, 0.0
    %984 = vadd.xlane.f32.xlu0 %v983
    %v985 = vpop.xlane.xlu0 %984
    %v986 = vsel %vm333, %v976, 0.0
    %987 = vadd.xlane.f32.xlu0 %v986
    %v988 = vpop.xlane.xlu0 %987
    %v989 = vperm.slane %v377, 6
    %v990 = vmul.f32 %v979, %v989
    %v991 = vmul.f32 %v982, %v989
    %v992 = vmul.f32 %v985, %v989
    %v993 = vmul.f32 %v988, %v989
    %v994 = vadd.f32 %v969, %v990
    %v995 = vadd.f32 %v970, %v991
    %v996 = vadd.f32 %v971, %v992
    %v997 = vadd.f32 %v972, %v993
    %v998 = vsel %vm666, %v770, 0.0
    %v999 = vsel %vm667, %v771, 0.0
    %v1000 = vsel %vm668, %v772, 0.0
    %v1001 = vsel %vm669, %v773, 0.0
    %v1002 = vsel %vm333, %v998, 0.0
    %1003 = vadd.xlane.f32.xlu0 %v1002
    %v1004 = vpop.xlane.xlu0 %1003
    %v1005 = vsel %vm333, %v999, 0.0
    %1006 = vadd.xlane.f32.xlu0 %v1005
    %v1007 = vpop.xlane.xlu0 %1006
    %v1008 = vsel %vm333, %v1000, 0.0
    %1009 = vadd.xlane.f32.xlu0 %v1008
    %v1010 = vpop.xlane.xlu0 %1009
    %v1011 = vsel %vm333, %v1001, 0.0
    %1012 = vadd.xlane.f32.xlu0 %v1011
    %v1013 = vpop.xlane.xlu0 %1012
    %v1014 = vperm.slane %v377, 7
    %v1015 = vmul.f32 %v1004, %v1014
    %v1016 = vmul.f32 %v1007, %v1014
    %v1017 = vmul.f32 %v1010, %v1014
    %v1018 = vmul.f32 %v1013, %v1014
    %v1019 = vadd.f32 %v994, %v1015
    %v1020 = vadd.f32 %v995, %v1016
    %v1021 = vadd.f32 %v996, %v1017
    %v1022 = vadd.f32 %v997, %v1018
    %v1023 = vsel %vm694, %v770, 0.0
    %v1024 = vsel %vm695, %v771, 0.0
    %v1025 = vsel %vm696, %v772, 0.0
    %v1026 = vsel %vm697, %v773, 0.0
    %v1027 = vsel %vm333, %v1023, 0.0
    %1028 = vadd.xlane.f32.xlu0 %v1027
    %v1029 = vpop.xlane.xlu0 %1028
    %v1030 = vsel %vm333, %v1024, 0.0
    %1031 = vadd.xlane.f32.xlu0 %v1030
    %v1032 = vpop.xlane.xlu0 %1031
    %v1033 = vsel %vm333, %v1025, 0.0
    %1034 = vadd.xlane.f32.xlu0 %v1033
    %v1035 = vpop.xlane.xlu0 %1034
    %v1036 = vsel %vm333, %v1026, 0.0
    %1037 = vadd.xlane.f32.xlu0 %v1036
    %v1038 = vpop.xlane.xlu0 %1037
    %v1039 = vperm.slane %v378, 0
    %v1040 = vmul.f32 %v1029, %v1039
    %v1041 = vmul.f32 %v1032, %v1039
    %v1042 = vmul.f32 %v1035, %v1039
    %v1043 = vmul.f32 %v1038, %v1039
    %v1044 = vadd.f32 %v1019, %v1040
    %v1045 = vadd.f32 %v1020, %v1041
    %v1046 = vadd.f32 %v1021, %v1042
    %v1047 = vadd.f32 %v1022, %v1043
    %1048 = vrot.lane.b32.xlu0 %v364, 112
    %v1049 = vpop.permute.xlu0 %1048
    %1050 = vrot.lane.b32.xlu0 %v367, 112
    %v1051 = vpop.permute.xlu0 %1050
    %1052 = vrot.lane.b32.xlu0 %v370, 112
    %v1053 = vpop.permute.xlu0 %1052
    %1054 = vrot.lane.b32.xlu0 %v373, 112
    %v1055 = vpop.permute.xlu0 %1054
    %v1056 = vsel %vm383, %v1049, 0
    %v1058 = vsel %vm383, %v1051, 0
    %v1060 = vsel %vm383, %v1053, 0
    %v1062 = vsel %vm383, %v1055, 0
    %1064 = vmatpush.msra.mxu0 0.0
    %1065 = vmatpush.msra.mxu0 0.0
    %1066 = vmatpush.msra.mxu0 0.0
    %1067 = vmatpush.msra.mxu0 0.0
    %1068 = vmatpush.msra.mxu0 0.0
    %1069 = vmatpush.msra.mxu0 0.0
    %1070 = vmatpush.msra.mxu0 0.0
    %1071 = vmatpush.msra.mxu0 0.0
    %1072 = vmatpush.msra.mxu0 0.0
    %1073 = vmatpush.msra.mxu0 0.0
    %1074 = vmatpush.msra.mxu0 0.0
    %1075 = vmatpush.msra.mxu0 0.0
    %1076 = vmatpush.msra.mxu0 0.0
    %1077 = vmatpush.msra.mxu0 0.0
    %1078 = vmatpush.msra.mxu0 %v376
    %1079 = vmatpush.msra.mxu0 %v375
    %1080 = vmatmul.f32.gmra.mxu0 %v1056
    %v1081 = vpop.f32.mrf.mxu0
    %v1082 = vadd.f32 0.0, %v1081
    %1083 = vmatmul.f32.gmra.mxu0 %v1058
    %v1084 = vpop.f32.mrf.mxu0
    %v1085 = vadd.f32 0.0, %v1084
    %1086 = vmatmul.f32.gmra.mxu0 %v1060
    %v1087 = vpop.f32.mrf.mxu0
    %v1088 = vadd.f32 0.0, %v1087
    %1089 = vmatmul.f32.gmra.mxu0 %v1062
    %v1090 = vpop.f32.mrf.mxu0
    %v1091 = vadd.f32 0.0, %v1090
    %1092 = vdwg.mxu0
    %1094 = vset.pattern.permute.xlu0 0
    %1095 = vperm.xlu0 %1094, %v1082
    %v1096 = vpop.permute.xlu0 %1095
    %1099 = vset.pattern.permute.xlu0 0
    %1100 = vperm.xlu0 %1099, %v1085
    %v1101 = vpop.permute.xlu0 %1100
    %1104 = vset.pattern.permute.xlu0 0
    %1105 = vperm.xlu0 %1104, %v1088
    %v1106 = vpop.permute.xlu0 %1105
    %1109 = vset.pattern.permute.xlu0 0
    %1110 = vperm.xlu0 %1109, %v1091
    %v1111 = vpop.permute.xlu0 %1110
    %v1113 = vsel %vm425, %v1096, 0.0
    %v1114 = vsel %vm426, %v1101, 0.0
    %v1115 = vsel %vm427, %v1106, 0.0
    %v1116 = vsel %vm428, %v1111, 0.0
    %1117 = vrot.lane.b32.xlu0 %v364, 80
    %v1118 = vpop.permute.xlu0 %1117
    %1119 = vrot.lane.b32.xlu0 %v367, 80
    %v1120 = vpop.permute.xlu0 %1119
    %1121 = vrot.lane.b32.xlu0 %v370, 80
    %v1122 = vpop.permute.xlu0 %1121
    %1123 = vrot.lane.b32.xlu0 %v373, 80
    %v1124 = vpop.permute.xlu0 %1123
    %v1125 = vsel %vm383, %v1118, 0
    %v1127 = vsel %vm383, %v1120, 0
    %v1129 = vsel %vm383, %v1122, 0
    %v1131 = vsel %vm383, %v1124, 0
    %1133 = vmatpush.xpose.msra.mxu0 0.0
    %1134 = vmatpush.xpose.msra.mxu0 0.0
    %1135 = vmatpush.xpose.msra.mxu0 0.0
    %1136 = vmatpush.xpose.msra.mxu0 0.0
    %1137 = vmatpush.xpose.msra.mxu0 0.0
    %1138 = vmatpush.xpose.msra.mxu0 0.0
    %1139 = vmatpush.xpose.msra.mxu0 0.0
    %1140 = vmatpush.xpose.msra.mxu0 0.0
    %1141 = vmatpush.xpose.msra.mxu0 0.0
    %1142 = vmatpush.xpose.msra.mxu0 0.0
    %1143 = vmatpush.xpose.msra.mxu0 0.0
    %1144 = vmatpush.xpose.msra.mxu0 0.0
    %1145 = vmatpush.xpose.msra.mxu0 %v1131
    %1146 = vmatpush.xpose.msra.mxu0 %v1129
    %1147 = vmatpush.xpose.msra.mxu0 %v1127
    %1148 = vmatpush.xpose.msra.mxu0 %v1125
    %1149 = vmatmul.f32.gmra.mxu0 %v1056
    %v1150 = vpop.f32.mrf.mxu0
    %v1151 = vadd.f32 %v1113, %v1150
    %1152 = vmatmul.f32.gmra.mxu0 %v1058
    %v1153 = vpop.f32.mrf.mxu0
    %v1154 = vadd.f32 %v1114, %v1153
    %1155 = vmatmul.f32.gmra.mxu0 %v1060
    %v1156 = vpop.f32.mrf.mxu0
    %v1157 = vadd.f32 %v1115, %v1156
    %1158 = vmatmul.f32.gmra.mxu0 %v1062
    %v1159 = vpop.f32.mrf.mxu0
    %v1160 = vadd.f32 %v1116, %v1159
    %1161 = vdwg.mxu0
    %1162 = vset.pattern.permute.xlu0 1
    %1163 = vperm.xlu0 %1162, %v1082
    %v1164 = vpop.permute.xlu0 %1163
    %1166 = vset.pattern.permute.xlu0 1
    %1167 = vperm.xlu0 %1166, %v1085
    %v1168 = vpop.permute.xlu0 %1167
    %1170 = vset.pattern.permute.xlu0 1
    %1171 = vperm.xlu0 %1170, %v1088
    %v1172 = vpop.permute.xlu0 %1171
    %1174 = vset.pattern.permute.xlu0 1
    %1175 = vperm.xlu0 %1174, %v1091
    %v1176 = vpop.permute.xlu0 %1175
    %v1178 = vsel %vm498, %v1164, 0.0
    %v1179 = vsel %vm499, %v1168, 0.0
    %v1180 = vsel %vm500, %v1172, 0.0
    %v1181 = vsel %vm501, %v1176, 0.0
    %v1182 = vadd.f32 %v1151, %v1178
    %v1183 = vadd.f32 %v1154, %v1179
    %v1184 = vadd.f32 %v1157, %v1180
    %v1185 = vadd.f32 %v1160, %v1181
    %1186 = vset.pattern.permute.xlu0 2
    %1187 = vperm.xlu0 %1186, %v1082
    %v1188 = vpop.permute.xlu0 %1187
    %1190 = vset.pattern.permute.xlu0 2
    %1191 = vperm.xlu0 %1190, %v1085
    %v1192 = vpop.permute.xlu0 %1191
    %1194 = vset.pattern.permute.xlu0 2
    %1195 = vperm.xlu0 %1194, %v1088
    %v1196 = vpop.permute.xlu0 %1195
    %1198 = vset.pattern.permute.xlu0 2
    %1199 = vperm.xlu0 %1198, %v1091
    %v1200 = vpop.permute.xlu0 %1199
    %v1202 = vsel %vm526, %v1188, 0.0
    %v1203 = vsel %vm527, %v1192, 0.0
    %v1204 = vsel %vm528, %v1196, 0.0
    %v1205 = vsel %vm529, %v1200, 0.0
    %v1206 = vadd.f32 %v1182, %v1202
    %v1207 = vadd.f32 %v1183, %v1203
    %v1208 = vadd.f32 %v1184, %v1204
    %v1209 = vadd.f32 %v1185, %v1205
    %1210 = vset.pattern.permute.xlu0 3
    %1211 = vperm.xlu0 %1210, %v1082
    %v1212 = vpop.permute.xlu0 %1211
    %1214 = vset.pattern.permute.xlu0 3
    %1215 = vperm.xlu0 %1214, %v1085
    %v1216 = vpop.permute.xlu0 %1215
    %1218 = vset.pattern.permute.xlu0 3
    %1219 = vperm.xlu0 %1218, %v1088
    %v1220 = vpop.permute.xlu0 %1219
    %1222 = vset.pattern.permute.xlu0 3
    %1223 = vperm.xlu0 %1222, %v1091
    %v1224 = vpop.permute.xlu0 %1223
    %v1226 = vsel %vm554, %v1212, 0.0
    %v1227 = vsel %vm555, %v1216, 0.0
    %v1228 = vsel %vm556, %v1220, 0.0
    %v1229 = vsel %vm557, %v1224, 0.0
    %v1230 = vadd.f32 %v1206, %v1226
    %v1231 = vadd.f32 %v1207, %v1227
    %v1232 = vadd.f32 %v1208, %v1228
    %v1233 = vadd.f32 %v1209, %v1229
    %1234 = vset.pattern.permute.xlu0 4
    %1235 = vperm.xlu0 %1234, %v1082
    %v1236 = vpop.permute.xlu0 %1235
    %1238 = vset.pattern.permute.xlu0 4
    %1239 = vperm.xlu0 %1238, %v1085
    %v1240 = vpop.permute.xlu0 %1239
    %1242 = vset.pattern.permute.xlu0 4
    %1243 = vperm.xlu0 %1242, %v1088
    %v1244 = vpop.permute.xlu0 %1243
    %1246 = vset.pattern.permute.xlu0 4
    %1247 = vperm.xlu0 %1246, %v1091
    %v1248 = vpop.permute.xlu0 %1247
    %v1250 = vsel %vm582, %v1236, 0.0
    %v1251 = vsel %vm583, %v1240, 0.0
    %v1252 = vsel %vm584, %v1244, 0.0
    %v1253 = vsel %vm585, %v1248, 0.0
    %v1254 = vadd.f32 %v1230, %v1250
    %v1255 = vadd.f32 %v1231, %v1251
    %v1256 = vadd.f32 %v1232, %v1252
    %v1257 = vadd.f32 %v1233, %v1253
    %1258 = vset.pattern.permute.xlu0 5
    %1259 = vperm.xlu0 %1258, %v1082
    %v1260 = vpop.permute.xlu0 %1259
    %1262 = vset.pattern.permute.xlu0 5
    %1263 = vperm.xlu0 %1262, %v1085
    %v1264 = vpop.permute.xlu0 %1263
    %1266 = vset.pattern.permute.xlu0 5
    %1267 = vperm.xlu0 %1266, %v1088
    %v1268 = vpop.permute.xlu0 %1267
    %1270 = vset.pattern.permute.xlu0 5
    %1271 = vperm.xlu0 %1270, %v1091
    %v1272 = vpop.permute.xlu0 %1271
    %v1274 = vsel %vm610, %v1260, 0.0
    %v1275 = vsel %vm611, %v1264, 0.0
    %v1276 = vsel %vm612, %v1268, 0.0
    %v1277 = vsel %vm613, %v1272, 0.0
    %v1278 = vadd.f32 %v1254, %v1274
    %v1279 = vadd.f32 %v1255, %v1275
    %v1280 = vadd.f32 %v1256, %v1276
    %v1281 = vadd.f32 %v1257, %v1277
    %1282 = vset.pattern.permute.xlu0 6
    %1283 = vperm.xlu0 %1282, %v1082
    %v1284 = vpop.permute.xlu0 %1283
    %1286 = vset.pattern.permute.xlu0 6
    %1287 = vperm.xlu0 %1286, %v1085
    %v1288 = vpop.permute.xlu0 %1287
    %1290 = vset.pattern.permute.xlu0 6
    %1291 = vperm.xlu0 %1290, %v1088
    %v1292 = vpop.permute.xlu0 %1291
    %1294 = vset.pattern.permute.xlu0 6
    %1295 = vperm.xlu0 %1294, %v1091
    %v1296 = vpop.permute.xlu0 %1295
    %v1298 = vsel %vm638, %v1284, 0.0
    %v1299 = vsel %vm639, %v1288, 0.0
    %v1300 = vsel %vm640, %v1292, 0.0
    %v1301 = vsel %vm641, %v1296, 0.0
    %v1302 = vadd.f32 %v1278, %v1298
    %v1303 = vadd.f32 %v1279, %v1299
    %v1304 = vadd.f32 %v1280, %v1300
    %v1305 = vadd.f32 %v1281, %v1301
    %1306 = vset.pattern.permute.xlu0 7
    %1307 = vperm.xlu0 %1306, %v1082
    %v1308 = vpop.permute.xlu0 %1307
    %1310 = vset.pattern.permute.xlu0 7
    %1311 = vperm.xlu0 %1310, %v1085
    %v1312 = vpop.permute.xlu0 %1311
    %1314 = vset.pattern.permute.xlu0 7
    %1315 = vperm.xlu0 %1314, %v1088
    %v1316 = vpop.permute.xlu0 %1315
    %1318 = vset.pattern.permute.xlu0 7
    %1319 = vperm.xlu0 %1318, %v1091
    %v1320 = vpop.permute.xlu0 %1319
    %v1322 = vsel %vm666, %v1308, 0.0
    %v1323 = vsel %vm667, %v1312, 0.0
    %v1324 = vsel %vm668, %v1316, 0.0
    %v1325 = vsel %vm669, %v1320, 0.0
    %v1326 = vadd.f32 %v1302, %v1322
    %v1327 = vadd.f32 %v1303, %v1323
    %v1328 = vadd.f32 %v1304, %v1324
    %v1329 = vadd.f32 %v1305, %v1325
    %1330 = vset.pattern.permute.xlu0 8
    %1331 = vperm.xlu0 %1330, %v1082
    %v1332 = vpop.permute.xlu0 %1331
    %1334 = vset.pattern.permute.xlu0 8
    %1335 = vperm.xlu0 %1334, %v1085
    %v1336 = vpop.permute.xlu0 %1335
    %1338 = vset.pattern.permute.xlu0 8
    %1339 = vperm.xlu0 %1338, %v1088
    %v1340 = vpop.permute.xlu0 %1339
    %1342 = vset.pattern.permute.xlu0 8
    %1343 = vperm.xlu0 %1342, %v1091
    %v1344 = vpop.permute.xlu0 %1343
    %v1346 = vsel %vm694, %v1332, 0.0
    %v1347 = vsel %vm695, %v1336, 0.0
    %v1348 = vsel %vm696, %v1340, 0.0
    %v1349 = vsel %vm697, %v1344, 0.0
    %v1350 = vadd.f32 %v1326, %v1346
    %v1351 = vadd.f32 %v1327, %v1347
    %v1352 = vadd.f32 %v1328, %v1348
    %v1353 = vadd.f32 %v1329, %v1349
    %v1354 = vsel %vm722, %v1350, -10000.0
    %v1355 = vsel %vm723, %v1351, -10000.0
    %v1356 = vsel %vm724, %v1352, -10000.0
    %v1357 = vsel %vm725, %v1353, -10000.0
    %v1358 = vsel %vm333, %v1354, -inf
    %1359 = vmax.xlane.f32.xlu0 %v1358
    %v1360 = vpop.xlane.xlu0 %1359
    %v1361 = vsel %vm333, %v1355, -inf
    %1362 = vmax.xlane.f32.xlu0 %v1361
    %v1363 = vpop.xlane.xlu0 %1362
    %v1364 = vsel %vm333, %v1356, -inf
    %1365 = vmax.xlane.f32.xlu0 %v1364
    %v1366 = vpop.xlane.xlu0 %1365
    %v1367 = vsel %vm333, %v1357, -inf
    %1368 = vmax.xlane.f32.xlu0 %v1367
    %v1369 = vpop.xlane.xlu0 %1368
    %v1370 = vsub.f32 %v1354, %v1360
    %v1371 = vsub.f32 %v1355, %v1363
    %v1372 = vsub.f32 %v1356, %v1366
    %v1373 = vsub.f32 %v1357, %v1369
    %v1374 = vmul.f32 %v1370, 1.442695
    %v1375 = vpow.pop %v1374
    %v1376 = vmul.f32 %v1371, 1.442695
    %v1377 = vpow.pop %v1376
    %v1378 = vmul.f32 %v1372, 1.442695
    %v1379 = vpow.pop %v1378
    %v1380 = vmul.f32 %v1373, 1.442695
    %v1381 = vpow.pop %v1380
    %v1382 = vsel %vm333, %v1375, 0.0
    %1383 = vadd.xlane.f32.xlu0 %v1382
    %v1384 = vpop.xlane.xlu0 %1383
    %v1385 = vsel %vm333, %v1377, 0.0
    %1386 = vadd.xlane.f32.xlu0 %v1385
    %v1387 = vpop.xlane.xlu0 %1386
    %v1388 = vsel %vm333, %v1379, 0.0
    %1389 = vadd.xlane.f32.xlu0 %v1388
    %v1390 = vpop.xlane.xlu0 %1389
    %v1391 = vsel %vm333, %v1381, 0.0
    %1392 = vadd.xlane.f32.xlu0 %v1391
    %v1393 = vpop.xlane.xlu0 %1392
    %v1394 = vrcp.pop %v1384
    %v1395 = vrcp.pop %v1387
    %v1396 = vrcp.pop %v1390
    %v1397 = vrcp.pop %v1393
    %v1398 = vmul.f32 %v1375, %v1394
    %v1399 = vmul.f32 %v1377, %v1395
    %v1400 = vmul.f32 %v1379, %v1396
    %v1401 = vmul.f32 %v1381, %v1397
    %v1402 = vsel %vm425, %v1398, 0.0
    %v1403 = vsel %vm426, %v1399, 0.0
    %v1404 = vsel %vm427, %v1400, 0.0
    %v1405 = vsel %vm428, %v1401, 0.0
    %v1406 = vsel %vm333, %v1402, 0.0
    %1407 = vadd.xlane.f32.xlu0 %v1406
    %v1408 = vpop.xlane.xlu0 %1407
    %v1409 = vsel %vm333, %v1403, 0.0
    %1410 = vadd.xlane.f32.xlu0 %v1409
    %v1411 = vpop.xlane.xlu0 %1410
    %v1412 = vsel %vm333, %v1404, 0.0
    %1413 = vadd.xlane.f32.xlu0 %v1412
    %v1414 = vpop.xlane.xlu0 %1413
    %v1415 = vsel %vm333, %v1405, 0.0
    %1416 = vadd.xlane.f32.xlu0 %v1415
    %v1417 = vpop.xlane.xlu0 %1416
    %v1418 = vmul.f32 %v1408, %v790
    %v1419 = vmul.f32 %v1411, %v790
    %v1420 = vmul.f32 %v1414, %v790
    %v1421 = vmul.f32 %v1417, %v790
    %1422 = vrot.lane.b32.xlu0 %v364, 48
    %v1423 = vpop.permute.xlu0 %1422
    %1424 = vrot.lane.b32.xlu0 %v367, 48
    %v1425 = vpop.permute.xlu0 %1424
    %1426 = vrot.lane.b32.xlu0 %v370, 48
    %v1427 = vpop.permute.xlu0 %1426
    %1428 = vrot.lane.b32.xlu0 %v373, 48
    %v1429 = vpop.permute.xlu0 %1428
    %v1435 = vsel %vm333, %v1398, 0
    %v1438 = vsel %vm333, %v1399, 0
    %v1441 = vsel %vm333, %v1400, 0
    %v1444 = vsel %vm333, %v1401, 0
    %1446 = vmatpush.msra.mxu0 0.0
    %1447 = vmatpush.msra.mxu0 0.0
    %1448 = vmatpush.msra.mxu0 0.0
    %1449 = vmatpush.msra.mxu0 0.0
    %1450 = vmatpush.msra.mxu0 0.0
    %1451 = vmatpush.msra.mxu0 0.0
    %1452 = vmatpush.msra.mxu0 0.0
    %1453 = vmatpush.msra.mxu0 0.0
    %1454 = vmatpush.msra.mxu0 0.0
    %1455 = vmatpush.msra.mxu0 0.0
    %1456 = vmatpush.msra.mxu0 0.0
    %1457 = vmatpush.msra.mxu0 0.0
    %1458 = vmatpush.msra.mxu0 %v1429
    %1459 = vmatpush.msra.mxu0 %v1427
    %1460 = vmatpush.msra.mxu0 %v1425
    %1461 = vmatpush.msra.mxu0 %v1423
    %1462 = vmatmul.f32.gmra.mxu0 %v1435
    %v1463 = vpop.f32.mrf.mxu0
    %v1464 = vadd.f32 %v1418, %v1463
    %1465 = vmatmul.f32.gmra.mxu0 %v1438
    %v1466 = vpop.f32.mrf.mxu0
    %v1467 = vadd.f32 %v1419, %v1466
    %1468 = vmatmul.f32.gmra.mxu0 %v1441
    %v1469 = vpop.f32.mrf.mxu0
    %v1470 = vadd.f32 %v1420, %v1469
    %1471 = vmatmul.f32.gmra.mxu0 %v1444
    %v1472 = vpop.f32.mrf.mxu0
    %v1473 = vadd.f32 %v1421, %v1472
    %1474 = vdwg.mxu0
    %v1475 = vsel %vm498, %v1398, 0.0
    %v1476 = vsel %vm499, %v1399, 0.0
    %v1477 = vsel %vm500, %v1400, 0.0
    %v1478 = vsel %vm501, %v1401, 0.0
    %v1479 = vsel %vm333, %v1475, 0.0
    %1480 = vadd.xlane.f32.xlu0 %v1479
    %v1481 = vpop.xlane.xlu0 %1480
    %v1482 = vsel %vm333, %v1476, 0.0
    %1483 = vadd.xlane.f32.xlu0 %v1482
    %v1484 = vpop.xlane.xlu0 %1483
    %v1485 = vsel %vm333, %v1477, 0.0
    %1486 = vadd.xlane.f32.xlu0 %v1485
    %v1487 = vpop.xlane.xlu0 %1486
    %v1488 = vsel %vm333, %v1478, 0.0
    %1489 = vadd.xlane.f32.xlu0 %v1488
    %v1490 = vpop.xlane.xlu0 %1489
    %v1491 = vmul.f32 %v1481, %v864
    %v1492 = vmul.f32 %v1484, %v864
    %v1493 = vmul.f32 %v1487, %v864
    %v1494 = vmul.f32 %v1490, %v864
    %v1495 = vadd.f32 %v1464, %v1491
    %v1496 = vadd.f32 %v1467, %v1492
    %v1497 = vadd.f32 %v1470, %v1493
    %v1498 = vadd.f32 %v1473, %v1494
    %v1499 = vsel %vm526, %v1398, 0.0
    %v1500 = vsel %vm527, %v1399, 0.0
    %v1501 = vsel %vm528, %v1400, 0.0
    %v1502 = vsel %vm529, %v1401, 0.0
    %v1503 = vsel %vm333, %v1499, 0.0
    %1504 = vadd.xlane.f32.xlu0 %v1503
    %v1505 = vpop.xlane.xlu0 %1504
    %v1506 = vsel %vm333, %v1500, 0.0
    %1507 = vadd.xlane.f32.xlu0 %v1506
    %v1508 = vpop.xlane.xlu0 %1507
    %v1509 = vsel %vm333, %v1501, 0.0
    %1510 = vadd.xlane.f32.xlu0 %v1509
    %v1511 = vpop.xlane.xlu0 %1510
    %v1512 = vsel %vm333, %v1502, 0.0
    %1513 = vadd.xlane.f32.xlu0 %v1512
    %v1514 = vpop.xlane.xlu0 %1513
    %v1515 = vmul.f32 %v1505, %v889
    %v1516 = vmul.f32 %v1508, %v889
    %v1517 = vmul.f32 %v1511, %v889
    %v1518 = vmul.f32 %v1514, %v889
    %v1519 = vadd.f32 %v1495, %v1515
    %v1520 = vadd.f32 %v1496, %v1516
    %v1521 = vadd.f32 %v1497, %v1517
    %v1522 = vadd.f32 %v1498, %v1518
    %v1523 = vsel %vm554, %v1398, 0.0
    %v1524 = vsel %vm555, %v1399, 0.0
    %v1525 = vsel %vm556, %v1400, 0.0
    %v1526 = vsel %vm557, %v1401, 0.0
    %v1527 = vsel %vm333, %v1523, 0.0
    %1528 = vadd.xlane.f32.xlu0 %v1527
    %v1529 = vpop.xlane.xlu0 %1528
    %v1530 = vsel %vm333, %v1524, 0.0
    %1531 = vadd.xlane.f32.xlu0 %v1530
    %v1532 = vpop.xlane.xlu0 %1531
    %v1533 = vsel %vm333, %v1525, 0.0
    %1534 = vadd.xlane.f32.xlu0 %v1533
    %v1535 = vpop.xlane.xlu0 %1534
    %v1536 = vsel %vm333, %v1526, 0.0
    %1537 = vadd.xlane.f32.xlu0 %v1536
    %v1538 = vpop.xlane.xlu0 %1537
    %v1539 = vmul.f32 %v1529, %v914
    %v1540 = vmul.f32 %v1532, %v914
    %v1541 = vmul.f32 %v1535, %v914
    %v1542 = vmul.f32 %v1538, %v914
    %v1543 = vadd.f32 %v1519, %v1539
    %v1544 = vadd.f32 %v1520, %v1540
    %v1545 = vadd.f32 %v1521, %v1541
    %v1546 = vadd.f32 %v1522, %v1542
    %v1547 = vsel %vm582, %v1398, 0.0
    %v1548 = vsel %vm583, %v1399, 0.0
    %v1549 = vsel %vm584, %v1400, 0.0
    %v1550 = vsel %vm585, %v1401, 0.0
    %v1551 = vsel %vm333, %v1547, 0.0
    %1552 = vadd.xlane.f32.xlu0 %v1551
    %v1553 = vpop.xlane.xlu0 %1552
    %v1554 = vsel %vm333, %v1548, 0.0
    %1555 = vadd.xlane.f32.xlu0 %v1554
    %v1556 = vpop.xlane.xlu0 %1555
    %v1557 = vsel %vm333, %v1549, 0.0
    %1558 = vadd.xlane.f32.xlu0 %v1557
    %v1559 = vpop.xlane.xlu0 %1558
    %v1560 = vsel %vm333, %v1550, 0.0
    %1561 = vadd.xlane.f32.xlu0 %v1560
    %v1562 = vpop.xlane.xlu0 %1561
    %v1563 = vmul.f32 %v1553, %v939
    %v1564 = vmul.f32 %v1556, %v939
    %v1565 = vmul.f32 %v1559, %v939
    %v1566 = vmul.f32 %v1562, %v939
    %v1567 = vadd.f32 %v1543, %v1563
    %v1568 = vadd.f32 %v1544, %v1564
    %v1569 = vadd.f32 %v1545, %v1565
    %v1570 = vadd.f32 %v1546, %v1566
    %v1571 = vsel %vm610, %v1398, 0.0
    %v1572 = vsel %vm611, %v1399, 0.0
    %v1573 = vsel %vm612, %v1400, 0.0
    %v1574 = vsel %vm613, %v1401, 0.0
    %v1575 = vsel %vm333, %v1571, 0.0
    %1576 = vadd.xlane.f32.xlu0 %v1575
    %v1577 = vpop.xlane.xlu0 %1576
    %v1578 = vsel %vm333, %v1572, 0.0
    %1579 = vadd.xlane.f32.xlu0 %v1578
    %v1580 = vpop.xlane.xlu0 %1579
    %v1581 = vsel %vm333, %v1573, 0.0
    %1582 = vadd.xlane.f32.xlu0 %v1581
    %v1583 = vpop.xlane.xlu0 %1582
    %v1584 = vsel %vm333, %v1574, 0.0
    %1585 = vadd.xlane.f32.xlu0 %v1584
    %v1586 = vpop.xlane.xlu0 %1585
    %v1587 = vmul.f32 %v1577, %v964
    %v1588 = vmul.f32 %v1580, %v964
    %v1589 = vmul.f32 %v1583, %v964
    %v1590 = vmul.f32 %v1586, %v964
    %v1591 = vadd.f32 %v1567, %v1587
    %v1592 = vadd.f32 %v1568, %v1588
    %v1593 = vadd.f32 %v1569, %v1589
    %v1594 = vadd.f32 %v1570, %v1590
    %v1595 = vsel %vm638, %v1398, 0.0
    %v1596 = vsel %vm639, %v1399, 0.0
    %v1597 = vsel %vm640, %v1400, 0.0
    %v1598 = vsel %vm641, %v1401, 0.0
    %v1599 = vsel %vm333, %v1595, 0.0
    %1600 = vadd.xlane.f32.xlu0 %v1599
    %v1601 = vpop.xlane.xlu0 %1600
    %v1602 = vsel %vm333, %v1596, 0.0
    %1603 = vadd.xlane.f32.xlu0 %v1602
    %v1604 = vpop.xlane.xlu0 %1603
    %v1605 = vsel %vm333, %v1597, 0.0
    %1606 = vadd.xlane.f32.xlu0 %v1605
    %v1607 = vpop.xlane.xlu0 %1606
    %v1608 = vsel %vm333, %v1598, 0.0
    %1609 = vadd.xlane.f32.xlu0 %v1608
    %v1610 = vpop.xlane.xlu0 %1609
    %v1611 = vmul.f32 %v1601, %v989
    %v1612 = vmul.f32 %v1604, %v989
    %v1613 = vmul.f32 %v1607, %v989
    %v1614 = vmul.f32 %v1610, %v989
    %v1615 = vadd.f32 %v1591, %v1611
    %v1616 = vadd.f32 %v1592, %v1612
    %v1617 = vadd.f32 %v1593, %v1613
    %v1618 = vadd.f32 %v1594, %v1614
    %v1619 = vsel %vm666, %v1398, 0.0
    %v1620 = vsel %vm667, %v1399, 0.0
    %v1621 = vsel %vm668, %v1400, 0.0
    %v1622 = vsel %vm669, %v1401, 0.0
    %v1623 = vsel %vm333, %v1619, 0.0
    %1624 = vadd.xlane.f32.xlu0 %v1623
    %v1625 = vpop.xlane.xlu0 %1624
    %v1626 = vsel %vm333, %v1620, 0.0
    %1627 = vadd.xlane.f32.xlu0 %v1626
    %v1628 = vpop.xlane.xlu0 %1627
    %v1629 = vsel %vm333, %v1621, 0.0
    %1630 = vadd.xlane.f32.xlu0 %v1629
    %v1631 = vpop.xlane.xlu0 %1630
    %v1632 = vsel %vm333, %v1622, 0.0
    %1633 = vadd.xlane.f32.xlu0 %v1632
    %v1634 = vpop.xlane.xlu0 %1633
    %v1635 = vmul.f32 %v1625, %v1014
    %v1636 = vmul.f32 %v1628, %v1014
    %v1637 = vmul.f32 %v1631, %v1014
    %v1638 = vmul.f32 %v1634, %v1014
    %v1639 = vadd.f32 %v1615, %v1635
    %v1640 = vadd.f32 %v1616, %v1636
    %v1641 = vadd.f32 %v1617, %v1637
    %v1642 = vadd.f32 %v1618, %v1638
    %v1643 = vsel %vm694, %v1398, 0.0
    %v1644 = vsel %vm695, %v1399, 0.0
    %v1645 = vsel %vm696, %v1400, 0.0
    %v1646 = vsel %vm697, %v1401, 0.0
    %v1647 = vsel %vm333, %v1643, 0.0
    %1648 = vadd.xlane.f32.xlu0 %v1647
    %v1649 = vpop.xlane.xlu0 %1648
    %v1650 = vsel %vm333, %v1644, 0.0
    %1651 = vadd.xlane.f32.xlu0 %v1650
    %v1652 = vpop.xlane.xlu0 %1651
    %v1653 = vsel %vm333, %v1645, 0.0
    %1654 = vadd.xlane.f32.xlu0 %v1653
    %v1655 = vpop.xlane.xlu0 %1654
    %v1656 = vsel %vm333, %v1646, 0.0
    %1657 = vadd.xlane.f32.xlu0 %v1656
    %v1658 = vpop.xlane.xlu0 %1657
    %v1659 = vmul.f32 %v1649, %v1039
    %v1660 = vmul.f32 %v1652, %v1039
    %v1661 = vmul.f32 %v1655, %v1039
    %v1662 = vmul.f32 %v1658, %v1039
    %v1663 = vadd.f32 %v1639, %v1659
    %v1664 = vadd.f32 %v1640, %v1660
    %v1665 = vadd.f32 %v1641, %v1661
    %v1666 = vadd.f32 %v1642, %v1662
    %v1668 = vsel %vm383, %v1663, 0
    %v1671 = vsel %vm383, %v1664, 0
    %v1674 = vsel %vm383, %v1665, 0
    %v1677 = vsel %vm383, %v1666, 0
    %1679 = vmatpush.msra.mxu0 0.0
    %1680 = vmatpush.msra.mxu0 0.0
    %1681 = vmatpush.msra.mxu0 0.0
    %1682 = vmatpush.msra.mxu0 0.0
    %1683 = vmatpush.msra.mxu0 0.0
    %1684 = vmatpush.msra.mxu0 0.0
    %1685 = vmatpush.msra.mxu0 0.0
    %1686 = vmatpush.msra.mxu0 0.0
    %1687 = vmatpush.msra.mxu0 0.0
    %1688 = vmatpush.msra.mxu0 0.0
    %1689 = vmatpush.msra.mxu0 0.0
    %1690 = vmatpush.msra.mxu0 0.0
    %1691 = vmatpush.msra.mxu0 0.0
    %1692 = vmatpush.msra.mxu0 0.0
    %1693 = vmatpush.msra.mxu0 %v382
    %1694 = vmatpush.msra.mxu0 %v381
    %1695 = vmatmul.f32.gmra.mxu0 %v1668
    %v1696 = vpop.f32.mrf.mxu0
    %v1697 = vadd.f32 0.0, %v1696
    %1698 = vmatmul.f32.gmra.mxu0 %v1671
    %v1699 = vpop.f32.mrf.mxu0
    %v1700 = vadd.f32 0.0, %v1699
    %1701 = vmatmul.f32.gmra.mxu0 %v1674
    %v1702 = vpop.f32.mrf.mxu0
    %v1703 = vadd.f32 0.0, %v1702
    %1704 = vmatmul.f32.gmra.mxu0 %v1677
    %v1705 = vpop.f32.mrf.mxu0
    %v1706 = vadd.f32 0.0, %v1705
    %1707 = vdwg.mxu0
    %v1709 = vsel %vm383, %v1044, 0
    %v1712 = vsel %vm383, %v1045, 0
    %v1715 = vsel %vm383, %v1046, 0
    %v1718 = vsel %vm383, %v1047, 0
    %1720 = vmatpush.msra.mxu0 0.0
    %1721 = vmatpush.msra.mxu0 0.0
    %1722 = vmatpush.msra.mxu0 0.0
    %1723 = vmatpush.msra.mxu0 0.0
    %1724 = vmatpush.msra.mxu0 0.0
    %1725 = vmatpush.msra.mxu0 0.0
    %1726 = vmatpush.msra.mxu0 0.0
    %1727 = vmatpush.msra.mxu0 0.0
    %1728 = vmatpush.msra.mxu0 0.0
    %1729 = vmatpush.msra.mxu0 0.0
    %1730 = vmatpush.msra.mxu0 0.0
    %1731 = vmatpush.msra.mxu0 0.0
    %1732 = vmatpush.msra.mxu0 0.0
    %1733 = vmatpush.msra.mxu0 0.0
    %1734 = vmatpush.msra.mxu0 %v380
    %1735 = vmatpush.msra.mxu0 %v379
    %1736 = vmatmul.f32.gmra.mxu0 %v1709
    %v1737 = vpop.f32.mrf.mxu0
    %v1738 = vadd.f32 %v1697, %v1737
    %1739 = vmatmul.f32.gmra.mxu0 %v1712
    %v1740 = vpop.f32.mrf.mxu0
    %v1741 = vadd.f32 %v1700, %v1740
    %1742 = vmatmul.f32.gmra.mxu0 %v1715
    %v1743 = vpop.f32.mrf.mxu0
    %v1744 = vadd.f32 %v1703, %v1743
    %1745 = vmatmul.f32.gmra.mxu0 %v1718
    %v1746 = vpop.f32.mrf.mxu0
    %v1747 = vadd.f32 %v1706, %v1746
    %1748 = vdwg.mxu0
    %v1749 = vld [vmem:[%s7] sm:$0x1]
    %v1751 = vperm.slane %v1749, 0
    %v1753 = vadd.f32 %v1738, %v1751
    %v1754 = vadd.f32 %v1741, %v1751
    %v1755 = vadd.f32 %v1744, %v1751
    %v1756 = vadd.f32 %v1747, %v1751
    %v1757 = vadd.f32 %v308, %v1753
    %v1758 = vadd.f32 %v309, %v1754
    %v1759 = vadd.f32 %v310, %v1755
    %v1760 = vadd.f32 %v311, %v1756
    %v1761 = vld [vmem:[%s10] sm:$0x1]
    %v1762 = vld [vmem:[%s11] sm:$0x1]
    %v1763 = vsel %vm333, %v1757, 0.0
    %1764 = vadd.xlane.f32.xlu0 %v1763
    %v1765 = vpop.xlane.xlu0 %1764
    %v1766 = vsel %vm333, %v1758, 0.0
    %1767 = vadd.xlane.f32.xlu0 %v1766
    %v1768 = vpop.xlane.xlu0 %1767
    %v1769 = vsel %vm333, %v1759, 0.0
    %1770 = vadd.xlane.f32.xlu0 %v1769
    %v1771 = vpop.xlane.xlu0 %1770
    %v1772 = vsel %vm333, %v1760, 0.0
    %1773 = vadd.xlane.f32.xlu0 %v1772
    %v1774 = vpop.xlane.xlu0 %1773
    %v1775 = vrcp.pop 32.0
    %v1776 = vmul.f32 32.0, %v1775
    %v1777 = vsub.f32 1.0, %v1776
    %v1778 = vmul.f32 %v1775, %v1777
    %v1779 = vadd.f32 %v1775, %v1778
    %vm1780 = vweird.f32 %v1775
    %v1781 = vsel %vm1780, %v1775, %v1779
    %v1782 = vmul.f32 %v1765, %v1781
    %v1783 = vmul.f32 %v1768, %v1781
    %v1784 = vmul.f32 %v1771, %v1781
    %v1785 = vmul.f32 %v1774, %v1781
    %v1786 = vsub.f32 %v1757, %v1782
    %v1787 = vsub.f32 %v1758, %v1783
    %v1788 = vsub.f32 %v1759, %v1784
    %v1789 = vsub.f32 %v1760, %v1785
    %v1790 = vmul.f32 %v1786, %v1786
    %v1791 = vmul.f32 %v1787, %v1787
    %v1792 = vmul.f32 %v1788, %v1788
    %v1793 = vmul.f32 %v1789, %v1789
    %v1794 = vsel %vm333, %v1790, 0.0
    %1795 = vadd.xlane.f32.xlu0 %v1794
    %v1796 = vpop.xlane.xlu0 %1795
    %v1797 = vsel %vm333, %v1791, 0.0
    %1798 = vadd.xlane.f32.xlu0 %v1797
    %v1799 = vpop.xlane.xlu0 %1798
    %v1800 = vsel %vm333, %v1792, 0.0
    %1801 = vadd.xlane.f32.xlu0 %v1800
    %v1802 = vpop.xlane.xlu0 %1801
    %v1803 = vsel %vm333, %v1793, 0.0
    %1804 = vadd.xlane.f32.xlu0 %v1803
    %v1805 = vpop.xlane.xlu0 %1804
    %v1806 = vmul.f32 %v1796, %v1781
    %v1807 = vmul.f32 %v1799, %v1781
    %v1808 = vmul.f32 %v1802, %v1781
    %v1809 = vmul.f32 %v1805, %v1781
    %v1810 = vadd.f32 %v1806, 1e-05
    %v1811 = vadd.f32 %v1807, 1e-05
    %v1812 = vadd.f32 %v1808, 1e-05
    %v1813 = vadd.f32 %v1809, 1e-05
    %v1814 = vrsqrt.pop %v1810
    %v1815 = vmul.f32 %v1814, %v1810
    %v1816 = vmul.f32 %v1815, %v1814
    %v1817 = vmul.f32 0.5, %v1816
    %v1818 = vsub.f32 1.5, %v1817
    %v1819 = vmul.f32 %v1814, %v1818
    %vm1820 = vweird.f32 %v1810
    %vm1821 = vweird.f32 %v1814
    %vm1822 = vmor %vm1820, %vm1821
    %v1823 = vsel %vm1822, %v1814, %v1819
    %v1824 = vrsqrt.pop %v1811
    %v1825 = vmul.f32 %v1824, %v1811
    %v1826 = vmul.f32 %v1825, %v1824
    %v1827 = vmul.f32 0.5, %v1826
    %v1828 = vsub.f32 1.5, %v1827
    %v1829 = vmul.f32 %v1824, %v1828
    %vm1830 = vweird.f32 %v1811
    %vm1831 = vweird.f32 %v1824
    %vm1832 = vmor %vm1830, %vm1831
    %v1833 = vsel %vm1832, %v1824, %v1829
    %v1834 = vrsqrt.pop %v1812
    %v1835 = vmul.f32 %v1834, %v1812
    %v1836 = vmul.f32 %v1835, %v1834
    %v1837 = vmul.f32 0.5, %v1836
    %v1838 = vsub.f32 1.5, %v1837
    %v1839 = vmul.f32 %v1834, %v1838
    %vm1840 = vweird.f32 %v1812
    %vm1841 = vweird.f32 %v1834
    %vm1842 = vmor %vm1840, %vm1841
    %v1843 = vsel %vm1842, %v1834, %v1839
    %v1844 = vrsqrt.pop %v1813
    %v1845 = vmul.f32 %v1844, %v1813
    %v1846 = vmul.f32 %v1845, %v1844
    %v1847 = vmul.f32 0.5, %v1846
    %v1848 = vsub.f32 1.5, %v1847
    %v1849 = vmul.f32 %v1844, %v1848
    %vm1850 = vweird.f32 %v1813
    %vm1851 = vweird.f32 %v1844
    %vm1852 = vmor %vm1850, %vm1851
    %v1853 = vsel %vm1852, %v1844, %v1849
    %v1854 = vmul.f32 %v1786, %v1823
    %v1855 = vmul.f32 %v1787, %v1833
    %v1856 = vmul.f32 %v1788, %v1843
    %v1857 = vmul.f32 %v1789, %v1853
    %v1859 = vperm.slane %v1761, 0
    %v1861 = vmul.f32 %v1854, %v1859
    %v1862 = vmul.f32 %v1855, %v1859
    %v1863 = vmul.f32 %v1856, %v1859
    %v1864 = vmul.f32 %v1857, %v1859
    %v1866 = vperm.slane %v1762, 0
    %v1868 = vadd.f32 %v1861, %v1866
    %v1869 = vadd.f32 %v1862, %v1866
    %v1870 = vadd.f32 %v1863, %v1866
    %v1871 = vadd.f32 %v1864, %v1866
    %v1872 = vmul.f32 %v1868, %v291
    %v1873 = vmul.f32 %v1869, %v296
    %v1874 = vmul.f32 %v1870, %v301
    %v1875 = vmul.f32 %v1871, %v306
    %v1876 = vrot.slane %v1872, 7
    %v1877 = vrot.slane %v1873, 7
    %v1878 = vrot.slane %v1874, 7
    %v1879 = vrot.slane %v1875, 7
    %vm1880 = vcmp.lt.s32.totalorder %v313, 1
    %v1881 = vsel %vm1880, %v1878, %v1879
    %v1882 = vsel %vm1880, %v1877, %v1878
    %v1883 = vsel %vm1880, %v1876, %v1877
    %v1884 = vsel %vm1880, %v1879, %v1876
    %v1885 = vadd.s32 %v321, 4294967295
    %v1886 = vadd.s32 %v322, 4294967295
    %v1887 = vadd.s32 %v323, 4294967295
    %v1888 = vadd.s32 %v324, 4294967295
    %vm1889 = vcmp.ge.s32.totalorder %v1885, 0
    %vm1890 = vcmp.ge.s32.totalorder %v1886, 0
    %vm1891 = vcmp.ge.s32.totalorder %v1887, 0
    %vm1892 = vcmp.ge.s32.totalorder %v1888, 0
    %vm1893 = vcmp.lt.s32.totalorder %v1885, 16
    %vm1894 = vcmp.lt.s32.totalorder %v1886, 16
    %vm1895 = vcmp.lt.s32.totalorder %v1887, 16
    %vm1896 = vcmp.lt.s32.totalorder %v1888, 16
    %vm1897 = vmand %vm1889, %vm1893
    %vm1898 = vmand %vm1890, %vm1894
    %vm1899 = vmand %vm1891, %vm1895
    %vm1900 = vmand %vm1892, %vm1896
    %v1901 = vsel %vm1897, 1, 0
    %v1902 = vsel %vm1898, 1, 0
    %v1903 = vsel %vm1899, 1, 0
    %v1904 = vsel %vm1900, 1, 0
    %vm1905 = vcmp.eq.s32.totalorder %v1901, 1
    %vm1906 = vcmp.eq.s32.totalorder %v1902, 1
    %vm1907 = vcmp.eq.s32.totalorder %v1903, 1
    %vm1908 = vcmp.eq.s32.totalorder %v1904, 1
    %v1909 = vsel %vm1905, %v1884, 0.0
    %v1910 = vsel %vm1906, %v1883, 0.0
    %v1911 = vsel %vm1907, %v1882, 0.0
    %v1912 = vsel %vm1908, %v1881, 0.0
    %v1913 = vrot.slane %v1872, 1
    %v1914 = vrot.slane %v1873, 1
    %v1915 = vrot.slane %v1874, 1
    %v1916 = vrot.slane %v1875, 1
    %vm1917 = vcmp.lt.s32.totalorder %v313, 7
    %v1918 = vsel %vm1917, %v1915, %v1916
    %v1919 = vsel %vm1917, %v1914, %v1915
    %v1920 = vsel %vm1917, %v1913, %v1914
    %v1921 = vsel %vm1917, %v1916, %v1913
    %v1922 = vadd.s32 %v321, 1
    %v1923 = vadd.s32 %v322, 1
    %v1924 = vadd.s32 %v323, 1
    %v1925 = vadd.s32 %v324, 1
    %vm1926 = vcmp.ge.s32.totalorder %v1922, 0
    %vm1927 = vcmp.ge.s32.totalorder %v1923, 0
    %vm1928 = vcmp.ge.s32.totalorder %v1924, 0
    %vm1929 = vcmp.ge.s32.totalorder %v1925, 0
    %vm1930 = vcmp.lt.s32.totalorder %v1922, 16
    %vm1931 = vcmp.lt.s32.totalorder %v1923, 16
    %vm1932 = vcmp.lt.s32.totalorder %v1924, 16
    %vm1933 = vcmp.lt.s32.totalorder %v1925, 16
    %vm1934 = vmand %vm1926, %vm1930
    %vm1935 = vmand %vm1927, %vm1931
    %vm1936 = vmand %vm1928, %vm1932
    %vm1937 = vmand %vm1929, %vm1933
    %v1938 = vsel %vm1934, 1, 0
    %v1939 = vsel %vm1935, 1, 0
    %v1940 = vsel %vm1936, 1, 0
    %v1941 = vsel %vm1937, 1, 0
    %vm1942 = vcmp.eq.s32.totalorder %v1938, 1
    %vm1943 = vcmp.eq.s32.totalorder %v1939, 1
    %vm1944 = vcmp.eq.s32.totalorder %v1940, 1
    %vm1945 = vcmp.eq.s32.totalorder %v1941, 1
    %v1946 = vsel %vm1942, %v1920, 0.0
    %v1947 = vsel %vm1943, %v1919, 0.0
    %v1948 = vsel %vm1944, %v1918, 0.0
    %v1949 = vsel %vm1945, %v1921, 0.0
    %1954 = vrot.lane.b32.xlu0 %v1872, 32
    %v1955 = vpop.permute.xlu0 %1954
    %1956 = vrot.lane.b32.xlu0 %v1873, 32
    %v1957 = vpop.permute.xlu0 %1956
    %1958 = vrot.lane.b32.xlu0 %v1874, 32
    %v1959 = vpop.permute.xlu0 %1958
    %1960 = vrot.lane.b32.xlu0 %v1875, 32
    %v1961 = vpop.permute.xlu0 %1960
    %1970 = vrot.lane.b32.xlu0 %v1946, 64
    %v1971 = vpop.permute.xlu0 %1970
    %1972 = vrot.lane.b32.xlu0 %v1947, 64
    %v1973 = vpop.permute.xlu0 %1972
    %1974 = vrot.lane.b32.xlu0 %v1948, 64
    %v1975 = vpop.permute.xlu0 %1974
    %1976 = vrot.lane.b32.xlu0 %v1949, 64
    %v1977 = vpop.permute.xlu0 %1976
    %v1982 = vsel %vm333, %v1909, %v1955
    %v1983 = vsel %vm333, %v1910, %v1957
    %v1984 = vsel %vm333, %v1911, %v1959
    %v1985 = vsel %vm333, %v1912, %v1961
    %vm1986 = vcmask 523264
    %v1987 = vsel %vm1986, %v1982, %v1971
    %v1988 = vsel %vm1986, %v1983, %v1973
    %v1989 = vsel %vm1986, %v1984, %v1975
    %v1990 = vsel %vm1986, %v1985, %v1977
    %v1991 = vld [vmem:[#allocation8] sm:$0xff]
    %v1992 = vld [vmem:[#allocation8 + $0x8] sm:$0xff]
    %v1993 = vld [vmem:[#allocation8 + $0x10] sm:$0xff]
    %v1994 = vld [vmem:[#allocation8 + $0x18] sm:$0xff]
    %v1995 = vld [vmem:[#allocation8 + $0x20] sm:$0xff]
    %v1996 = vld [vmem:[#allocation8 + $0x28] sm:$0xff]
    %v1997 = vld [vmem:[#allocation8 + $0x30] sm:$0xff]
    %v1998 = vld [vmem:[#allocation8 + $0x38] sm:$0xff]
    %v1999 = vld [vmem:[#allocation8 + $0x40] sm:$0xff]
    %v2000 = vld [vmem:[#allocation8 + $0x48] sm:$0xff]
    %v2001 = vld [vmem:[#allocation8 + $0x50] sm:$0xff]
    %v2002 = vld [vmem:[#allocation8 + $0x58] sm:$0xff]
    %v2003 = vld [vmem:[#allocation10] sm:$0x1]
    %v2005 = vperm.slane %v2003, 0
    %vm2007 = vcmask 785408
    %v2009 = vsel %vm2007, %v1987, 0
    %v2012 = vsel %vm2007, %v1988, 0
    %v2015 = vsel %vm2007, %v1989, 0
    %v2018 = vsel %vm2007, %v1990, 0
    %2020 = vmatpush.msra.mxu0 0.0
    %2021 = vmatpush.msra.mxu0 0.0
    %2022 = vmatpush.msra.mxu0 0.0
    %2023 = vmatpush.msra.mxu0 0.0
    %2024 = vmatpush.msra.mxu0 %v2002
    %2025 = vmatpush.msra.mxu0 %v2001
    %2026 = vmatpush.msra.mxu0 %v2000
    %2027 = vmatpush.msra.mxu0 %v1999
    %2028 = vmatpush.msra.mxu0 %v1998
    %2029 = vmatpush.msra.mxu0 %v1997
    %2030 = vmatpush.msra.mxu0 %v1996
    %2031 = vmatpush.msra.mxu0 %v1995
    %2032 = vmatpush.msra.mxu0 %v1994
    %2033 = vmatpush.msra.mxu0 %v1993
    %2034 = vmatpush.msra.mxu0 %v1992
    %2035 = vmatpush.msra.mxu0 %v1991
    %2036 = vmatmul.f32.gmra.mxu0 %v2009
    %v2037 = vpop.f32.mrf.mxu0
    %v2038 = vadd.f32 %v2005, %v2037
    %2039 = vmatmul.f32.gmra.mxu0 %v2012
    %v2040 = vpop.f32.mrf.mxu0
    %v2041 = vadd.f32 %v2005, %v2040
    %2042 = vmatmul.f32.gmra.mxu0 %v2015
    %v2043 = vpop.f32.mrf.mxu0
    %v2044 = vadd.f32 %v2005, %v2043
    %2045 = vmatmul.f32.gmra.mxu0 %v2018
    %v2046 = vpop.f32.mrf.mxu0
    %v2047 = vadd.f32 %v2005, %v2046
    %2048 = vdwg.mxu0
    %v2049 = vmax.f32 %v2038, 0.0
    %v2050 = vmax.f32 %v2041, 0.0
    %v2051 = vmax.f32 %v2044, 0.0
    %v2052 = vmax.f32 %v2047, 0.0
    %v2053 = vmul.f32 %v2049, %v291
    %v2054 = vmul.f32 %v2050, %v296
    %v2055 = vmul.f32 %v2051, %v301
    %v2056 = vmul.f32 %v2052, %v306
    %v2057 = vrot.slane %v2053, 7
    %v2058 = vrot.slane %v2054, 7
    %v2059 = vrot.slane %v2055, 7
    %v2060 = vrot.slane %v2056, 7
    %v2061 = vsel %vm1880, %v2059, %v2060
    %v2062 = vsel %vm1880, %v2058, %v2059
    %v2063 = vsel %vm1880, %v2057, %v2058
    %v2064 = vsel %vm1880, %v2060, %v2057
    %v2065 = vsel %vm1905, %v2064, 0.0
    %v2066 = vsel %vm1906, %v2063, 0.0
    %v2067 = vsel %vm1907, %v2062, 0.0
    %v2068 = vsel %vm1908, %v2061, 0.0
    %v2069 = vrot.slane %v2053, 1
    %v2070 = vrot.slane %v2054, 1
    %v2071 = vrot.slane %v2055, 1
    %v2072 = vrot.slane %v2056, 1
    %v2073 = vsel %vm1917, %v2071, %v2072
    %v2074 = vsel %vm1917, %v2070, %v2071
    %v2075 = vsel %vm1917, %v2069, %v2070
    %v2076 = vsel %vm1917, %v2072, %v2069
    %v2077 = vsel %vm1942, %v2075, 0.0
    %v2078 = vsel %vm1943, %v2074, 0.0
    %v2079 = vsel %vm1944, %v2073, 0.0
    %v2080 = vsel %vm1945, %v2076, 0.0
    %2085 = vrot.lane.b32.xlu0 %v2053, 64
    %v2086 = vpop.permute.xlu0 %2085
    %2087 = vrot.lane.b32.xlu0 %v2054, 64
    %v2088 = vpop.permute.xlu0 %2087
    %2089 = vrot.lane.b32.xlu0 %v2055, 64
    %v2090 = vpop.permute.xlu0 %2089
    %2091 = vrot.lane.b32.xlu0 %v2056, 64
    %v2092 = vpop.permute.xlu0 %2091
    %v2097 = vsel %vm1986, %v2065, %v2086
    %v2098 = vsel %vm1986, %v2066, %v2088
    %v2099 = vsel %vm1986, %v2067, %v2090
    %v2100 = vsel %vm1986, %v2068, %v2092
    %v2101 = vld [vmem:[#allocation11] sm:$0xff]
    %v2102 = vld [vmem:[#allocation11 + $0x8] sm:$0xff]
    %v2103 = vld [vmem:[#allocation11 + $0x10] sm:$0xff]
    %v2104 = vld [vmem:[#allocation11 + $0x18] sm:$0xff]
    %v2105 = vld [vmem:[#allocation11 + $0x20] sm:$0xff]
    %v2106 = vld [vmem:[#allocation11 + $0x28] sm:$0xff]
    %v2107 = vld [vmem:[#allocation11 + $0x30] sm:$0xff]
    %v2108 = vld [vmem:[#allocation11 + $0x38] sm:$0xff]
    %v2109 = vld [vmem:[#allocation11 + $0x40] sm:$0xff]
    %v2110 = vld [vmem:[#allocation11 + $0x48] sm:$0xff]
    %v2111 = vld [vmem:[#allocation11 + $0x50] sm:$0xff]
    %v2112 = vld [vmem:[#allocation11 + $0x58] sm:$0xff]
    %v2113 = vld [vmem:[#allocation11 + $0x60] sm:$0xff]
    %v2114 = vld [vmem:[#allocation11 + $0x68] sm:$0xff]
    %v2115 = vld [vmem:[#allocation11 + $0x70] sm:$0xff]
    %v2116 = vld [vmem:[#allocation11 + $0x78] sm:$0xff]
    %v2117 = vld [vmem:[#allocation11 + $0x80] sm:$0xff]
    %v2118 = vld [vmem:[#allocation11 + $0x88] sm:$0xff]
    %v2119 = vld [vmem:[#allocation11 + $0x90] sm:$0xff]
    %v2120 = vld [vmem:[#allocation11 + $0x98] sm:$0xff]
    %v2121 = vld [vmem:[#allocation11 + $0xa0] sm:$0xff]
    %v2122 = vld [vmem:[#allocation11 + $0xa8] sm:$0xff]
    %v2123 = vld [vmem:[#allocation11 + $0xb0] sm:$0xff]
    %v2124 = vld [vmem:[#allocation11 + $0xb8] sm:$0xff]
    %v2125 = vld [vmem:[#allocation13] sm:$0x1]
    %v2127 = vperm.slane %v2125, 0
    %v2130 = vsel %vm1986, %v2077, 0
    %v2133 = vsel %vm1986, %v2078, 0
    %v2136 = vsel %vm1986, %v2079, 0
    %v2139 = vsel %vm1986, %v2080, 0
    %2141 = vmatpush.msra.mxu0 %v2116
    %2142 = vmatpush.msra.mxu0 %v2115
    %2143 = vmatpush.msra.mxu0 %v2114
    %2144 = vmatpush.msra.mxu0 %v2113
    %2145 = vmatpush.msra.mxu0 %v2112
    %2146 = vmatpush.msra.mxu0 %v2111
    %2147 = vmatpush.msra.mxu0 %v2110
    %2148 = vmatpush.msra.mxu0 %v2109
    %2149 = vmatpush.msra.mxu0 %v2108
    %2150 = vmatpush.msra.mxu0 %v2107
    %2151 = vmatpush.msra.mxu0 %v2106
    %2152 = vmatpush.msra.mxu0 %v2105
    %2153 = vmatpush.msra.mxu0 %v2104
    %2154 = vmatpush.msra.mxu0 %v2103
    %2155 = vmatpush.msra.mxu0 %v2102
    %2156 = vmatpush.msra.mxu0 %v2101
    %2157 = vmatmul.f32.gmra.mxu0 %v2097
    %v2158 = vpop.f32.mrf.mxu0
    %v2159 = vadd.f32 %v2127, %v2158
    %2160 = vmatmul.f32.gmra.mxu0 %v2098
    %v2161 = vpop.f32.mrf.mxu0
    %v2162 = vadd.f32 %v2127, %v2161
    %2163 = vmatmul.f32.gmra.mxu0 %v2099
    %v2164 = vpop.f32.mrf.mxu0
    %v2165 = vadd.f32 %v2127, %v2164
    %2166 = vmatmul.f32.gmra.mxu0 %v2100
    %v2167 = vpop.f32.mrf.mxu0
    %v2168 = vadd.f32 %v2127, %v2167
    %2169 = vdwg.mxu0
    %2170 = vmatpush.msra.mxu0 0.0
    %2171 = vmatpush.msra.mxu0 0.0
    %2172 = vmatpush.msra.mxu0 0.0
    %2173 = vmatpush.msra.mxu0 0.0
    %2174 = vmatpush.msra.mxu0 0.0
    %2175 = vmatpush.msra.mxu0 0.0
    %2176 = vmatpush.msra.mxu0 0.0
    %2177 = vmatpush.msra.mxu0 0.0
    %2178 = vmatpush.msra.mxu0 %v2124
    %2179 = vmatpush.msra.mxu0 %v2123
    %2180 = vmatpush.msra.mxu0 %v2122
    %2181 = vmatpush.msra.mxu0 %v2121
    %2182 = vmatpush.msra.mxu0 %v2120
    %2183 = vmatpush.msra.mxu0 %v2119
    %2184 = vmatpush.msra.mxu0 %v2118
    %2185 = vmatpush.msra.mxu0 %v2117
    %2186 = vmatmul.f32.gmra.mxu0 %v2130
    %v2187 = vpop.f32.mrf.mxu0
    %v2188 = vadd.f32 %v2159, %v2187
    %2189 = vmatmul.f32.gmra.mxu0 %v2133
    %v2190 = vpop.f32.mrf.mxu0
    %v2191 = vadd.f32 %v2162, %v2190
    %2192 = vmatmul.f32.gmra.mxu0 %v2136
    %v2193 = vpop.f32.mrf.mxu0
    %v2194 = vadd.f32 %v2165, %v2193
    %2195 = vmatmul.f32.gmra.mxu0 %v2139
    %v2196 = vpop.f32.mrf.mxu0
    %v2197 = vadd.f32 %v2168, %v2196
    %2198 = vdwg.mxu0
    %v2199 = vmul.f32 %v2188, %v291
    %v2200 = vmul.f32 %v2191, %v296
    %v2201 = vmul.f32 %v2194, %v301
    %v2202 = vmul.f32 %v2197, %v306
    %v2203 = vadd.f32 %v1868, %v2199
    %v2204 = vadd.f32 %v1869, %v2200
    %v2205 = vadd.f32 %v1870, %v2201
    %v2206 = vadd.f32 %v1871, %v2202
    %v2207 = vld [vmem:[%s16] sm:$0x1]
    %v2208 = vld [vmem:[%s17] sm:$0x1]
    %v2209 = vsel %vm333, %v2203, 0.0
    %2210 = vadd.xlane.f32.xlu0 %v2209
    %v2211 = vpop.xlane.xlu0 %2210
    %v2212 = vsel %vm333, %v2204, 0.0
    %2213 = vadd.xlane.f32.xlu0 %v2212
    %v2214 = vpop.xlane.xlu0 %2213
    %v2215 = vsel %vm333, %v2205, 0.0
    %2216 = vadd.xlane.f32.xlu0 %v2215
    %v2217 = vpop.xlane.xlu0 %2216
    %v2218 = vsel %vm333, %v2206, 0.0
    %2219 = vadd.xlane.f32.xlu0 %v2218
    %v2220 = vpop.xlane.xlu0 %2219
    %v2221 = vmul.f32 %v2211, %v1781
    %v2222 = vmul.f32 %v2214, %v1781
    %v2223 = vmul.f32 %v2217, %v1781
    %v2224 = vmul.f32 %v2220, %v1781
    %v2225 = vsub.f32 %v2203, %v2221
    %v2226 = vsub.f32 %v2204, %v2222
    %v2227 = vsub.f32 %v2205, %v2223
    %v2228 = vsub.f32 %v2206, %v2224
    %v2229 = vmul.f32 %v2225, %v2225
    %v2230 = vmul.f32 %v2226, %v2226
    %v2231 = vmul.f32 %v2227, %v2227
    %v2232 = vmul.f32 %v2228, %v2228
    %v2233 = vsel %vm333, %v2229, 0.0
    %2234 = vadd.xlane.f32.xlu0 %v2233
    %v2235 = vpop.xlane.xlu0 %2234
    %v2236 = vsel %vm333, %v2230, 0.0
    %2237 = vadd.xlane.f32.xlu0 %v2236
    %v2238 = vpop.xlane.xlu0 %2237
    %v2239 = vsel %vm333, %v2231, 0.0
    %2240 = vadd.xlane.f32.xlu0 %v2239
    %v2241 = vpop.xlane.xlu0 %2240
    %v2242 = vsel %vm333, %v2232, 0.0
    %2243 = vadd.xlane.f32.xlu0 %v2242
    %v2244 = vpop.xlane.xlu0 %2243
    %v2245 = vmul.f32 %v2235, %v1781
    %v2246 = vmul.f32 %v2238, %v1781
    %v2247 = vmul.f32 %v2241, %v1781
    %v2248 = vmul.f32 %v2244, %v1781
    %v2249 = vadd.f32 %v2245, 1e-05
    %v2250 = vadd.f32 %v2246, 1e-05
    %v2251 = vadd.f32 %v2247, 1e-05
    %v2252 = vadd.f32 %v2248, 1e-05
    %v2253 = vrsqrt.pop %v2249
    %v2254 = vmul.f32 %v2253, %v2249
    %v2255 = vmul.f32 %v2254, %v2253
    %v2256 = vmul.f32 0.5, %v2255
    %v2257 = vsub.f32 1.5, %v2256
    %v2258 = vmul.f32 %v2253, %v2257
    %vm2259 = vweird.f32 %v2249
    %vm2260 = vweird.f32 %v2253
    %vm2261 = vmor %vm2259, %vm2260
    %v2262 = vsel %vm2261, %v2253, %v2258
    %v2263 = vrsqrt.pop %v2250
    %v2264 = vmul.f32 %v2263, %v2250
    %v2265 = vmul.f32 %v2264, %v2263
    %v2266 = vmul.f32 0.5, %v2265
    %v2267 = vsub.f32 1.5, %v2266
    %v2268 = vmul.f32 %v2263, %v2267
    %vm2269 = vweird.f32 %v2250
    %vm2270 = vweird.f32 %v2263
    %vm2271 = vmor %vm2269, %vm2270
    %v2272 = vsel %vm2271, %v2263, %v2268
    %v2273 = vrsqrt.pop %v2251
    %v2274 = vmul.f32 %v2273, %v2251
    %v2275 = vmul.f32 %v2274, %v2273
    %v2276 = vmul.f32 0.5, %v2275
    %v2277 = vsub.f32 1.5, %v2276
    %v2278 = vmul.f32 %v2273, %v2277
    %vm2279 = vweird.f32 %v2251
    %vm2280 = vweird.f32 %v2273
    %vm2281 = vmor %vm2279, %vm2280
    %v2282 = vsel %vm2281, %v2273, %v2278
    %v2283 = vrsqrt.pop %v2252
    %v2284 = vmul.f32 %v2283, %v2252
    %v2285 = vmul.f32 %v2284, %v2283
    %v2286 = vmul.f32 0.5, %v2285
    %v2287 = vsub.f32 1.5, %v2286
    %v2288 = vmul.f32 %v2283, %v2287
    %vm2289 = vweird.f32 %v2252
    %vm2290 = vweird.f32 %v2283
    %vm2291 = vmor %vm2289, %vm2290
    %v2292 = vsel %vm2291, %v2283, %v2288
    %v2293 = vmul.f32 %v2225, %v2262
    %v2294 = vmul.f32 %v2226, %v2272
    %v2295 = vmul.f32 %v2227, %v2282
    %v2296 = vmul.f32 %v2228, %v2292
    %v2298 = vperm.slane %v2207, 0
    %v2300 = vmul.f32 %v2293, %v2298
    %v2301 = vmul.f32 %v2294, %v2298
    %v2302 = vmul.f32 %v2295, %v2298
    %v2303 = vmul.f32 %v2296, %v2298
    %v2305 = vperm.slane %v2208, 0
    %v2307 = vadd.f32 %v2300, %v2305
    %v2308 = vadd.f32 %v2301, %v2305
    %v2309 = vadd.f32 %v2302, %v2305
    %v2310 = vadd.f32 %v2303, %v2305
    %s2311 = scalar_lea.vmem %s4, 32
    %v2312 = vld [vmem:[%s2311] sm:$0xff]
    %v2313 = vld [vmem:[%s2311 + $0x8] sm:$0xff]
    %v2314 = vld [vmem:[%s2311 + $0x10] sm:$0xff]
    %v2315 = vld [vmem:[%s2311 + $0x18] sm:$0xff]
    %s2316 = scalar_lea.vmem %s5, 1
    %v2317 = vld [vmem:[%s2316] sm:$0x1]
    %v2319 = vperm.slane %v2317, 0
    %v2322 = vsel %vm333, %v2307, 0
    %v2325 = vsel %vm333, %v2308, 0
    %v2328 = vsel %vm333, %v2309, 0
    %v2331 = vsel %vm333, %v2310, 0
    %2333 = vmatpush.msra.mxu0 0.0
    %2334 = vmatpush.msra.mxu0 0.0
    %2335 = vmatpush.msra.mxu0 0.0
    %2336 = vmatpush.msra.mxu0 0.0
    %2337 = vmatpush.msra.mxu0 0.0
    %2338 = vmatpush.msra.mxu0 0.0
    %2339 = vmatpush.msra.mxu0 0.0
    %2340 = vmatpush.msra.mxu0 0.0
    %2341 = vmatpush.msra.mxu0 0.0
    %2342 = vmatpush.msra.mxu0 0.0
    %2343 = vmatpush.msra.mxu0 0.0
    %2344 = vmatpush.msra.mxu0 0.0
    %2345 = vmatpush.msra.mxu0 %v2315
    %2346 = vmatpush.msra.mxu0 %v2314
    %2347 = vmatpush.msra.mxu0 %v2313
    %2348 = vmatpush.msra.mxu0 %v2312
    %2349 = vmatmul.f32.gmra.mxu0 %v2322
    %v2350 = vpop.f32.mrf.mxu0
    %v2351 = vadd.f32 %v2319, %v2350
    %2352 = vmatmul.f32.gmra.mxu0 %v2325
    %v2353 = vpop.f32.mrf.mxu0
    %v2354 = vadd.f32 %v2319, %v2353
    %2355 = vmatmul.f32.gmra.mxu0 %v2328
    %v2356 = vpop.f32.mrf.mxu0
    %v2357 = vadd.f32 %v2319, %v2356
    %2358 = vmatmul.f32.gmra.mxu0 %v2331
    %v2359 = vpop.f32.mrf.mxu0
    %v2360 = vadd.f32 %v2319, %v2359
    %2361 = vdwg.mxu0
    %s2362 = scalar_lea.vmem [#allocation5], 16
    %v2363 = vld [vmem:[%s2362] sm:$0xff]
    %v2364 = vld [vmem:[%s2362 + $0x8] sm:$0xff]
    %s2365 = scalar_lea.vmem [#allocation7], 16
    %v2366 = vld [vmem:[%s2365] sm:$0xff]
    %v2367 = vld [vmem:[%s2365 + $0x8] sm:$0x1]
    %s2368 = scalar_lea.vmem [#allocation2], 32
    %v2369 = vld [vmem:[%s2368] sm:$0xff]
    %v2370 = vld [vmem:[%s2368 + $0x8] sm:$0xff]
    %v2371 = vld [vmem:[%s2368 + $0x10] sm:$0xff]
    %v2372 = vld [vmem:[%s2368 + $0x18] sm:$0xff]
    %v2374 = vsel %vm383, %v2351, 0
    %v2377 = vsel %vm383, %v2354, 0
    %v2380 = vsel %vm383, %v2357, 0
    %v2383 = vsel %vm383, %v2360, 0
    %2385 = vmatpush.msra.mxu0 0.0
    %2386 = vmatpush.msra.mxu0 0.0
    %2387 = vmatpush.msra.mxu0 0.0
    %2388 = vmatpush.msra.mxu0 0.0
    %2389 = vmatpush.msra.mxu0 0.0
    %2390 = vmatpush.msra.mxu0 0.0
    %2391 = vmatpush.msra.mxu0 0.0
    %2392 = vmatpush.msra.mxu0 0.0
    %2393 = vmatpush.msra.mxu0 0.0
    %2394 = vmatpush.msra.mxu0 0.0
    %2395 = vmatpush.msra.mxu0 0.0
    %2396 = vmatpush.msra.mxu0 0.0
    %2397 = vmatpush.msra.mxu0 0.0
    %2398 = vmatpush.msra.mxu0 0.0
    %2399 = vmatpush.msra.mxu0 %v2364
    %2400 = vmatpush.msra.mxu0 %v2363
    %2401 = vmatmul.f32.gmra.mxu0 %v2374
    %v2402 = vpop.f32.mrf.mxu0
    %v2403 = vadd.f32 0.0, %v2402
    %2404 = vmatmul.f32.gmra.mxu0 %v2377
    %v2405 = vpop.f32.mrf.mxu0
    %v2406 = vadd.f32 0.0, %v2405
    %2407 = vmatmul.f32.gmra.mxu0 %v2380
    %v2408 = vpop.f32.mrf.mxu0
    %v2409 = vadd.f32 0.0, %v2408
    %2410 = vmatmul.f32.gmra.mxu0 %v2383
    %v2411 = vpop.f32.mrf.mxu0
    %v2412 = vadd.f32 0.0, %v2411
    %2413 = vdwg.mxu0
    %2415 = vset.pattern.permute.xlu0 0
    %2416 = vperm.xlu0 %2415, %v2403
    %v2417 = vpop.permute.xlu0 %2416
    %2420 = vset.pattern.permute.xlu0 0
    %2421 = vperm.xlu0 %2420, %v2406
    %v2422 = vpop.permute.xlu0 %2421
    %2425 = vset.pattern.permute.xlu0 0
    %2426 = vperm.xlu0 %2425, %v2409
    %v2427 = vpop.permute.xlu0 %2426
    %2430 = vset.pattern.permute.xlu0 0
    %2431 = vperm.xlu0 %2430, %v2412
    %v2432 = vpop.permute.xlu0 %2431
    %v2434 = vsel %vm425, %v2417, 0.0
    %v2435 = vsel %vm426, %v2422, 0.0
    %v2436 = vsel %vm427, %v2427, 0.0
    %v2437 = vsel %vm428, %v2432, 0.0
    %2438 = vrot.lane.b32.xlu0 %v2351, 96
    %v2439 = vpop.permute.xlu0 %2438
    %2440 = vrot.lane.b32.xlu0 %v2354, 96
    %v2441 = vpop.permute.xlu0 %2440
    %2442 = vrot.lane.b32.xlu0 %v2357, 96
    %v2443 = vpop.permute.xlu0 %2442
    %2444 = vrot.lane.b32.xlu0 %v2360, 96
    %v2445 = vpop.permute.xlu0 %2444
    %v2446 = vsel %vm383, %v2439, 0
    %v2448 = vsel %vm383, %v2441, 0
    %v2450 = vsel %vm383, %v2443, 0
    %v2452 = vsel %vm383, %v2445, 0
    %2454 = vmatpush.xpose.msra.mxu0 0.0
    %2455 = vmatpush.xpose.msra.mxu0 0.0
    %2456 = vmatpush.xpose.msra.mxu0 0.0
    %2457 = vmatpush.xpose.msra.mxu0 0.0
    %2458 = vmatpush.xpose.msra.mxu0 0.0
    %2459 = vmatpush.xpose.msra.mxu0 0.0
    %2460 = vmatpush.xpose.msra.mxu0 0.0
    %2461 = vmatpush.xpose.msra.mxu0 0.0
    %2462 = vmatpush.xpose.msra.mxu0 0.0
    %2463 = vmatpush.xpose.msra.mxu0 0.0
    %2464 = vmatpush.xpose.msra.mxu0 0.0
    %2465 = vmatpush.xpose.msra.mxu0 0.0
    %2466 = vmatpush.xpose.msra.mxu0 %v2452
    %2467 = vmatpush.xpose.msra.mxu0 %v2450
    %2468 = vmatpush.xpose.msra.mxu0 %v2448
    %2469 = vmatpush.xpose.msra.mxu0 %v2446
    %2470 = vmatmul.f32.gmra.mxu0 %v2374
    %v2471 = vpop.f32.mrf.mxu0
    %v2472 = vadd.f32 %v2434, %v2471
    %2473 = vmatmul.f32.gmra.mxu0 %v2377
    %v2474 = vpop.f32.mrf.mxu0
    %v2475 = vadd.f32 %v2435, %v2474
    %2476 = vmatmul.f32.gmra.mxu0 %v2380
    %v2477 = vpop.f32.mrf.mxu0
    %v2478 = vadd.f32 %v2436, %v2477
    %2479 = vmatmul.f32.gmra.mxu0 %v2383
    %v2480 = vpop.f32.mrf.mxu0
    %v2481 = vadd.f32 %v2437, %v2480
    %2482 = vdwg.mxu0
    %2483 = vset.pattern.permute.xlu0 1
    %2484 = vperm.xlu0 %2483, %v2403
    %v2485 = vpop.permute.xlu0 %2484
    %2487 = vset.pattern.permute.xlu0 1
    %2488 = vperm.xlu0 %2487, %v2406
    %v2489 = vpop.permute.xlu0 %2488
    %2491 = vset.pattern.permute.xlu0 1
    %2492 = vperm.xlu0 %2491, %v2409
    %v2493 = vpop.permute.xlu0 %2492
    %2495 = vset.pattern.permute.xlu0 1
    %2496 = vperm.xlu0 %2495, %v2412
    %v2497 = vpop.permute.xlu0 %2496
    %v2499 = vsel %vm498, %v2485, 0.0
    %v2500 = vsel %vm499, %v2489, 0.0
    %v2501 = vsel %vm500, %v2493, 0.0
    %v2502 = vsel %vm501, %v2497, 0.0
    %v2503 = vadd.f32 %v2472, %v2499
    %v2504 = vadd.f32 %v2475, %v2500
    %v2505 = vadd.f32 %v2478, %v2501
    %v2506 = vadd.f32 %v2481, %v2502
    %2507 = vset.pattern.permute.xlu0 2
    %2508 = vperm.xlu0 %2507, %v2403
    %v2509 = vpop.permute.xlu0 %2508
    %2511 = vset.pattern.permute.xlu0 2
    %2512 = vperm.xlu0 %2511, %v2406
    %v2513 = vpop.permute.xlu0 %2512
    %2515 = vset.pattern.permute.xlu0 2
    %2516 = vperm.xlu0 %2515, %v2409
    %v2517 = vpop.permute.xlu0 %2516
    %2519 = vset.pattern.permute.xlu0 2
    %2520 = vperm.xlu0 %2519, %v2412
    %v2521 = vpop.permute.xlu0 %2520
    %v2523 = vsel %vm526, %v2509, 0.0
    %v2524 = vsel %vm527, %v2513, 0.0
    %v2525 = vsel %vm528, %v2517, 0.0
    %v2526 = vsel %vm529, %v2521, 0.0
    %v2527 = vadd.f32 %v2503, %v2523
    %v2528 = vadd.f32 %v2504, %v2524
    %v2529 = vadd.f32 %v2505, %v2525
    %v2530 = vadd.f32 %v2506, %v2526
    %2531 = vset.pattern.permute.xlu0 3
    %2532 = vperm.xlu0 %2531, %v2403
    %v2533 = vpop.permute.xlu0 %2532
    %2535 = vset.pattern.permute.xlu0 3
    %2536 = vperm.xlu0 %2535, %v2406
    %v2537 = vpop.permute.xlu0 %2536
    %2539 = vset.pattern.permute.xlu0 3
    %2540 = vperm.xlu0 %2539, %v2409
    %v2541 = vpop.permute.xlu0 %2540
    %2543 = vset.pattern.permute.xlu0 3
    %2544 = vperm.xlu0 %2543, %v2412
    %v2545 = vpop.permute.xlu0 %2544
    %v2547 = vsel %vm554, %v2533, 0.0
    %v2548 = vsel %vm555, %v2537, 0.0
    %v2549 = vsel %vm556, %v2541, 0.0
    %v2550 = vsel %vm557, %v2545, 0.0
    %v2551 = vadd.f32 %v2527, %v2547
    %v2552 = vadd.f32 %v2528, %v2548
    %v2553 = vadd.f32 %v2529, %v2549
    %v2554 = vadd.f32 %v2530, %v2550
    %2555 = vset.pattern.permute.xlu0 4
    %2556 = vperm.xlu0 %2555, %v2403
    %v2557 = vpop.permute.xlu0 %2556
    %2559 = vset.pattern.permute.xlu0 4
    %2560 = vperm.xlu0 %2559, %v2406
    %v2561 = vpop.permute.xlu0 %2560
    %2563 = vset.pattern.permute.xlu0 4
    %2564 = vperm.xlu0 %2563, %v2409
    %v2565 = vpop.permute.xlu0 %2564
    %2567 = vset.pattern.permute.xlu0 4
    %2568 = vperm.xlu0 %2567, %v2412
    %v2569 = vpop.permute.xlu0 %2568
    %v2571 = vsel %vm582, %v2557, 0.0
    %v2572 = vsel %vm583, %v2561, 0.0
    %v2573 = vsel %vm584, %v2565, 0.0
    %v2574 = vsel %vm585, %v2569, 0.0
    %v2575 = vadd.f32 %v2551, %v2571
    %v2576 = vadd.f32 %v2552, %v2572
    %v2577 = vadd.f32 %v2553, %v2573
    %v2578 = vadd.f32 %v2554, %v2574
    %2579 = vset.pattern.permute.xlu0 5
    %2580 = vperm.xlu0 %2579, %v2403
    %v2581 = vpop.permute.xlu0 %2580
    %2583 = vset.pattern.permute.xlu0 5
    %2584 = vperm.xlu0 %2583, %v2406
    %v2585 = vpop.permute.xlu0 %2584
    %2587 = vset.pattern.permute.xlu0 5
    %2588 = vperm.xlu0 %2587, %v2409
    %v2589 = vpop.permute.xlu0 %2588
    %2591 = vset.pattern.permute.xlu0 5
    %2592 = vperm.xlu0 %2591, %v2412
    %v2593 = vpop.permute.xlu0 %2592
    %v2595 = vsel %vm610, %v2581, 0.0
    %v2596 = vsel %vm611, %v2585, 0.0
    %v2597 = vsel %vm612, %v2589, 0.0
    %v2598 = vsel %vm613, %v2593, 0.0
    %v2599 = vadd.f32 %v2575, %v2595
    %v2600 = vadd.f32 %v2576, %v2596
    %v2601 = vadd.f32 %v2577, %v2597
    %v2602 = vadd.f32 %v2578, %v2598
    %2603 = vset.pattern.permute.xlu0 6
    %2604 = vperm.xlu0 %2603, %v2403
    %v2605 = vpop.permute.xlu0 %2604
    %2607 = vset.pattern.permute.xlu0 6
    %2608 = vperm.xlu0 %2607, %v2406
    %v2609 = vpop.permute.xlu0 %2608
    %2611 = vset.pattern.permute.xlu0 6
    %2612 = vperm.xlu0 %2611, %v2409
    %v2613 = vpop.permute.xlu0 %2612
    %2615 = vset.pattern.permute.xlu0 6
    %2616 = vperm.xlu0 %2615, %v2412
    %v2617 = vpop.permute.xlu0 %2616
    %v2619 = vsel %vm638, %v2605, 0.0
    %v2620 = vsel %vm639, %v2609, 0.0
    %v2621 = vsel %vm640, %v2613, 0.0
    %v2622 = vsel %vm641, %v2617, 0.0
    %v2623 = vadd.f32 %v2599, %v2619
    %v2624 = vadd.f32 %v2600, %v2620
    %v2625 = vadd.f32 %v2601, %v2621
    %v2626 = vadd.f32 %v2602, %v2622
    %2627 = vset.pattern.permute.xlu0 7
    %2628 = vperm.xlu0 %2627, %v2403
    %v2629 = vpop.permute.xlu0 %2628
    %2631 = vset.pattern.permute.xlu0 7
    %2632 = vperm.xlu0 %2631, %v2406
    %v2633 = vpop.permute.xlu0 %2632
    %2635 = vset.pattern.permute.xlu0 7
    %2636 = vperm.xlu0 %2635, %v2409
    %v2637 = vpop.permute.xlu0 %2636
    %2639 = vset.pattern.permute.xlu0 7
    %2640 = vperm.xlu0 %2639, %v2412
    %v2641 = vpop.permute.xlu0 %2640
    %v2643 = vsel %vm666, %v2629, 0.0
    %v2644 = vsel %vm667, %v2633, 0.0
    %v2645 = vsel %vm668, %v2637, 0.0
    %v2646 = vsel %vm669, %v2641, 0.0
    %v2647 = vadd.f32 %v2623, %v2643
    %v2648 = vadd.f32 %v2624, %v2644
    %v2649 = vadd.f32 %v2625, %v2645
    %v2650 = vadd.f32 %v2626, %v2646
    %2651 = vset.pattern.permute.xlu0 8
    %2652 = vperm.xlu0 %2651, %v2403
    %v2653 = vpop.permute.xlu0 %2652
    %2655 = vset.pattern.permute.xlu0 8
    %2656 = vperm.xlu0 %2655, %v2406
    %v2657 = vpop.permute.xlu0 %2656
    %2659 = vset.pattern.permute.xlu0 8
    %2660 = vperm.xlu0 %2659, %v2409
    %v2661 = vpop.permute.xlu0 %2660
    %2663 = vset.pattern.permute.xlu0 8
    %2664 = vperm.xlu0 %2663, %v2412
    %v2665 = vpop.permute.xlu0 %2664
    %v2667 = vsel %vm694, %v2653, 0.0
    %v2668 = vsel %vm695, %v2657, 0.0
    %v2669 = vsel %vm696, %v2661, 0.0
    %v2670 = vsel %vm697, %v2665, 0.0
    %v2671 = vadd.f32 %v2647, %v2667
    %v2672 = vadd.f32 %v2648, %v2668
    %v2673 = vadd.f32 %v2649, %v2669
    %v2674 = vadd.f32 %v2650, %v2670
    %v2675 = vsel %vm722, %v2671, -10000.0
    %v2676 = vsel %vm723, %v2672, -10000.0
    %v2677 = vsel %vm724, %v2673, -10000.0
    %v2678 = vsel %vm725, %v2674, -10000.0
    %v2679 = vsel %vm333, %v2675, -inf
    %2680 = vmax.xlane.f32.xlu0 %v2679
    %v2681 = vpop.xlane.xlu0 %2680
    %v2682 = vsel %vm333, %v2676, -inf
    %2683 = vmax.xlane.f32.xlu0 %v2682
    %v2684 = vpop.xlane.xlu0 %2683
    %v2685 = vsel %vm333, %v2677, -inf
    %2686 = vmax.xlane.f32.xlu0 %v2685
    %v2687 = vpop.xlane.xlu0 %2686
    %v2688 = vsel %vm333, %v2678, -inf
    %2689 = vmax.xlane.f32.xlu0 %v2688
    %v2690 = vpop.xlane.xlu0 %2689
    %v2691 = vsub.f32 %v2675, %v2681
    %v2692 = vsub.f32 %v2676, %v2684
    %v2693 = vsub.f32 %v2677, %v2687
    %v2694 = vsub.f32 %v2678, %v2690
    %v2695 = vmul.f32 %v2691, 1.442695
    %v2696 = vpow.pop %v2695
    %v2697 = vmul.f32 %v2692, 1.442695
    %v2698 = vpow.pop %v2697
    %v2699 = vmul.f32 %v2693, 1.442695
    %v2700 = vpow.pop %v2699
    %v2701 = vmul.f32 %v2694, 1.442695
    %v2702 = vpow.pop %v2701
    %v2703 = vsel %vm333, %v2696, 0.0
    %2704 = vadd.xlane.f32.xlu0 %v2703
    %v2705 = vpop.xlane.xlu0 %2704
    %v2706 = vsel %vm333, %v2698, 0.0
    %2707 = vadd.xlane.f32.xlu0 %v2706
    %v2708 = vpop.xlane.xlu0 %2707
    %v2709 = vsel %vm333, %v2700, 0.0
    %2710 = vadd.xlane.f32.xlu0 %v2709
    %v2711 = vpop.xlane.xlu0 %2710
    %v2712 = vsel %vm333, %v2702, 0.0
    %2713 = vadd.xlane.f32.xlu0 %v2712
    %v2714 = vpop.xlane.xlu0 %2713
    %v2715 = vrcp.pop %v2705
    %v2716 = vrcp.pop %v2708
    %v2717 = vrcp.pop %v2711
    %v2718 = vrcp.pop %v2714
    %v2719 = vmul.f32 %v2696, %v2715
    %v2720 = vmul.f32 %v2698, %v2716
    %v2721 = vmul.f32 %v2700, %v2717
    %v2722 = vmul.f32 %v2702, %v2718
    %v2723 = vsel %vm425, %v2719, 0.0
    %v2724 = vsel %vm426, %v2720, 0.0
    %v2725 = vsel %vm427, %v2721, 0.0
    %v2726 = vsel %vm428, %v2722, 0.0
    %v2727 = vsel %vm333, %v2723, 0.0
    %2728 = vadd.xlane.f32.xlu0 %v2727
    %v2729 = vpop.xlane.xlu0 %2728
    %v2730 = vsel %vm333, %v2724, 0.0
    %2731 = vadd.xlane.f32.xlu0 %v2730
    %v2732 = vpop.xlane.xlu0 %2731
    %v2733 = vsel %vm333, %v2725, 0.0
    %2734 = vadd.xlane.f32.xlu0 %v2733
    %v2735 = vpop.xlane.xlu0 %2734
    %v2736 = vsel %vm333, %v2726, 0.0
    %2737 = vadd.xlane.f32.xlu0 %v2736
    %v2738 = vpop.xlane.xlu0 %2737
    %v2739 = vperm.slane %v2366, 0
    %v2740 = vmul.f32 %v2729, %v2739
    %v2741 = vmul.f32 %v2732, %v2739
    %v2742 = vmul.f32 %v2735, %v2739
    %v2743 = vmul.f32 %v2738, %v2739
    %2744 = vrot.lane.b32.xlu0 %v2351, 64
    %v2745 = vpop.permute.xlu0 %2744
    %2746 = vrot.lane.b32.xlu0 %v2354, 64
    %v2747 = vpop.permute.xlu0 %2746
    %2748 = vrot.lane.b32.xlu0 %v2357, 64
    %v2749 = vpop.permute.xlu0 %2748
    %2750 = vrot.lane.b32.xlu0 %v2360, 64
    %v2751 = vpop.permute.xlu0 %2750
    %v2757 = vsel %vm333, %v2719, 0
    %v2760 = vsel %vm333, %v2720, 0
    %v2763 = vsel %vm333, %v2721, 0
    %v2766 = vsel %vm333, %v2722, 0
    %2768 = vmatpush.msra.mxu0 0.0
    %2769 = vmatpush.msra.mxu0 0.0
    %2770 = vmatpush.msra.mxu0 0.0
    %2771 = vmatpush.msra.mxu0 0.0
    %2772 = vmatpush.msra.mxu0 0.0
    %2773 = vmatpush.msra.mxu0 0.0
    %2774 = vmatpush.msra.mxu0 0.0
    %2775 = vmatpush.msra.mxu0 0.0
    %2776 = vmatpush.msra.mxu0 0.0
    %2777 = vmatpush.msra.mxu0 0.0
    %2778 = vmatpush.msra.mxu0 0.0
    %2779 = vmatpush.msra.mxu0 0.0
    %2780 = vmatpush.msra.mxu0 %v2751
    %2781 = vmatpush.msra.mxu0 %v2749
    %2782 = vmatpush.msra.mxu0 %v2747
    %2783 = vmatpush.msra.mxu0 %v2745
    %2784 = vmatmul.f32.gmra.mxu0 %v2757
    %v2785 = vpop.f32.mrf.mxu0
    %v2786 = vadd.f32 %v2740, %v2785
    %2787 = vmatmul.f32.gmra.mxu0 %v2760
    %v2788 = vpop.f32.mrf.mxu0
    %v2789 = vadd.f32 %v2741, %v2788
    %2790 = vmatmul.f32.gmra.mxu0 %v2763
    %v2791 = vpop.f32.mrf.mxu0
    %v2792 = vadd.f32 %v2742, %v2791
    %2793 = vmatmul.f32.gmra.mxu0 %v2766
    %v2794 = vpop.f32.mrf.mxu0
    %v2795 = vadd.f32 %v2743, %v2794
    %2796 = vdwg.mxu0
    %v2797 = vsel %vm498, %v2719, 0.0
    %v2798 = vsel %vm499, %v2720, 0.0
    %v2799 = vsel %vm500, %v2721, 0.0
    %v2800 = vsel %vm501, %v2722, 0.0
    %v2801 = vsel %vm333, %v2797, 0.0
    %2802 = vadd.xlane.f32.xlu0 %v2801
    %v2803 = vpop.xlane.xlu0 %2802
    %v2804 = vsel %vm333, %v2798, 0.0
    %2805 = vadd.xlane.f32.xlu0 %v2804
    %v2806 = vpop.xlane.xlu0 %2805
    %v2807 = vsel %vm333, %v2799, 0.0
    %2808 = vadd.xlane.f32.xlu0 %v2807
    %v2809 = vpop.xlane.xlu0 %2808
    %v2810 = vsel %vm333, %v2800, 0.0
    %2811 = vadd.xlane.f32.xlu0 %v2810
    %v2812 = vpop.xlane.xlu0 %2811
    %v2813 = vperm.slane %v2366, 1
    %v2814 = vmul.f32 %v2803, %v2813
    %v2815 = vmul.f32 %v2806, %v2813
    %v2816 = vmul.f32 %v2809, %v2813
    %v2817 = vmul.f32 %v2812, %v2813
    %v2818 = vadd.f32 %v2786, %v2814
    %v2819 = vadd.f32 %v2789, %v2815
    %v2820 = vadd.f32 %v2792, %v2816
    %v2821 = vadd.f32 %v2795, %v2817
    %v2822 = vsel %vm526, %v2719, 0.0
    %v2823 = vsel %vm527, %v2720, 0.0
    %v2824 = vsel %vm528, %v2721, 0.0
    %v2825 = vsel %vm529, %v2722, 0.0
    %v2826 = vsel %vm333, %v2822, 0.0
    %2827 = vadd.xlane.f32.xlu0 %v2826
    %v2828 = vpop.xlane.xlu0 %2827
    %v2829 = vsel %vm333, %v2823, 0.0
    %2830 = vadd.xlane.f32.xlu0 %v2829
    %v2831 = vpop.xlane.xlu0 %2830
    %v2832 = vsel %vm333, %v2824, 0.0
    %2833 = vadd.xlane.f32.xlu0 %v2832
    %v2834 = vpop.xlane.xlu0 %2833
    %v2835 = vsel %vm333, %v2825, 0.0
    %2836 = vadd.xlane.f32.xlu0 %v2835
    %v2837 = vpop.xlane.xlu0 %2836
    %v2838 = vperm.slane %v2366, 2
    %v2839 = vmul.f32 %v2828, %v2838
    %v2840 = vmul.f32 %v2831, %v2838
    %v2841 = vmul.f32 %v2834, %v2838
    %v2842 = vmul.f32 %v2837, %v2838
    %v2843 = vadd.f32 %v2818, %v2839
    %v2844 = vadd.f32 %v2819, %v2840
    %v2845 = vadd.f32 %v2820, %v2841
    %v2846 = vadd.f32 %v2821, %v2842
    %v2847 = vsel %vm554, %v2719, 0.0
    %v2848 = vsel %vm555, %v2720, 0.0
    %v2849 = vsel %vm556, %v2721, 0.0
    %v2850 = vsel %vm557, %v2722, 0.0
    %v2851 = vsel %vm333, %v2847, 0.0
    %2852 = vadd.xlane.f32.xlu0 %v2851
    %v2853 = vpop.xlane.xlu0 %2852
    %v2854 = vsel %vm333, %v2848, 0.0
    %2855 = vadd.xlane.f32.xlu0 %v2854
    %v2856 = vpop.xlane.xlu0 %2855
    %v2857 = vsel %vm333, %v2849, 0.0
    %2858 = vadd.xlane.f32.xlu0 %v2857
    %v2859 = vpop.xlane.xlu0 %2858
    %v2860 = vsel %vm333, %v2850, 0.0
    %2861 = vadd.xlane.f32.xlu0 %v2860
    %v2862 = vpop.xlane.xlu0 %2861
    %v2863 = vperm.slane %v2366, 3
    %v2864 = vmul.f32 %v2853, %v2863
    %v2865 = vmul.f32 %v2856, %v2863
    %v2866 = vmul.f32 %v2859, %v2863
    %v2867 = vmul.f32 %v2862, %v2863
    %v2868 = vadd.f32 %v2843, %v2864
    %v2869 = vadd.f32 %v2844, %v2865
    %v2870 = vadd.f32 %v2845, %v2866
    %v2871 = vadd.f32 %v2846, %v2867
    %v2872 = vsel %vm582, %v2719, 0.0
    %v2873 = vsel %vm583, %v2720, 0.0
    %v2874 = vsel %vm584, %v2721, 0.0
    %v2875 = vsel %vm585, %v2722, 0.0
    %v2876 = vsel %vm333, %v2872, 0.0
    %2877 = vadd.xlane.f32.xlu0 %v2876
    %v2878 = vpop.xlane.xlu0 %2877
    %v2879 = vsel %vm333, %v2873, 0.0
    %2880 = vadd.xlane.f32.xlu0 %v2879
    %v2881 = vpop.xlane.xlu0 %2880
    %v2882 = vsel %vm333, %v2874, 0.0
    %2883 = vadd.xlane.f32.xlu0 %v2882
    %v2884 = vpop.xlane.xlu0 %2883
    %v2885 = vsel %vm333, %v2875, 0.0
    %2886 = vadd.xlane.f32.xlu0 %v2885
    %v2887 = vpop.xlane.xlu0 %2886
    %v2888 = vperm.slane %v2366, 4
    %v2889 = vmul.f32 %v2878, %v2888
    %v2890 = vmul.f32 %v2881, %v2888
    %v2891 = vmul.f32 %v2884, %v2888
    %v2892 = vmul.f32 %v2887, %v2888
    %v2893 = vadd.f32 %v2868, %v2889
    %v2894 = vadd.f32 %v2869, %v2890
    %v2895 = vadd.f32 %v2870, %v2891
    %v2896 = vadd.f32 %v2871, %v2892
    %v2897 = vsel %vm610, %v2719, 0.0
    %v2898 = vsel %vm611, %v2720, 0.0
    %v2899 = vsel %vm612, %v2721, 0.0
    %v2900 = vsel %vm613, %v2722, 0.0
    %v2901 = vsel %vm333, %v2897, 0.0
    %2902 = vadd.xlane.f32.xlu0 %v2901
    %v2903 = vpop.xlane.xlu0 %2902
    %v2904 = vsel %vm333, %v2898, 0.0
    %2905 = vadd.xlane.f32.xlu0 %v2904
    %v2906 = vpop.xlane.xlu0 %2905
    %v2907 = vsel %vm333, %v2899, 0.0
    %2908 = vadd.xlane.f32.xlu0 %v2907
    %v2909 = vpop.xlane.xlu0 %2908
    %v2910 = vsel %vm333, %v2900, 0.0
    %2911 = vadd.xlane.f32.xlu0 %v2910
    %v2912 = vpop.xlane.xlu0 %2911
    %v2913 = vperm.slane %v2366, 5
    %v2914 = vmul.f32 %v2903, %v2913
    %v2915 = vmul.f32 %v2906, %v2913
    %v2916 = vmul.f32 %v2909, %v2913
    %v2917 = vmul.f32 %v2912, %v2913
    %v2918 = vadd.f32 %v2893, %v2914
    %v2919 = vadd.f32 %v2894, %v2915
    %v2920 = vadd.f32 %v2895, %v2916
    %v2921 = vadd.f32 %v2896, %v2917
    %v2922 = vsel %vm638, %v2719, 0.0
    %v2923 = vsel %vm639, %v2720, 0.0
    %v2924 = vsel %vm640, %v2721, 0.0
    %v2925 = vsel %vm641, %v2722, 0.0
    %v2926 = vsel %vm333, %v2922, 0.0
    %2927 = vadd.xlane.f32.xlu0 %v2926
    %v2928 = vpop.xlane.xlu0 %2927
    %v2929 = vsel %vm333, %v2923, 0.0
    %2930 = vadd.xlane.f32.xlu0 %v2929
    %v2931 = vpop.xlane.xlu0 %2930
    %v2932 = vsel %vm333, %v2924, 0.0
    %2933 = vadd.xlane.f32.xlu0 %v2932
    %v2934 = vpop.xlane.xlu0 %2933
    %v2935 = vsel %vm333, %v2925, 0.0
    %2936 = vadd.xlane.f32.xlu0 %v2935
    %v2937 = vpop.xlane.xlu0 %2936
    %v2938 = vperm.slane %v2366, 6
    %v2939 = vmul.f32 %v2928, %v2938
    %v2940 = vmul.f32 %v2931, %v2938
    %v2941 = vmul.f32 %v2934, %v2938
    %v2942 = vmul.f32 %v2937, %v2938
    %v2943 = vadd.f32 %v2918, %v2939
    %v2944 = vadd.f32 %v2919, %v2940
    %v2945 = vadd.f32 %v2920, %v2941
    %v2946 = vadd.f32 %v2921, %v2942
    %v2947 = vsel %vm666, %v2719, 0.0
    %v2948 = vsel %vm667, %v2720, 0.0
    %v2949 = vsel %vm668, %v2721, 0.0
    %v2950 = vsel %vm669, %v2722, 0.0
    %v2951 = vsel %vm333, %v2947, 0.0
    %2952 = vadd.xlane.f32.xlu0 %v2951
    %v2953 = vpop.xlane.xlu0 %2952
    %v2954 = vsel %vm333, %v2948, 0.0
    %2955 = vadd.xlane.f32.xlu0 %v2954
    %v2956 = vpop.xlane.xlu0 %2955
    %v2957 = vsel %vm333, %v2949, 0.0
    %2958 = vadd.xlane.f32.xlu0 %v2957
    %v2959 = vpop.xlane.xlu0 %2958
    %v2960 = vsel %vm333, %v2950, 0.0
    %2961 = vadd.xlane.f32.xlu0 %v2960
    %v2962 = vpop.xlane.xlu0 %2961
    %v2963 = vperm.slane %v2366, 7
    %v2964 = vmul.f32 %v2953, %v2963
    %v2965 = vmul.f32 %v2956, %v2963
    %v2966 = vmul.f32 %v2959, %v2963
    %v2967 = vmul.f32 %v2962, %v2963
    %v2968 = vadd.f32 %v2943, %v2964
    %v2969 = vadd.f32 %v2944, %v2965
    %v2970 = vadd.f32 %v2945, %v2966
    %v2971 = vadd.f32 %v2946, %v2967
    %v2972 = vsel %vm694, %v2719, 0.0
    %v2973 = vsel %vm695, %v2720, 0.0
    %v2974 = vsel %vm696, %v2721, 0.0
    %v2975 = vsel %vm697, %v2722, 0.0
    %v2976 = vsel %vm333, %v2972, 0.0
    %2977 = vadd.xlane.f32.xlu0 %v2976
    %v2978 = vpop.xlane.xlu0 %2977
    %v2979 = vsel %vm333, %v2973, 0.0
    %2980 = vadd.xlane.f32.xlu0 %v2979
    %v2981 = vpop.xlane.xlu0 %2980
    %v2982 = vsel %vm333, %v2974, 0.0
    %2983 = vadd.xlane.f32.xlu0 %v2982
    %v2984 = vpop.xlane.xlu0 %2983
    %v2985 = vsel %vm333, %v2975, 0.0
    %2986 = vadd.xlane.f32.xlu0 %v2985
    %v2987 = vpop.xlane.xlu0 %2986
    %v2988 = vperm.slane %v2367, 0
    %v2989 = vmul.f32 %v2978, %v2988
    %v2990 = vmul.f32 %v2981, %v2988
    %v2991 = vmul.f32 %v2984, %v2988
    %v2992 = vmul.f32 %v2987, %v2988
    %v2993 = vadd.f32 %v2968, %v2989
    %v2994 = vadd.f32 %v2969, %v2990
    %v2995 = vadd.f32 %v2970, %v2991
    %v2996 = vadd.f32 %v2971, %v2992
    %2997 = vrot.lane.b32.xlu0 %v2351, 112
    %v2998 = vpop.permute.xlu0 %2997
    %2999 = vrot.lane.b32.xlu0 %v2354, 112
    %v3000 = vpop.permute.xlu0 %2999
    %3001 = vrot.lane.b32.xlu0 %v2357, 112
    %v3002 = vpop.permute.xlu0 %3001
    %3003 = vrot.lane.b32.xlu0 %v2360, 112
    %v3004 = vpop.permute.xlu0 %3003
    %v3005 = vsel %vm383, %v2998, 0
    %v3007 = vsel %vm383, %v3000, 0
    %v3009 = vsel %vm383, %v3002, 0
    %v3011 = vsel %vm383, %v3004, 0
    %3013 = vmatpush.msra.mxu0 0.0
    %3014 = vmatpush.msra.mxu0 0.0
    %3015 = vmatpush.msra.mxu0 0.0
    %3016 = vmatpush.msra.mxu0 0.0
    %3017 = vmatpush.msra.mxu0 0.0
    %3018 = vmatpush.msra.mxu0 0.0
    %3019 = vmatpush.msra.mxu0 0.0
    %3020 = vmatpush.msra.mxu0 0.0
    %3021 = vmatpush.msra.mxu0 0.0
    %3022 = vmatpush.msra.mxu0 0.0
    %3023 = vmatpush.msra.mxu0 0.0
    %3024 = vmatpush.msra.mxu0 0.0
    %3025 = vmatpush.msra.mxu0 0.0
    %3026 = vmatpush.msra.mxu0 0.0
    %3027 = vmatpush.msra.mxu0 %v2364
    %3028 = vmatpush.msra.mxu0 %v2363
    %3029 = vmatmul.f32.gmra.mxu0 %v3005
    %v3030 = vpop.f32.mrf.mxu0
    %v3031 = vadd.f32 0.0, %v3030
    %3032 = vmatmul.f32.gmra.mxu0 %v3007
    %v3033 = vpop.f32.mrf.mxu0
    %v3034 = vadd.f32 0.0, %v3033
    %3035 = vmatmul.f32.gmra.mxu0 %v3009
    %v3036 = vpop.f32.mrf.mxu0
    %v3037 = vadd.f32 0.0, %v3036
    %3038 = vmatmul.f32.gmra.mxu0 %v3011
    %v3039 = vpop.f32.mrf.mxu0
    %v3040 = vadd.f32 0.0, %v3039
    %3041 = vdwg.mxu0
    %3043 = vset.pattern.permute.xlu0 0
    %3044 = vperm.xlu0 %3043, %v3031
    %v3045 = vpop.permute.xlu0 %3044
    %3048 = vset.pattern.permute.xlu0 0
    %3049 = vperm.xlu0 %3048, %v3034
    %v3050 = vpop.permute.xlu0 %3049
    %3053 = vset.pattern.permute.xlu0 0
    %3054 = vperm.xlu0 %3053, %v3037
    %v3055 = vpop.permute.xlu0 %3054
    %3058 = vset.pattern.permute.xlu0 0
    %3059 = vperm.xlu0 %3058, %v3040
    %v3060 = vpop.permute.xlu0 %3059
    %v3062 = vsel %vm425, %v3045, 0.0
    %v3063 = vsel %vm426, %v3050, 0.0
    %v3064 = vsel %vm427, %v3055, 0.0
    %v3065 = vsel %vm428, %v3060, 0.0
    %3066 = vrot.lane.b32.xlu0 %v2351, 80
    %v3067 = vpop.permute.xlu0 %3066
    %3068 = vrot.lane.b32.xlu0 %v2354, 80
    %v3069 = vpop.permute.xlu0 %3068
    %3070 = vrot.lane.b32.xlu0 %v2357, 80
    %v3071 = vpop.permute.xlu0 %3070
    %3072 = vrot.lane.b32.xlu0 %v2360, 80
    %v3073 = vpop.permute.xlu0 %3072
    %v3074 = vsel %vm383, %v3067, 0
    %v3076 = vsel %vm383, %v3069, 0
    %v3078 = vsel %vm383, %v3071, 0
    %v3080 = vsel %vm383, %v3073, 0
    %3082 = vmatpush.xpose.msra.mxu0 0.0
    %3083 = vmatpush.xpose.msra.mxu0 0.0
    %3084 = vmatpush.xpose.msra.mxu0 0.0
    %3085 = vmatpush.xpose.msra.mxu0 0.0
    %3086 = vmatpush.xpose.msra.mxu0 0.0
    %3087 = vmatpush.xpose.msra.mxu0 0.0
    %3088 = vmatpush.xpose.msra.mxu0 0.0
    %3089 = vmatpush.xpose.msra.mxu0 0.0
    %3090 = vmatpush.xpose.msra.mxu0 0.0
    %3091 = vmatpush.xpose.msra.mxu0 0.0
    %3092 = vmatpush.xpose.msra.mxu0 0.0
    %3093 = vmatpush.xpose.msra.mxu0 0.0
    %3094 = vmatpush.xpose.msra.mxu0 %v3080
    %3095 = vmatpush.xpose.msra.mxu0 %v3078
    %3096 = vmatpush.xpose.msra.mxu0 %v3076
    %3097 = vmatpush.xpose.msra.mxu0 %v3074
    %3098 = vmatmul.f32.gmra.mxu0 %v3005
    %v3099 = vpop.f32.mrf.mxu0
    %v3100 = vadd.f32 %v3062, %v3099
    %3101 = vmatmul.f32.gmra.mxu0 %v3007
    %v3102 = vpop.f32.mrf.mxu0
    %v3103 = vadd.f32 %v3063, %v3102
    %3104 = vmatmul.f32.gmra.mxu0 %v3009
    %v3105 = vpop.f32.mrf.mxu0
    %v3106 = vadd.f32 %v3064, %v3105
    %3107 = vmatmul.f32.gmra.mxu0 %v3011
    %v3108 = vpop.f32.mrf.mxu0
    %v3109 = vadd.f32 %v3065, %v3108
    %3110 = vdwg.mxu0
    %3111 = vset.pattern.permute.xlu0 1
    %3112 = vperm.xlu0 %3111, %v3031
    %v3113 = vpop.permute.xlu0 %3112
    %3115 = vset.pattern.permute.xlu0 1
    %3116 = vperm.xlu0 %3115, %v3034
    %v3117 = vpop.permute.xlu0 %3116
    %3119 = vset.pattern.permute.xlu0 1
    %3120 = vperm.xlu0 %3119, %v3037
    %v3121 = vpop.permute.xlu0 %3120
    %3123 = vset.pattern.permute.xlu0 1
    %3124 = vperm.xlu0 %3123, %v3040
    %v3125 = vpop.permute.xlu0 %3124
    %v3127 = vsel %vm498, %v3113, 0.0
    %v3128 = vsel %vm499, %v3117, 0.0
    %v3129 = vsel %vm500, %v3121, 0.0
    %v3130 = vsel %vm501, %v3125, 0.0
    %v3131 = vadd.f32 %v3100, %v3127
    %v3132 = vadd.f32 %v3103, %v3128
    %v3133 = vadd.f32 %v3106, %v3129
    %v3134 = vadd.f32 %v3109, %v3130
    %3135 = vset.pattern.permute.xlu0 2
    %3136 = vperm.xlu0 %3135, %v3031
    %v3137 = vpop.permute.xlu0 %3136
    %3139 = vset.pattern.permute.xlu0 2
    %3140 = vperm.xlu0 %3139, %v3034
    %v3141 = vpop.permute.xlu0 %3140
    %3143 = vset.pattern.permute.xlu0 2
    %3144 = vperm.xlu0 %3143, %v3037
    %v3145 = vpop.permute.xlu0 %3144
    %3147 = vset.pattern.permute.xlu0 2
    %3148 = vperm.xlu0 %3147, %v3040
    %v3149 = vpop.permute.xlu0 %3148
    %v3151 = vsel %vm526, %v3137, 0.0
    %v3152 = vsel %vm527, %v3141, 0.0
    %v3153 = vsel %vm528, %v3145, 0.0
    %v3154 = vsel %vm529, %v3149, 0.0
    %v3155 = vadd.f32 %v3131, %v3151
    %v3156 = vadd.f32 %v3132, %v3152
    %v3157 = vadd.f32 %v3133, %v3153
    %v3158 = vadd.f32 %v3134, %v3154
    %3159 = vset.pattern.permute.xlu0 3
    %3160 = vperm.xlu0 %3159, %v3031
    %v3161 = vpop.permute.xlu0 %3160
    %3163 = vset.pattern.permute.xlu0 3
    %3164 = vperm.xlu0 %3163, %v3034
    %v3165 = vpop.permute.xlu0 %3164
    %3167 = vset.pattern.permute.xlu0 3
    %3168 = vperm.xlu0 %3167, %v3037
    %v3169 = vpop.permute.xlu0 %3168
    %3171 = vset.pattern.permute.xlu0 3
    %3172 = vperm.xlu0 %3171, %v3040
    %v3173 = vpop.permute.xlu0 %3172
    %v3175 = vsel %vm554, %v3161, 0.0
    %v3176 = vsel %vm555, %v3165, 0.0
    %v3177 = vsel %vm556, %v3169, 0.0
    %v3178 = vsel %vm557, %v3173, 0.0
    %v3179 = vadd.f32 %v3155, %v3175
    %v3180 = vadd.f32 %v3156, %v3176
    %v3181 = vadd.f32 %v3157, %v3177
    %v3182 = vadd.f32 %v3158, %v3178
    %3183 = vset.pattern.permute.xlu0 4
    %3184 = vperm.xlu0 %3183, %v3031
    %v3185 = vpop.permute.xlu0 %3184
    %3187 = vset.pattern.permute.xlu0 4
    %3188 = vperm.xlu0 %3187, %v3034
    %v3189 = vpop.permute.xlu0 %3188
    %3191 = vset.pattern.permute.xlu0 4
    %3192 = vperm.xlu0 %3191, %v3037
    %v3193 = vpop.permute.xlu0 %3192
    %3195 = vset.pattern.permute.xlu0 4
    %3196 = vperm.xlu0 %3195, %v3040
    %v3197 = vpop.permute.xlu0 %3196
    %v3199 = vsel %vm582, %v3185, 0.0
    %v3200 = vsel %vm583, %v3189, 0.0
    %v3201 = vsel %vm584, %v3193, 0.0
    %v3202 = vsel %vm585, %v3197, 0.0
    %v3203 = vadd.f32 %v3179, %v3199
    %v3204 = vadd.f32 %v3180, %v3200
    %v3205 = vadd.f32 %v3181, %v3201
    %v3206 = vadd.f32 %v3182, %v3202
    %3207 = vset.pattern.permute.xlu0 5
    %3208 = vperm.xlu0 %3207, %v3031
    %v3209 = vpop.permute.xlu0 %3208
    %3211 = vset.pattern.permute.xlu0 5
    %3212 = vperm.xlu0 %3211, %v3034
    %v3213 = vpop.permute.xlu0 %3212
    %3215 = vset.pattern.permute.xlu0 5
    %3216 = vperm.xlu0 %3215, %v3037
    %v3217 = vpop.permute.xlu0 %3216
    %3219 = vset.pattern.permute.xlu0 5
    %3220 = vperm.xlu0 %3219, %v3040
    %v3221 = vpop.permute.xlu0 %3220
    %v3223 = vsel %vm610, %v3209, 0.0
    %v3224 = vsel %vm611, %v3213, 0.0
    %v3225 = vsel %vm612, %v3217, 0.0
    %v3226 = vsel %vm613, %v3221, 0.0
    %v3227 = vadd.f32 %v3203, %v3223
    %v3228 = vadd.f32 %v3204, %v3224
    %v3229 = vadd.f32 %v3205, %v3225
    %v3230 = vadd.f32 %v3206, %v3226
    %3231 = vset.pattern.permute.xlu0 6
    %3232 = vperm.xlu0 %3231, %v3031
    %v3233 = vpop.permute.xlu0 %3232
    %3235 = vset.pattern.permute.xlu0 6
    %3236 = vperm.xlu0 %3235, %v3034
    %v3237 = vpop.permute.xlu0 %3236
    %3239 = vset.pattern.permute.xlu0 6
    %3240 = vperm.xlu0 %3239, %v3037
    %v3241 = vpop.permute.xlu0 %3240
    %3243 = vset.pattern.permute.xlu0 6
    %3244 = vperm.xlu0 %3243, %v3040
    %v3245 = vpop.permute.xlu0 %3244
    %v3247 = vsel %vm638, %v3233, 0.0
    %v3248 = vsel %vm639, %v3237, 0.0
    %v3249 = vsel %vm640, %v3241, 0.0
    %v3250 = vsel %vm641, %v3245, 0.0
    %v3251 = vadd.f32 %v3227, %v3247
    %v3252 = vadd.f32 %v3228, %v3248
    %v3253 = vadd.f32 %v3229, %v3249
    %v3254 = vadd.f32 %v3230, %v3250
    %3255 = vset.pattern.permute.xlu0 7
    %3256 = vperm.xlu0 %3255, %v3031
    %v3257 = vpop.permute.xlu0 %3256
    %3259 = vset.pattern.permute.xlu0 7
    %3260 = vperm.xlu0 %3259, %v3034
    %v3261 = vpop.permute.xlu0 %3260
    %3263 = vset.pattern.permute.xlu0 7
    %3264 = vperm.xlu0 %3263, %v3037
    %v3265 = vpop.permute.xlu0 %3264
    %3267 = vset.pattern.permute.xlu0 7
    %3268 = vperm.xlu0 %3267, %v3040
    %v3269 = vpop.permute.xlu0 %3268
    %v3271 = vsel %vm666, %v3257, 0.0
    %v3272 = vsel %vm667, %v3261, 0.0
    %v3273 = vsel %vm668, %v3265, 0.0
    %v3274 = vsel %vm669, %v3269, 0.0
    %v3275 = vadd.f32 %v3251, %v3271
    %v3276 = vadd.f32 %v3252, %v3272
    %v3277 = vadd.f32 %v3253, %v3273
    %v3278 = vadd.f32 %v3254, %v3274
    %3279 = vset.pattern.permute.xlu0 8
    %3280 = vperm.xlu0 %3279, %v3031
    %v3281 = vpop.permute.xlu0 %3280
    %3283 = vset.pattern.permute.xlu0 8
    %3284 = vperm.xlu0 %3283, %v3034
    %v3285 = vpop.permute.xlu0 %3284
    %3287 = vset.pattern.permute.xlu0 8
    %3288 = vperm.xlu0 %3287, %v3037
    %v3289 = vpop.permute.xlu0 %3288
    %3291 = vset.pattern.permute.xlu0 8
    %3292 = vperm.xlu0 %3291, %v3040
    %v3293 = vpop.permute.xlu0 %3292
    %v3295 = vsel %vm694, %v3281, 0.0
    %v3296 = vsel %vm695, %v3285, 0.0
    %v3297 = vsel %vm696, %v3289, 0.0
    %v3298 = vsel %vm697, %v3293, 0.0
    %v3299 = vadd.f32 %v3275, %v3295
    %v3300 = vadd.f32 %v3276, %v3296
    %v3301 = vadd.f32 %v3277, %v3297
    %v3302 = vadd.f32 %v3278, %v3298
    %v3303 = vsel %vm722, %v3299, -10000.0
    %v3304 = vsel %vm723, %v3300, -10000.0
    %v3305 = vsel %vm724, %v3301, -10000.0
    %v3306 = vsel %vm725, %v3302, -10000.0
    %v3307 = vsel %vm333, %v3303, -inf
    %3308 = vmax.xlane.f32.xlu0 %v3307
    %v3309 = vpop.xlane.xlu0 %3308
    %v3310 = vsel %vm333, %v3304, -inf
    %3311 = vmax.xlane.f32.xlu0 %v3310
    %v3312 = vpop.xlane.xlu0 %3311
    %v3313 = vsel %vm333, %v3305, -inf
    %3314 = vmax.xlane.f32.xlu0 %v3313
    %v3315 = vpop.xlane.xlu0 %3314
    %v3316 = vsel %vm333, %v3306, -inf
    %3317 = vmax.xlane.f32.xlu0 %v3316
    %v3318 = vpop.xlane.xlu0 %3317
    %v3319 = vsub.f32 %v3303, %v3309
    %v3320 = vsub.f32 %v3304, %v3312
    %v3321 = vsub.f32 %v3305, %v3315
    %v3322 = vsub.f32 %v3306, %v3318
    %v3323 = vmul.f32 %v3319, 1.442695
    %v3324 = vpow.pop %v3323
    %v3325 = vmul.f32 %v3320, 1.442695
    %v3326 = vpow.pop %v3325
    %v3327 = vmul.f32 %v3321, 1.442695
    %v3328 = vpow.pop %v3327
    %v3329 = vmul.f32 %v3322, 1.442695
    %v3330 = vpow.pop %v3329
    %v3331 = vsel %vm333, %v3324, 0.0
    %3332 = vadd.xlane.f32.xlu0 %v3331
    %v3333 = vpop.xlane.xlu0 %3332
    %v3334 = vsel %vm333, %v3326, 0.0
    %3335 = vadd.xlane.f32.xlu0 %v3334
    %v3336 = vpop.xlane.xlu0 %3335
    %v3337 = vsel %vm333, %v3328, 0.0
    %3338 = vadd.xlane.f32.xlu0 %v3337
    %v3339 = vpop.xlane.xlu0 %3338
    %v3340 = vsel %vm333, %v3330, 0.0
    %3341 = vadd.xlane.f32.xlu0 %v3340
    %v3342 = vpop.xlane.xlu0 %3341
    %v3343 = vrcp.pop %v3333
    %v3344 = vrcp.pop %v3336
    %v3345 = vrcp.pop %v3339
    %v3346 = vrcp.pop %v3342
    %v3347 = vmul.f32 %v3324, %v3343
    %v3348 = vmul.f32 %v3326, %v3344
    %v3349 = vmul.f32 %v3328, %v3345
    %v3350 = vmul.f32 %v3330, %v3346
    %v3351 = vsel %vm425, %v3347, 0.0
    %v3352 = vsel %vm426, %v3348, 0.0
    %v3353 = vsel %vm427, %v3349, 0.0
    %v3354 = vsel %vm428, %v3350, 0.0
    %v3355 = vsel %vm333, %v3351, 0.0
    %3356 = vadd.xlane.f32.xlu0 %v3355
    %v3357 = vpop.xlane.xlu0 %3356
    %v3358 = vsel %vm333, %v3352, 0.0
    %3359 = vadd.xlane.f32.xlu0 %v3358
    %v3360 = vpop.xlane.xlu0 %3359
    %v3361 = vsel %vm333, %v3353, 0.0
    %3362 = vadd.xlane.f32.xlu0 %v3361
    %v3363 = vpop.xlane.xlu0 %3362
    %v3364 = vsel %vm333, %v3354, 0.0
    %3365 = vadd.xlane.f32.xlu0 %v3364
    %v3366 = vpop.xlane.xlu0 %3365
    %v3367 = vmul.f32 %v3357, %v2739
    %v3368 = vmul.f32 %v3360, %v2739
    %v3369 = vmul.f32 %v3363, %v2739
    %v3370 = vmul.f32 %v3366, %v2739
    %3371 = vrot.lane.b32.xlu0 %v2351, 48
    %v3372 = vpop.permute.xlu0 %3371
    %3373 = vrot.lane.b32.xlu0 %v2354, 48
    %v3374 = vpop.permute.xlu0 %3373
    %3375 = vrot.lane.b32.xlu0 %v2357, 48
    %v3376 = vpop.permute.xlu0 %3375
    %3377 = vrot.lane.b32.xlu0 %v2360, 48
    %v3378 = vpop.permute.xlu0 %3377
    %v3384 = vsel %vm333, %v3347, 0
    %v3387 = vsel %vm333, %v3348, 0
    %v3390 = vsel %vm333, %v3349, 0
    %v3393 = vsel %vm333, %v3350, 0
    %3395 = vmatpush.msra.mxu0 0.0
    %3396 = vmatpush.msra.mxu0 0.0
    %3397 = vmatpush.msra.mxu0 0.0
    %3398 = vmatpush.msra.mxu0 0.0
    %3399 = vmatpush.msra.mxu0 0.0
    %3400 = vmatpush.msra.mxu0 0.0
    %3401 = vmatpush.msra.mxu0 0.0
    %3402 = vmatpush.msra.mxu0 0.0
    %3403 = vmatpush.msra.mxu0 0.0
    %3404 = vmatpush.msra.mxu0 0.0
    %3405 = vmatpush.msra.mxu0 0.0
    %3406 = vmatpush.msra.mxu0 0.0
    %3407 = vmatpush.msra.mxu0 %v3378
    %3408 = vmatpush.msra.mxu0 %v3376
    %3409 = vmatpush.msra.mxu0 %v3374
    %3410 = vmatpush.msra.mxu0 %v3372
    %3411 = vmatmul.f32.gmra.mxu0 %v3384
    %v3412 = vpop.f32.mrf.mxu0
    %v3413 = vadd.f32 %v3367, %v3412
    %3414 = vmatmul.f32.gmra.mxu0 %v3387
    %v3415 = vpop.f32.mrf.mxu0
    %v3416 = vadd.f32 %v3368, %v3415
    %3417 = vmatmul.f32.gmra.mxu0 %v3390
    %v3418 = vpop.f32.mrf.mxu0
    %v3419 = vadd.f32 %v3369, %v3418
    %3420 = vmatmul.f32.gmra.mxu0 %v3393
    %v3421 = vpop.f32.mrf.mxu0
    %v3422 = vadd.f32 %v3370, %v3421
    %3423 = vdwg.mxu0
    %v3424 = vsel %vm498, %v3347, 0.0
    %v3425 = vsel %vm499, %v3348, 0.0
    %v3426 = vsel %vm500, %v3349, 0.0
    %v3427 = vsel %vm501, %v3350, 0.0
    %v3428 = vsel %vm333, %v3424, 0.0
    %3429 = vadd.xlane.f32.xlu0 %v3428
    %v3430 = vpop.xlane.xlu0 %3429
    %v3431 = vsel %vm333, %v3425, 0.0
    %3432 = vadd.xlane.f32.xlu0 %v3431
    %v3433 = vpop.xlane.xlu0 %3432
    %v3434 = vsel %vm333, %v3426, 0.0
    %3435 = vadd.xlane.f32.xlu0 %v3434
    %v3436 = vpop.xlane.xlu0 %3435
    %v3437 = vsel %vm333, %v3427, 0.0
    %3438 = vadd.xlane.f32.xlu0 %v3437
    %v3439 = vpop.xlane.xlu0 %3438
    %v3440 = vmul.f32 %v3430, %v2813
    %v3441 = vmul.f32 %v3433, %v2813
    %v3442 = vmul.f32 %v3436, %v2813
    %v3443 = vmul.f32 %v3439, %v2813
    %v3444 = vadd.f32 %v3413, %v3440
    %v3445 = vadd.f32 %v3416, %v3441
    %v3446 = vadd.f32 %v3419, %v3442
    %v3447 = vadd.f32 %v3422, %v3443
    %v3448 = vsel %vm526, %v3347, 0.0
    %v3449 = vsel %vm527, %v3348, 0.0
    %v3450 = vsel %vm528, %v3349, 0.0
    %v3451 = vsel %vm529, %v3350, 0.0
    %v3452 = vsel %vm333, %v3448, 0.0
    %3453 = vadd.xlane.f32.xlu0 %v3452
    %v3454 = vpop.xlane.xlu0 %3453
    %v3455 = vsel %vm333, %v3449, 0.0
    %3456 = vadd.xlane.f32.xlu0 %v3455
    %v3457 = vpop.xlane.xlu0 %3456
    %v3458 = vsel %vm333, %v3450, 0.0
    %3459 = vadd.xlane.f32.xlu0 %v3458
    %v3460 = vpop.xlane.xlu0 %3459
    %v3461 = vsel %vm333, %v3451, 0.0
    %3462 = vadd.xlane.f32.xlu0 %v3461
    %v3463 = vpop.xlane.xlu0 %3462
    %v3464 = vmul.f32 %v3454, %v2838
    %v3465 = vmul.f32 %v3457, %v2838
    %v3466 = vmul.f32 %v3460, %v2838
    %v3467 = vmul.f32 %v3463, %v2838
    %v3468 = vadd.f32 %v3444, %v3464
    %v3469 = vadd.f32 %v3445, %v3465
    %v3470 = vadd.f32 %v3446, %v3466
    %v3471 = vadd.f32 %v3447, %v3467
    %v3472 = vsel %vm554, %v3347, 0.0
    %v3473 = vsel %vm555, %v3348, 0.0
    %v3474 = vsel %vm556, %v3349, 0.0
    %v3475 = vsel %vm557, %v3350, 0.0
    %v3476 = vsel %vm333, %v3472, 0.0
    %3477 = vadd.xlane.f32.xlu0 %v3476
    %v3478 = vpop.xlane.xlu0 %3477
    %v3479 = vsel %vm333, %v3473, 0.0
    %3480 = vadd.xlane.f32.xlu0 %v3479
    %v3481 = vpop.xlane.xlu0 %3480
    %v3482 = vsel %vm333, %v3474, 0.0
    %3483 = vadd.xlane.f32.xlu0 %v3482
    %v3484 = vpop.xlane.xlu0 %3483
    %v3485 = vsel %vm333, %v3475, 0.0
    %3486 = vadd.xlane.f32.xlu0 %v3485
    %v3487 = vpop.xlane.xlu0 %3486
    %v3488 = vmul.f32 %v3478, %v2863
    %v3489 = vmul.f32 %v3481, %v2863
    %v3490 = vmul.f32 %v3484, %v2863
    %v3491 = vmul.f32 %v3487, %v2863
    %v3492 = vadd.f32 %v3468, %v3488
    %v3493 = vadd.f32 %v3469, %v3489
    %v3494 = vadd.f32 %v3470, %v3490
    %v3495 = vadd.f32 %v3471, %v3491
    %v3496 = vsel %vm582, %v3347, 0.0
    %v3497 = vsel %vm583, %v3348, 0.0
    %v3498 = vsel %vm584, %v3349, 0.0
    %v3499 = vsel %vm585, %v3350, 0.0
    %v3500 = vsel %vm333, %v3496, 0.0
    %3501 = vadd.xlane.f32.xlu0 %v3500
    %v3502 = vpop.xlane.xlu0 %3501
    %v3503 = vsel %vm333, %v3497, 0.0
    %3504 = vadd.xlane.f32.xlu0 %v3503
    %v3505 = vpop.xlane.xlu0 %3504
    %v3506 = vsel %vm333, %v3498, 0.0
    %3507 = vadd.xlane.f32.xlu0 %v3506
    %v3508 = vpop.xlane.xlu0 %3507
    %v3509 = vsel %vm333, %v3499, 0.0
    %3510 = vadd.xlane.f32.xlu0 %v3509
    %v3511 = vpop.xlane.xlu0 %3510
    %v3512 = vmul.f32 %v3502, %v2888
    %v3513 = vmul.f32 %v3505, %v2888
    %v3514 = vmul.f32 %v3508, %v2888
    %v3515 = vmul.f32 %v3511, %v2888
    %v3516 = vadd.f32 %v3492, %v3512
    %v3517 = vadd.f32 %v3493, %v3513
    %v3518 = vadd.f32 %v3494, %v3514
    %v3519 = vadd.f32 %v3495, %v3515
    %v3520 = vsel %vm610, %v3347, 0.0
    %v3521 = vsel %vm611, %v3348, 0.0
    %v3522 = vsel %vm612, %v3349, 0.0
    %v3523 = vsel %vm613, %v3350, 0.0
    %v3524 = vsel %vm333, %v3520, 0.0
    %3525 = vadd.xlane.f32.xlu0 %v3524
    %v3526 = vpop.xlane.xlu0 %3525
    %v3527 = vsel %vm333, %v3521, 0.0
    %3528 = vadd.xlane.f32.xlu0 %v3527
    %v3529 = vpop.xlane.xlu0 %3528
    %v3530 = vsel %vm333, %v3522, 0.0
    %3531 = vadd.xlane.f32.xlu0 %v3530
    %v3532 = vpop.xlane.xlu0 %3531
    %v3533 = vsel %vm333, %v3523, 0.0
    %3534 = vadd.xlane.f32.xlu0 %v3533
    %v3535 = vpop.xlane.xlu0 %3534
    %v3536 = vmul.f32 %v3526, %v2913
    %v3537 = vmul.f32 %v3529, %v2913
    %v3538 = vmul.f32 %v3532, %v2913
    %v3539 = vmul.f32 %v3535, %v2913
    %v3540 = vadd.f32 %v3516, %v3536
    %v3541 = vadd.f32 %v3517, %v3537
    %v3542 = vadd.f32 %v3518, %v3538
    %v3543 = vadd.f32 %v3519, %v3539
    %v3544 = vsel %vm638, %v3347, 0.0
    %v3545 = vsel %vm639, %v3348, 0.0
    %v3546 = vsel %vm640, %v3349, 0.0
    %v3547 = vsel %vm641, %v3350, 0.0
    %v3548 = vsel %vm333, %v3544, 0.0
    %3549 = vadd.xlane.f32.xlu0 %v3548
    %v3550 = vpop.xlane.xlu0 %3549
    %v3551 = vsel %vm333, %v3545, 0.0
    %3552 = vadd.xlane.f32.xlu0 %v3551
    %v3553 = vpop.xlane.xlu0 %3552
    %v3554 = vsel %vm333, %v3546, 0.0
    %3555 = vadd.xlane.f32.xlu0 %v3554
    %v3556 = vpop.xlane.xlu0 %3555
    %v3557 = vsel %vm333, %v3547, 0.0
    %3558 = vadd.xlane.f32.xlu0 %v3557
    %v3559 = vpop.xlane.xlu0 %3558
    %v3560 = vmul.f32 %v3550, %v2938
    %v3561 = vmul.f32 %v3553, %v2938
    %v3562 = vmul.f32 %v3556, %v2938
    %v3563 = vmul.f32 %v3559, %v2938
    %v3564 = vadd.f32 %v3540, %v3560
    %v3565 = vadd.f32 %v3541, %v3561
    %v3566 = vadd.f32 %v3542, %v3562
    %v3567 = vadd.f32 %v3543, %v3563
    %v3568 = vsel %vm666, %v3347, 0.0
    %v3569 = vsel %vm667, %v3348, 0.0
    %v3570 = vsel %vm668, %v3349, 0.0
    %v3571 = vsel %vm669, %v3350, 0.0
    %v3572 = vsel %vm333, %v3568, 0.0
    %3573 = vadd.xlane.f32.xlu0 %v3572
    %v3574 = vpop.xlane.xlu0 %3573
    %v3575 = vsel %vm333, %v3569, 0.0
    %3576 = vadd.xlane.f32.xlu0 %v3575
    %v3577 = vpop.xlane.xlu0 %3576
    %v3578 = vsel %vm333, %v3570, 0.0
    %3579 = vadd.xlane.f32.xlu0 %v3578
    %v3580 = vpop.xlane.xlu0 %3579
    %v3581 = vsel %vm333, %v3571, 0.0
    %3582 = vadd.xlane.f32.xlu0 %v3581
    %v3583 = vpop.xlane.xlu0 %3582
    %v3584 = vmul.f32 %v3574, %v2963
    %v3585 = vmul.f32 %v3577, %v2963
    %v3586 = vmul.f32 %v3580, %v2963
    %v3587 = vmul.f32 %v3583, %v2963
    %v3588 = vadd.f32 %v3564, %v3584
    %v3589 = vadd.f32 %v3565, %v3585
    %v3590 = vadd.f32 %v3566, %v3586
    %v3591 = vadd.f32 %v3567, %v3587
    %v3592 = vsel %vm694, %v3347, 0.0
    %v3593 = vsel %vm695, %v3348, 0.0
    %v3594 = vsel %vm696, %v3349, 0.0
    %v3595 = vsel %vm697, %v3350, 0.0
    %v3596 = vsel %vm333, %v3592, 0.0
    %3597 = vadd.xlane.f32.xlu0 %v3596
    %v3598 = vpop.xlane.xlu0 %3597
    %v3599 = vsel %vm333, %v3593, 0.0
    %3600 = vadd.xlane.f32.xlu0 %v3599
    %v3601 = vpop.xlane.xlu0 %3600
    %v3602 = vsel %vm333, %v3594, 0.0
    %3603 = vadd.xlane.f32.xlu0 %v3602
    %v3604 = vpop.xlane.xlu0 %3603
    %v3605 = vsel %vm333, %v3595, 0.0
    %3606 = vadd.xlane.f32.xlu0 %v3605
    %v3607 = vpop.xlane.xlu0 %3606
    %v3608 = vmul.f32 %v3598, %v2988
    %v3609 = vmul.f32 %v3601, %v2988
    %v3610 = vmul.f32 %v3604, %v2988
    %v3611 = vmul.f32 %v3607, %v2988
    %v3612 = vadd.f32 %v3588, %v3608
    %v3613 = vadd.f32 %v3589, %v3609
    %v3614 = vadd.f32 %v3590, %v3610
    %v3615 = vadd.f32 %v3591, %v3611
    %v3617 = vsel %vm383, %v3612, 0
    %v3620 = vsel %vm383, %v3613, 0
    %v3623 = vsel %vm383, %v3614, 0
    %v3626 = vsel %vm383, %v3615, 0
    %3628 = vmatpush.msra.mxu0 0.0
    %3629 = vmatpush.msra.mxu0 0.0
    %3630 = vmatpush.msra.mxu0 0.0
    %3631 = vmatpush.msra.mxu0 0.0
    %3632 = vmatpush.msra.mxu0 0.0
    %3633 = vmatpush.msra.mxu0 0.0
    %3634 = vmatpush.msra.mxu0 0.0
    %3635 = vmatpush.msra.mxu0 0.0
    %3636 = vmatpush.msra.mxu0 0.0
    %3637 = vmatpush.msra.mxu0 0.0
    %3638 = vmatpush.msra.mxu0 0.0
    %3639 = vmatpush.msra.mxu0 0.0
    %3640 = vmatpush.msra.mxu0 0.0
    %3641 = vmatpush.msra.mxu0 0.0
    %3642 = vmatpush.msra.mxu0 %v2372
    %3643 = vmatpush.msra.mxu0 %v2371
    %3644 = vmatmul.f32.gmra.mxu0 %v3617
    %v3645 = vpop.f32.mrf.mxu0
    %v3646 = vadd.f32 0.0, %v3645
    %3647 = vmatmul.f32.gmra.mxu0 %v3620
    %v3648 = vpop.f32.mrf.mxu0
    %v3649 = vadd.f32 0.0, %v3648
    %3650 = vmatmul.f32.gmra.mxu0 %v3623
    %v3651 = vpop.f32.mrf.mxu0
    %v3652 = vadd.f32 0.0, %v3651
    %3653 = vmatmul.f32.gmra.mxu0 %v3626
    %v3654 = vpop.f32.mrf.mxu0
    %v3655 = vadd.f32 0.0, %v3654
    %3656 = vdwg.mxu0
    %v3658 = vsel %vm383, %v2993, 0
    %v3661 = vsel %vm383, %v2994, 0
    %v3664 = vsel %vm383, %v2995, 0
    %v3667 = vsel %vm383, %v2996, 0
    %3669 = vmatpush.msra.mxu0 0.0
    %3670 = vmatpush.msra.mxu0 0.0
    %3671 = vmatpush.msra.mxu0 0.0
    %3672 = vmatpush.msra.mxu0 0.0
    %3673 = vmatpush.msra.mxu0 0.0
    %3674 = vmatpush.msra.mxu0 0.0
    %3675 = vmatpush.msra.mxu0 0.0
    %3676 = vmatpush.msra.mxu0 0.0
    %3677 = vmatpush.msra.mxu0 0.0
    %3678 = vmatpush.msra.mxu0 0.0
    %3679 = vmatpush.msra.mxu0 0.0
    %3680 = vmatpush.msra.mxu0 0.0
    %3681 = vmatpush.msra.mxu0 0.0
    %3682 = vmatpush.msra.mxu0 0.0
    %3683 = vmatpush.msra.mxu0 %v2370
    %3684 = vmatpush.msra.mxu0 %v2369
    %3685 = vmatmul.f32.gmra.mxu0 %v3658
    %v3686 = vpop.f32.mrf.mxu0
    %v3687 = vadd.f32 %v3646, %v3686
    %3688 = vmatmul.f32.gmra.mxu0 %v3661
    %v3689 = vpop.f32.mrf.mxu0
    %v3690 = vadd.f32 %v3649, %v3689
    %3691 = vmatmul.f32.gmra.mxu0 %v3664
    %v3692 = vpop.f32.mrf.mxu0
    %v3693 = vadd.f32 %v3652, %v3692
    %3694 = vmatmul.f32.gmra.mxu0 %v3667
    %v3695 = vpop.f32.mrf.mxu0
    %v3696 = vadd.f32 %v3655, %v3695
    %3697 = vdwg.mxu0
    %s3698 = scalar_lea.vmem %s7, 1
    %v3699 = vld [vmem:[%s3698] sm:$0x1]
    %v3701 = vperm.slane %v3699, 0
    %v3703 = vadd.f32 %v3687, %v3701
    %v3704 = vadd.f32 %v3690, %v3701
    %v3705 = vadd.f32 %v3693, %v3701
    %v3706 = vadd.f32 %v3696, %v3701
    %v3707 = vadd.f32 %v2307, %v3703
    %v3708 = vadd.f32 %v2308, %v3704
    %v3709 = vadd.f32 %v2309, %v3705
    %v3710 = vadd.f32 %v2310, %v3706
    %s3711 = scalar_lea.vmem %s10, 1
    %v3712 = vld [vmem:[%s3711] sm:$0x1]
    %s3713 = scalar_lea.vmem %s11, 1
    %v3714 = vld [vmem:[%s3713] sm:$0x1]
    %v3715 = vsel %vm333, %v3707, 0.0
    %3716 = vadd.xlane.f32.xlu0 %v3715
    %v3717 = vpop.xlane.xlu0 %3716
    %v3718 = vsel %vm333, %v3708, 0.0
    %3719 = vadd.xlane.f32.xlu0 %v3718
    %v3720 = vpop.xlane.xlu0 %3719
    %v3721 = vsel %vm333, %v3709, 0.0
    %3722 = vadd.xlane.f32.xlu0 %v3721
    %v3723 = vpop.xlane.xlu0 %3722
    %v3724 = vsel %vm333, %v3710, 0.0
    %3725 = vadd.xlane.f32.xlu0 %v3724
    %v3726 = vpop.xlane.xlu0 %3725
    %v3727 = vmul.f32 %v3717, %v1781
    %v3728 = vmul.f32 %v3720, %v1781
    %v3729 = vmul.f32 %v3723, %v1781
    %v3730 = vmul.f32 %v3726, %v1781
    %v3731 = vsub.f32 %v3707, %v3727
    %v3732 = vsub.f32 %v3708, %v3728
    %v3733 = vsub.f32 %v3709, %v3729
    %v3734 = vsub.f32 %v3710, %v3730
    %v3735 = vmul.f32 %v3731, %v3731
    %v3736 = vmul.f32 %v3732, %v3732
    %v3737 = vmul.f32 %v3733, %v3733
    %v3738 = vmul.f32 %v3734, %v3734
    %v3739 = vsel %vm333, %v3735, 0.0
    %3740 = vadd.xlane.f32.xlu0 %v3739
    %v3741 = vpop.xlane.xlu0 %3740
    %v3742 = vsel %vm333, %v3736, 0.0
    %3743 = vadd.xlane.f32.xlu0 %v3742
    %v3744 = vpop.xlane.xlu0 %3743
    %v3745 = vsel %vm333, %v3737, 0.0
    %3746 = vadd.xlane.f32.xlu0 %v3745
    %v3747 = vpop.xlane.xlu0 %3746
    %v3748 = vsel %vm333, %v3738, 0.0
    %3749 = vadd.xlane.f32.xlu0 %v3748
    %v3750 = vpop.xlane.xlu0 %3749
    %v3751 = vmul.f32 %v3741, %v1781
    %v3752 = vmul.f32 %v3744, %v1781
    %v3753 = vmul.f32 %v3747, %v1781
    %v3754 = vmul.f32 %v3750, %v1781
    %v3755 = vadd.f32 %v3751, 1e-05
    %v3756 = vadd.f32 %v3752, 1e-05
    %v3757 = vadd.f32 %v3753, 1e-05
    %v3758 = vadd.f32 %v3754, 1e-05
    %v3759 = vrsqrt.pop %v3755
    %v3760 = vmul.f32 %v3759, %v3755
    %v3761 = vmul.f32 %v3760, %v3759
    %v3762 = vmul.f32 0.5, %v3761
    %v3763 = vsub.f32 1.5, %v3762
    %v3764 = vmul.f32 %v3759, %v3763
    %vm3765 = vweird.f32 %v3755
    %vm3766 = vweird.f32 %v3759
    %vm3767 = vmor %vm3765, %vm3766
    %v3768 = vsel %vm3767, %v3759, %v3764
    %v3769 = vrsqrt.pop %v3756
    %v3770 = vmul.f32 %v3769, %v3756
    %v3771 = vmul.f32 %v3770, %v3769
    %v3772 = vmul.f32 0.5, %v3771
    %v3773 = vsub.f32 1.5, %v3772
    %v3774 = vmul.f32 %v3769, %v3773
    %vm3775 = vweird.f32 %v3756
    %vm3776 = vweird.f32 %v3769
    %vm3777 = vmor %vm3775, %vm3776
    %v3778 = vsel %vm3777, %v3769, %v3774
    %v3779 = vrsqrt.pop %v3757
    %v3780 = vmul.f32 %v3779, %v3757
    %v3781 = vmul.f32 %v3780, %v3779
    %v3782 = vmul.f32 0.5, %v3781
    %v3783 = vsub.f32 1.5, %v3782
    %v3784 = vmul.f32 %v3779, %v3783
    %vm3785 = vweird.f32 %v3757
    %vm3786 = vweird.f32 %v3779
    %vm3787 = vmor %vm3785, %vm3786
    %v3788 = vsel %vm3787, %v3779, %v3784
    %v3789 = vrsqrt.pop %v3758
    %v3790 = vmul.f32 %v3789, %v3758
    %v3791 = vmul.f32 %v3790, %v3789
    %v3792 = vmul.f32 0.5, %v3791
    %v3793 = vsub.f32 1.5, %v3792
    %v3794 = vmul.f32 %v3789, %v3793
    %vm3795 = vweird.f32 %v3758
    %vm3796 = vweird.f32 %v3789
    %vm3797 = vmor %vm3795, %vm3796
    %v3798 = vsel %vm3797, %v3789, %v3794
    %v3799 = vmul.f32 %v3731, %v3768
    %v3800 = vmul.f32 %v3732, %v3778
    %v3801 = vmul.f32 %v3733, %v3788
    %v3802 = vmul.f32 %v3734, %v3798
    %v3804 = vperm.slane %v3712, 0
    %v3806 = vmul.f32 %v3799, %v3804
    %v3807 = vmul.f32 %v3800, %v3804
    %v3808 = vmul.f32 %v3801, %v3804
    %v3809 = vmul.f32 %v3802, %v3804
    %v3811 = vperm.slane %v3714, 0
    %v3813 = vadd.f32 %v3806, %v3811
    %v3814 = vadd.f32 %v3807, %v3811
    %v3815 = vadd.f32 %v3808, %v3811
    %v3816 = vadd.f32 %v3809, %v3811
    %v3817 = vmul.f32 %v3813, %v291
    %v3818 = vmul.f32 %v3814, %v296
    %v3819 = vmul.f32 %v3815, %v301
    %v3820 = vmul.f32 %v3816, %v306
    %v3821 = vrot.slane %v3817, 7
    %v3822 = vrot.slane %v3818, 7
    %v3823 = vrot.slane %v3819, 7
    %v3824 = vrot.slane %v3820, 7
    %v3825 = vsel %vm1880, %v3823, %v3824
    %v3826 = vsel %vm1880, %v3822, %v3823
    %v3827 = vsel %vm1880, %v3821, %v3822
    %v3828 = vsel %vm1880, %v3824, %v3821
    %v3829 = vsel %vm1905, %v3828, 0.0
    %v3830 = vsel %vm1906, %v3827, 0.0
    %v3831 = vsel %vm1907, %v3826, 0.0
    %v3832 = vsel %vm1908, %v3825, 0.0
    %v3833 = vrot.slane %v3817, 1
    %v3834 = vrot.slane %v3818, 1
    %v3835 = vrot.slane %v3819, 1
    %v3836 = vrot.slane %v3820, 1
    %v3837 = vsel %vm1917, %v3835, %v3836
    %v3838 = vsel %vm1917, %v3834, %v3835
    %v3839 = vsel %vm1917, %v3833, %v3834
    %v3840 = vsel %vm1917, %v3836, %v3833
    %v3841 = vsel %vm1942, %v3839, 0.0
    %v3842 = vsel %vm1943, %v3838, 0.0
    %v3843 = vsel %vm1944, %v3837, 0.0
    %v3844 = vsel %vm1945, %v3840, 0.0
    %3849 = vrot.lane.b32.xlu0 %v3817, 32
    %v3850 = vpop.permute.xlu0 %3849
    %3851 = vrot.lane.b32.xlu0 %v3818, 32
    %v3852 = vpop.permute.xlu0 %3851
    %3853 = vrot.lane.b32.xlu0 %v3819, 32
    %v3854 = vpop.permute.xlu0 %3853
    %3855 = vrot.lane.b32.xlu0 %v3820, 32
    %v3856 = vpop.permute.xlu0 %3855
    %3865 = vrot.lane.b32.xlu0 %v3841, 64
    %v3866 = vpop.permute.xlu0 %3865
    %3867 = vrot.lane.b32.xlu0 %v3842, 64
    %v3868 = vpop.permute.xlu0 %3867
    %3869 = vrot.lane.b32.xlu0 %v3843, 64
    %v3870 = vpop.permute.xlu0 %3869
    %3871 = vrot.lane.b32.xlu0 %v3844, 64
    %v3872 = vpop.permute.xlu0 %3871
    %v3877 = vsel %vm333, %v3829, %v3850
    %v3878 = vsel %vm333, %v3830, %v3852
    %v3879 = vsel %vm333, %v3831, %v3854
    %v3880 = vsel %vm333, %v3832, %v3856
    %v3881 = vsel %vm1986, %v3877, %v3866
    %v3882 = vsel %vm1986, %v3878, %v3868
    %v3883 = vsel %vm1986, %v3879, %v3870
    %v3884 = vsel %vm1986, %v3880, %v3872
    %s3885 = scalar_lea.vmem [#allocation8], 96
    %v3886 = vld [vmem:[%s3885] sm:$0xff]
    %v3887 = vld [vmem:[%s3885 + $0x8] sm:$0xff]
    %v3888 = vld [vmem:[%s3885 + $0x10] sm:$0xff]
    %v3889 = vld [vmem:[%s3885 + $0x18] sm:$0xff]
    %v3890 = vld [vmem:[%s3885 + $0x20] sm:$0xff]
    %v3891 = vld [vmem:[%s3885 + $0x28] sm:$0xff]
    %v3892 = vld [vmem:[%s3885 + $0x30] sm:$0xff]
    %v3893 = vld [vmem:[%s3885 + $0x38] sm:$0xff]
    %v3894 = vld [vmem:[%s3885 + $0x40] sm:$0xff]
    %v3895 = vld [vmem:[%s3885 + $0x48] sm:$0xff]
    %v3896 = vld [vmem:[%s3885 + $0x50] sm:$0xff]
    %v3897 = vld [vmem:[%s3885 + $0x58] sm:$0xff]
    %s3898 = scalar_lea.vmem [#allocation10], 1
    %v3899 = vld [vmem:[%s3898] sm:$0x1]
    %v3901 = vperm.slane %v3899, 0
    %v3904 = vsel %vm2007, %v3881, 0
    %v3907 = vsel %vm2007, %v3882, 0
    %v3910 = vsel %vm2007, %v3883, 0
    %v3913 = vsel %vm2007, %v3884, 0
    %3915 = vmatpush.msra.mxu0 0.0
    %3916 = vmatpush.msra.mxu0 0.0
    %3917 = vmatpush.msra.mxu0 0.0
    %3918 = vmatpush.msra.mxu0 0.0
    %3919 = vmatpush.msra.mxu0 %v3897
    %3920 = vmatpush.msra.mxu0 %v3896
    %3921 = vmatpush.msra.mxu0 %v3895
    %3922 = vmatpush.msra.mxu0 %v3894
    %3923 = vmatpush.msra.mxu0 %v3893
    %3924 = vmatpush.msra.mxu0 %v3892
    %3925 = vmatpush.msra.mxu0 %v3891
    %3926 = vmatpush.msra.mxu0 %v3890
    %3927 = vmatpush.msra.mxu0 %v3889
    %3928 = vmatpush.msra.mxu0 %v3888
    %3929 = vmatpush.msra.mxu0 %v3887
    %3930 = vmatpush.msra.mxu0 %v3886
    %3931 = vmatmul.f32.gmra.mxu0 %v3904
    %v3932 = vpop.f32.mrf.mxu0
    %v3933 = vadd.f32 %v3901, %v3932
    %3934 = vmatmul.f32.gmra.mxu0 %v3907
    %v3935 = vpop.f32.mrf.mxu0
    %v3936 = vadd.f32 %v3901, %v3935
    %3937 = vmatmul.f32.gmra.mxu0 %v3910
    %v3938 = vpop.f32.mrf.mxu0
    %v3939 = vadd.f32 %v3901, %v3938
    %3940 = vmatmul.f32.gmra.mxu0 %v3913
    %v3941 = vpop.f32.mrf.mxu0
    %v3942 = vadd.f32 %v3901, %v3941
    %3943 = vdwg.mxu0
    %v3944 = vmax.f32 %v3933, 0.0
    %v3945 = vmax.f32 %v3936, 0.0
    %v3946 = vmax.f32 %v3939, 0.0
    %v3947 = vmax.f32 %v3942, 0.0
    %v3948 = vmul.f32 %v3944, %v291
    %v3949 = vmul.f32 %v3945, %v296
    %v3950 = vmul.f32 %v3946, %v301
    %v3951 = vmul.f32 %v3947, %v306
    %v3952 = vrot.slane %v3948, 7
    %v3953 = vrot.slane %v3949, 7
    %v3954 = vrot.slane %v3950, 7
    %v3955 = vrot.slane %v3951, 7
    %v3956 = vsel %vm1880, %v3954, %v3955
    %v3957 = vsel %vm1880, %v3953, %v3954
    %v3958 = vsel %vm1880, %v3952, %v3953
    %v3959 = vsel %vm1880, %v3955, %v3952
    %v3960 = vsel %vm1905, %v3959, 0.0
    %v3961 = vsel %vm1906, %v3958, 0.0
    %v3962 = vsel %vm1907, %v3957, 0.0
    %v3963 = vsel %vm1908, %v3956, 0.0
    %v3964 = vrot.slane %v3948, 1
    %v3965 = vrot.slane %v3949, 1
    %v3966 = vrot.slane %v3950, 1
    %v3967 = vrot.slane %v3951, 1
    %v3968 = vsel %vm1917, %v3966, %v3967
    %v3969 = vsel %vm1917, %v3965, %v3966
    %v3970 = vsel %vm1917, %v3964, %v3965
    %v3971 = vsel %vm1917, %v3967, %v3964
    %v3972 = vsel %vm1942, %v3970, 0.0
    %v3973 = vsel %vm1943, %v3969, 0.0
    %v3974 = vsel %vm1944, %v3968, 0.0
    %v3975 = vsel %vm1945, %v3971, 0.0
    %3980 = vrot.lane.b32.xlu0 %v3948, 64
    %v3981 = vpop.permute.xlu0 %3980
    %3982 = vrot.lane.b32.xlu0 %v3949, 64
    %v3983 = vpop.permute.xlu0 %3982
    %3984 = vrot.lane.b32.xlu0 %v3950, 64
    %v3985 = vpop.permute.xlu0 %3984
    %3986 = vrot.lane.b32.xlu0 %v3951, 64
    %v3987 = vpop.permute.xlu0 %3986
    %v3992 = vsel %vm1986, %v3960, %v3981
    %v3993 = vsel %vm1986, %v3961, %v3983
    %v3994 = vsel %vm1986, %v3962, %v3985
    %v3995 = vsel %vm1986, %v3963, %v3987
    %s3996 = scalar_lea.vmem [#allocation11], 192
    %v3997 = vld [vmem:[%s3996] sm:$0xff]
    %v3998 = vld [vmem:[%s3996 + $0x8] sm:$0xff]
    %v3999 = vld [vmem:[%s3996 + $0x10] sm:$0xff]
    %v4000 = vld [vmem:[%s3996 + $0x18] sm:$0xff]
    %v4001 = vld [vmem:[%s3996 + $0x20] sm:$0xff]
    %v4002 = vld [vmem:[%s3996 + $0x28] sm:$0xff]
    %v4003 = vld [vmem:[%s3996 + $0x30] sm:$0xff]
    %v4004 = vld [vmem:[%s3996 + $0x38] sm:$0xff]
    %v4005 = vld [vmem:[%s3996 + $0x40] sm:$0xff]
    %v4006 = vld [vmem:[%s3996 + $0x48] sm:$0xff]
    %v4007 = vld [vmem:[%s3996 + $0x50] sm:$0xff]
    %v4008 = vld [vmem:[%s3996 + $0x58] sm:$0xff]
    %v4009 = vld [vmem:[%s3996 + $0x60] sm:$0xff]
    %v4010 = vld [vmem:[%s3996 + $0x68] sm:$0xff]
    %v4011 = vld [vmem:[%s3996 + $0x70] sm:$0xff]
    %v4012 = vld [vmem:[%s3996 + $0x78] sm:$0xff]
    %v4013 = vld [vmem:[%s3996 + $0x80] sm:$0xff]
    %v4014 = vld [vmem:[%s3996 + $0x88] sm:$0xff]
    %v4015 = vld [vmem:[%s3996 + $0x90] sm:$0xff]
    %v4016 = vld [vmem:[%s3996 + $0x98] sm:$0xff]
    %v4017 = vld [vmem:[%s3996 + $0xa0] sm:$0xff]
    %v4018 = vld [vmem:[%s3996 + $0xa8] sm:$0xff]
    %v4019 = vld [vmem:[%s3996 + $0xb0] sm:$0xff]
    %v4020 = vld [vmem:[%s3996 + $0xb8] sm:$0xff]
    %s4021 = scalar_lea.vmem [#allocation13], 1
    %v4022 = vld [vmem:[%s4021] sm:$0x1]
    %v4024 = vperm.slane %v4022, 0
    %v4027 = vsel %vm1986, %v3972, 0
    %v4030 = vsel %vm1986, %v3973, 0
    %v4033 = vsel %vm1986, %v3974, 0
    %v4036 = vsel %vm1986, %v3975, 0
    %4038 = vmatpush.msra.mxu0 %v4012
    %4039 = vmatpush.msra.mxu0 %v4011
    %4040 = vmatpush.msra.mxu0 %v4010
    %4041 = vmatpush.msra.mxu0 %v4009
    %4042 = vmatpush.msra.mxu0 %v4008
    %4043 = vmatpush.msra.mxu0 %v4007
    %4044 = vmatpush.msra.mxu0 %v4006
    %4045 = vmatpush.msra.mxu0 %v4005
    %4046 = vmatpush.msra.mxu0 %v4004
    %4047 = vmatpush.msra.mxu0 %v4003
    %4048 = vmatpush.msra.mxu0 %v4002
    %4049 = vmatpush.msra.mxu0 %v4001
    %4050 = vmatpush.msra.mxu0 %v4000
    %4051 = vmatpush.msra.mxu0 %v3999
    %4052 = vmatpush.msra.mxu0 %v3998
    %4053 = vmatpush.msra.mxu0 %v3997
    %4054 = vmatmul.f32.gmra.mxu0 %v3992
    %v4055 = vpop.f32.mrf.mxu0
    %v4056 = vadd.f32 %v4024, %v4055
    %4057 = vmatmul.f32.gmra.mxu0 %v3993
    %v4058 = vpop.f32.mrf.mxu0
    %v4059 = vadd.f32 %v4024, %v4058
    %4060 = vmatmul.f32.gmra.mxu0 %v3994
    %v4061 = vpop.f32.mrf.mxu0
    %v4062 = vadd.f32 %v4024, %v4061
    %4063 = vmatmul.f32.gmra.mxu0 %v3995
    %v4064 = vpop.f32.mrf.mxu0
    %v4065 = vadd.f32 %v4024, %v4064
    %4066 = vdwg.mxu0
    %4067 = vmatpush.msra.mxu0 0.0
    %4068 = vmatpush.msra.mxu0 0.0
    %4069 = vmatpush.msra.mxu0 0.0
    %4070 = vmatpush.msra.mxu0 0.0
    %4071 = vmatpush.msra.mxu0 0.0
    %4072 = vmatpush.msra.mxu0 0.0
    %4073 = vmatpush.msra.mxu0 0.0
    %4074 = vmatpush.msra.mxu0 0.0
    %4075 = vmatpush.msra.mxu0 %v4020
    %4076 = vmatpush.msra.mxu0 %v4019
    %4077 = vmatpush.msra.mxu0 %v4018
    %4078 = vmatpush.msra.mxu0 %v4017
    %4079 = vmatpush.msra.mxu0 %v4016
    %4080 = vmatpush.msra.mxu0 %v4015
    %4081 = vmatpush.msra.mxu0 %v4014
    %4082 = vmatpush.msra.mxu0 %v4013
    %4083 = vmatmul.f32.gmra.mxu0 %v4027
    %v4084 = vpop.f32.mrf.mxu0
    %v4085 = vadd.f32 %v4056, %v4084
    %4086 = vmatmul.f32.gmra.mxu0 %v4030
    %v4087 = vpop.f32.mrf.mxu0
    %v4088 = vadd.f32 %v4059, %v4087
    %4089 = vmatmul.f32.gmra.mxu0 %v4033
    %v4090 = vpop.f32.mrf.mxu0
    %v4091 = vadd.f32 %v4062, %v4090
    %4092 = vmatmul.f32.gmra.mxu0 %v4036
    %v4093 = vpop.f32.mrf.mxu0
    %v4094 = vadd.f32 %v4065, %v4093
    %4095 = vdwg.mxu0
    %v4096 = vmul.f32 %v4085, %v291
    %v4097 = vmul.f32 %v4088, %v296
    %v4098 = vmul.f32 %v4091, %v301
    %v4099 = vmul.f32 %v4094, %v306
    %v4100 = vadd.f32 %v3813, %v4096
    %v4101 = vadd.f32 %v3814, %v4097
    %v4102 = vadd.f32 %v3815, %v4098
    %v4103 = vadd.f32 %v3816, %v4099
    %s4104 = scalar_lea.vmem %s16, 1
    %v4105 = vld [vmem:[%s4104] sm:$0x1]
    %s4106 = scalar_lea.vmem %s17, 1
    %v4107 = vld [vmem:[%s4106] sm:$0x1]
    %v4108 = vsel %vm333, %v4100, 0.0
    %4109 = vadd.xlane.f32.xlu0 %v4108
    %v4110 = vpop.xlane.xlu0 %4109
    %v4111 = vsel %vm333, %v4101, 0.0
    %4112 = vadd.xlane.f32.xlu0 %v4111
    %v4113 = vpop.xlane.xlu0 %4112
    %v4114 = vsel %vm333, %v4102, 0.0
    %4115 = vadd.xlane.f32.xlu0 %v4114
    %v4116 = vpop.xlane.xlu0 %4115
    %v4117 = vsel %vm333, %v4103, 0.0
    %4118 = vadd.xlane.f32.xlu0 %v4117
    %v4119 = vpop.xlane.xlu0 %4118
    %v4120 = vmul.f32 %v4110, %v1781
    %v4121 = vmul.f32 %v4113, %v1781
    %v4122 = vmul.f32 %v4116, %v1781
    %v4123 = vmul.f32 %v4119, %v1781
    %v4124 = vsub.f32 %v4100, %v4120
    %v4125 = vsub.f32 %v4101, %v4121
    %v4126 = vsub.f32 %v4102, %v4122
    %v4127 = vsub.f32 %v4103, %v4123
    %v4128 = vmul.f32 %v4124, %v4124
    %v4129 = vmul.f32 %v4125, %v4125
    %v4130 = vmul.f32 %v4126, %v4126
    %v4131 = vmul.f32 %v4127, %v4127
    %v4132 = vsel %vm333, %v4128, 0.0
    %4133 = vadd.xlane.f32.xlu0 %v4132
    %v4134 = vpop.xlane.xlu0 %4133
    %v4135 = vsel %vm333, %v4129, 0.0
    %4136 = vadd.xlane.f32.xlu0 %v4135
    %v4137 = vpop.xlane.xlu0 %4136
    %v4138 = vsel %vm333, %v4130, 0.0
    %4139 = vadd.xlane.f32.xlu0 %v4138
    %v4140 = vpop.xlane.xlu0 %4139
    %v4141 = vsel %vm333, %v4131, 0.0
    %4142 = vadd.xlane.f32.xlu0 %v4141
    %v4143 = vpop.xlane.xlu0 %4142
    %v4144 = vmul.f32 %v4134, %v1781
    %v4145 = vmul.f32 %v4137, %v1781
    %v4146 = vmul.f32 %v4140, %v1781
    %v4147 = vmul.f32 %v4143, %v1781
    %v4148 = vadd.f32 %v4144, 1e-05
    %v4149 = vadd.f32 %v4145, 1e-05
    %v4150 = vadd.f32 %v4146, 1e-05
    %v4151 = vadd.f32 %v4147, 1e-05
    %v4152 = vrsqrt.pop %v4148
    %v4153 = vmul.f32 %v4152, %v4148
    %v4154 = vmul.f32 %v4153, %v4152
    %v4155 = vmul.f32 0.5, %v4154
    %v4156 = vsub.f32 1.5, %v4155
    %v4157 = vmul.f32 %v4152, %v4156
    %vm4158 = vweird.f32 %v4148
    %vm4159 = vweird.f32 %v4152
    %vm4160 = vmor %vm4158, %vm4159
    %v4161 = vsel %vm4160, %v4152, %v4157
    %v4162 = vrsqrt.pop %v4149
    %v4163 = vmul.f32 %v4162, %v4149
    %v4164 = vmul.f32 %v4163, %v4162
    %v4165 = vmul.f32 0.5, %v4164
    %v4166 = vsub.f32 1.5, %v4165
    %v4167 = vmul.f32 %v4162, %v4166
    %vm4168 = vweird.f32 %v4149
    %vm4169 = vweird.f32 %v4162
    %vm4170 = vmor %vm4168, %vm4169
    %v4171 = vsel %vm4170, %v4162, %v4167
    %v4172 = vrsqrt.pop %v4150
    %v4173 = vmul.f32 %v4172, %v4150
    %v4174 = vmul.f32 %v4173, %v4172
    %v4175 = vmul.f32 0.5, %v4174
    %v4176 = vsub.f32 1.5, %v4175
    %v4177 = vmul.f32 %v4172, %v4176
    %vm4178 = vweird.f32 %v4150
    %vm4179 = vweird.f32 %v4172
    %vm4180 = vmor %vm4178, %vm4179
    %v4181 = vsel %vm4180, %v4172, %v4177
    %v4182 = vrsqrt.pop %v4151
    %v4183 = vmul.f32 %v4182, %v4151
    %v4184 = vmul.f32 %v4183, %v4182
    %v4185 = vmul.f32 0.5, %v4184
    %v4186 = vsub.f32 1.5, %v4185
    %v4187 = vmul.f32 %v4182, %v4186
    %vm4188 = vweird.f32 %v4151
    %vm4189 = vweird.f32 %v4182
    %vm4190 = vmor %vm4188, %vm4189
    %v4191 = vsel %vm4190, %v4182, %v4187
    %v4192 = vmul.f32 %v4124, %v4161
    %v4193 = vmul.f32 %v4125, %v4171
    %v4194 = vmul.f32 %v4126, %v4181
    %v4195 = vmul.f32 %v4127, %v4191
    %v4197 = vperm.slane %v4105, 0
    %v4199 = vmul.f32 %v4192, %v4197
    %v4200 = vmul.f32 %v4193, %v4197
    %v4201 = vmul.f32 %v4194, %v4197
    %v4202 = vmul.f32 %v4195, %v4197
    %v4204 = vperm.slane %v4107, 0
    %v4206 = vadd.f32 %v4199, %v4204
    %v4207 = vadd.f32 %v4200, %v4204
    %v4208 = vadd.f32 %v4201, %v4204
    %v4209 = vadd.f32 %v4202, %v4204
    %v4210 = vmul.f32 %v4206, %v291
    %v4211 = vmul.f32 %v4207, %v296
    %v4212 = vmul.f32 %v4208, %v301
    %v4213 = vmul.f32 %v4209, %v306
    %v4214 = vld [vmem:[#allocation14] sm:$0xff]
    %v4215 = vld [vmem:[#allocation14 + $0x8] sm:$0xff]
    %v4216 = vld [vmem:[#allocation14 + $0x10] sm:$0xff]
    %v4217 = vld [vmem:[#allocation14 + $0x18] sm:$0xff]
    %v4218 = vld [vmem:[%s19] sm:$0x1]
    %v4220 = vperm.slane %v4218, 0
    %v4223 = vsel %vm333, %v4210, 0
    %v4226 = vsel %vm333, %v4211, 0
    %v4229 = vsel %vm333, %v4212, 0
    %v4232 = vsel %vm333, %v4213, 0
    %4234 = vmatpush.msra.mxu0 0.0
    %4235 = vmatpush.msra.mxu0 0.0
    %4236 = vmatpush.msra.mxu0 0.0
    %4237 = vmatpush.msra.mxu0 0.0
    %4238 = vmatpush.msra.mxu0 0.0
    %4239 = vmatpush.msra.mxu0 0.0
    %4240 = vmatpush.msra.mxu0 0.0
    %4241 = vmatpush.msra.mxu0 0.0
    %4242 = vmatpush.msra.mxu0 0.0
    %4243 = vmatpush.msra.mxu0 0.0
    %4244 = vmatpush.msra.mxu0 0.0
    %4245 = vmatpush.msra.mxu0 0.0
    %4246 = vmatpush.msra.mxu0 %v4217
    %4247 = vmatpush.msra.mxu0 %v4216
    %4248 = vmatpush.msra.mxu0 %v4215
    %4249 = vmatpush.msra.mxu0 %v4214
    %4250 = vmatmul.f32.gmra.mxu0 %v4223
    %v4251 = vpop.f32.mrf.mxu0
    %v4252 = vadd.f32 %v4220, %v4251
    %4253 = vmatmul.f32.gmra.mxu0 %v4226
    %v4254 = vpop.f32.mrf.mxu0
    %v4255 = vadd.f32 %v4220, %v4254
    %4256 = vmatmul.f32.gmra.mxu0 %v4229
    %v4257 = vpop.f32.mrf.mxu0
    %v4258 = vadd.f32 %v4220, %v4257
    %4259 = vmatmul.f32.gmra.mxu0 %v4232
    %v4260 = vpop.f32.mrf.mxu0
    %v4261 = vadd.f32 %v4220, %v4260
    %4262 = vdwg.mxu0
    %v4263 = vmul.f32 %v4252, %v291
    %v4264 = vmul.f32 %v4255, %v296
    %v4265 = vmul.f32 %v4258, %v301
    %v4266 = vmul.f32 %v4261, %v306
    %4267 = vst.msk [vmem:[#allocation16] sm:$0xff] %vm333, %v4210
    %4268 = vst.msk [vmem:[#allocation16 + $0x8] sm:$0xff] %vm333, %v4211
    %4269 = vst.msk [vmem:[#allocation16 + $0x10] sm:$0xff] %vm333, %v4212
    %4270 = vst.msk [vmem:[#allocation16 + $0x18] sm:$0xff] %vm333, %v4213
    %vm4271 = vcmask 64512
    %4272 = vst.msk [vmem:[%s21] sm:$0xff] %vm4271, %v4263
    %4273 = vst.msk [vmem:[%s21 + $0x8] sm:$0xff] %vm4271, %v4264
    %4274 = vst.msk [vmem:[%s21 + $0x10] sm:$0xff] %vm4271, %v4265
    %4275 = vst.msk [vmem:[%s21 + $0x18] sm:$0xff] %vm4271, %v4266
    // Predicated region
    $region114: #{_lambda_.1} parent=1 // pred_check
      _
    $region115: #{_lambda_.1} parent=1 // pred_check_branch
      %4277 = sbr.rel (0) target = $region117
    $region116: #{_lambda_.1} parent=1 // pred_region
      %4279 = vsyncadd [#allocation4], 0
      %s4280 = sshll.u32 [#allocation16], 4
      %s4281 = int_to_ptr.vmem [resolvable:$true] %s4280
      %s4282 = sshll.u32 %s20, 4
      %s4283 = int_to_ptr.hbm [resolvable:$true] %s4282
      %4288 = dma.vmem_to_hbm [thread:$0]  %s4281, 512, %s4283, [#allocation4], 128, 128, 8
    $region117: #{_lambda_.1} parent=1 // pred_fallthru
      _
    // Predicated region
    $region118: #{_lambda_.1} parent=1 // pred_check
      _
    $region119: #{_lambda_.1} parent=1 // pred_check_branch
      %4290 = sbr.rel (0) target = $region121
    $region120: #{_lambda_.1} parent=1 // pred_region
      _
    $region121: #{_lambda_.1} parent=1 // pred_fallthru
      _
    // Predicated region
    $region122: #{_lambda_.1} parent=1 // pred_check
      _
    $region123: #{_lambda_.1} parent=1 // pred_check_branch
      %4292 = sbr.rel (0) target = $region125
    $region124: #{_lambda_.1} parent=1 // pred_region
      %4294 = dma.done [#allocation4], 512
    $region125: #{_lambda_.1} parent=1 // pred_fallthru
      _
    // Predicated region
    $region126: #{_lambda_.1} parent=1 // pred_check
      _
    $region127: #{_lambda_.1} parent=1 // pred_check_branch
      %4296 = sbr.rel (0) target = $region129
    $region128: #{_lambda_.1} parent=1 // pred_region
      _
    $region129: #{_lambda_.1} parent=1 // pred_fallthru
      _
    %4297 = vsyncpa [#allocation3], 1
    %4298 = vsyncpa [#allocation6], 1
    %4299 = vsyncpa [#allocation9], 1
    %4300 = vsyncpa [#allocation12], 1
    %4301 = vsyncpa [#allocation15], 1
    %4302 = vsyncpa [#allocation4], 1

</llo_original>
